<compile_context>
chip_gen: v7x
topology: tpu7x:2x2x1
jax: 0.10.0
libtpu: 0.0.40
codegen_flags: <defaults>
</compile_context>

<pallas_src>
import functools

import jax
import jax.numpy as jnp
from jax.experimental import pallas as pl
from jax.experimental.pallas import tpu as pltpu


def _pick_batch_tile(B):
    """Batch rows per grid step: multiple of 8, >=2 steps when B>=16, VMEM-capped."""
    if B < 16:
        return B                       # single step; block dim == full dim is legal
    bt = min(512, (B // 2) // 8 * 8)   # <= B/2 so both v7x TensorCores get work
    return max(bt, 8)


def clustering_assignment_matrix(X, in_A, w1, b1, w2, b2):
    """X: (B, N, D) f32; in_A: (B, N, N) f32.
    w1: (H, D), b1: (H,)   -- dimension_mapping (PyTorch Linear layout)
    w2: (M, N+H), b2: (M,) -- matrix (PyTorch Linear layout)
    Returns out_A: (B, N, M) f32."""
    B, N, D = X.shape
    H = w1.shape[0]
    M = w2.shape[0]
    ND, NN, NH, NM = N * D, N * N, N * H, N * M
    f32 = jnp.float32

    X = X.astype(f32)
    in_A = in_A.astype(f32)

    # ---- one-time weight prep (tiny, plain JAX) ---------------------------
    eye = jnp.eye(N, dtype=f32)
    w1_blk = jnp.kron(eye, jnp.transpose(w1).astype(f32))           # (N*D, N*H)
    w2a_blk = jnp.kron(eye, jnp.transpose(w2[:, :N]).astype(f32))   # (N*N, N*M)
    w2h_blk = jnp.kron(eye, jnp.transpose(w2[:, N:]).astype(f32))   # (N*H, N*M)
    b1_t = jnp.tile(b1.astype(f32), N).reshape(1, NH)                # (1, N*H)
    b2_t = jnp.tile(b2.astype(f32), N).reshape(1, NM)                # (1, N*M)

    # Lane-dense, contiguous (free) flattening of the per-batch slabs.
    a2 = in_A.reshape(B, NN)    # lane = i*N + j
    x2 = X.reshape(B, ND)       # lane = j*D + d

    bt = _pick_batch_tile(B)
    grid = (pl.cdiv(B, bt),)
    hp = jax.lax.Precision.HIGHEST

    def kernel(a_ref, x_ref, w1b_ref, b1_ref, w2ab_ref, w2hb_ref, b2_ref, out_ref):
        a = a_ref[...]                                   # (bt, N*N)
        x = x_ref[...]                                   # (bt, N*D)

        # input_0 = bmm(in_A, X): batch-varying RHS would thrash the MXU with
        # tiny fresh-RHS matmuls -> do it as lane-broadcast FMAs on the VPU.
        x_sl = [x[:, j * D:(j + 1) * D] for j in range(N)]          # N x (bt, D)
        t0_parts = []
        for i in range(N):
            acc = a[:, i * N:i * N + 1] * x_sl[0]
            for j in range(1, N):
                acc = acc + a[:, i * N + j:i * N + j + 1] * x_sl[j]
            t0_parts.append(acc)                                     # (bt, D)
        t0 = jnp.concatenate(t0_parts, axis=-1)                      # (bt, N*D) lane = i*D+d

        # output_0 = sigmoid(Linear_{D->H}(input_0)) for all N nodes at once:
        # one lane-dense MXU matmul against the block-diagonal weight.
        pre = jnp.dot(t0, w1b_ref[...], precision=hp,
                      preferred_element_type=jnp.float32) + b1_ref[...]   # (bt, N*H)
        hid = 1.0 / (1.0 + jnp.exp(-pre))                                 # exact sigmoid

        # Linear_{N+H->M}(cat([A, h])) == A @ W2a^T + h @ W2h^T + b2
        logits = (jnp.dot(a, w2ab_ref[...], precision=hp,
                          preferred_element_type=jnp.float32)
                  + jnp.dot(hid, w2hb_ref[...], precision=hp,
                            preferred_element_type=jnp.float32)
                  + b2_ref[...])                                          # (bt, N*M) lane = i*M+m

        # softmax over the node axis i: elementwise tree-reduce over the N
        # lane-groups (no cross-lane/sublane reduction needed).
        parts = [logits[:, i * M:(i + 1) * M] for i in range(N)]          # N x (bt, M)
        mx = functools.reduce(jnp.maximum, parts)                         # (bt, M)
        eparts = [jnp.exp(p - mx) for p in parts]
        ssum = functools.reduce(lambda p, q: p + q, eparts)               # (bt, M)
        inv = 1.0 / ssum                                                  # exact (1e-5 tol)
        out_ref[...] = jnp.concatenate([ep * inv for ep in eparts], axis=-1)

    flops = 2 * B * N * (N * D + D * H + N * M + H * M)
    transcendentals = B * N * (H + M)
    bytes_accessed = 4 * (B * (NN + ND + NM)
                          + ND * NH + NH + NN * NM + NH * NM + NM)

    out2 = pl.pallas_call(
        kernel,
        out_shape=jax.ShapeDtypeStruct((B, NM), jnp.float32),
        grid_spec=pltpu.PrefetchScalarGridSpec(
            num_scalar_prefetch=0,
            grid=grid,
            in_specs=[
                pl.BlockSpec((bt, NN), lambda b: (b, 0)),    # in_A, lane-dense
                pl.BlockSpec((bt, ND), lambda b: (b, 0)),    # X, 128 lanes
                pl.BlockSpec((ND, NH), lambda b: (0, 0)),    # kron(I, w1^T)
                pl.BlockSpec((1, NH), lambda b: (0, 0)),     # tiled b1
                pl.BlockSpec((NN, NM), lambda b: (0, 0)),    # kron(I, w2a^T)
                pl.BlockSpec((NH, NM), lambda b: (0, 0)),    # kron(I, w2h^T)
                pl.BlockSpec((1, NM), lambda b: (0, 0)),     # tiled b2
            ],
            out_specs=pl.BlockSpec((bt, NM), lambda b: (b, 0)),
        ),
        compiler_params=pltpu.CompilerParams(
            dimension_semantics=("parallel",),
            vmem_limit_bytes=32 * 1024 * 1024,
        ),
        cost_estimate=pl.CostEstimate(
            flops=flops,
            transcendentals=transcendentals,
            bytes_accessed=bytes_accessed,
        ),
    )(a2, x2, w1_blk, b1_t, w2a_blk, w2h_blk, b2_t)

    return out2.reshape(B, N, M)


def _reference(X, in_A, w1, b1, w2, b2):
    hp = jax.lax.Precision.HIGHEST
    input_0 = jnp.einsum("bij,bjd->bid", in_A, X, precision=hp)
    output_0 = jax.nn.sigmoid(jnp.einsum("bnd,hd->bnh", input_0, w1, precision=hp) + b1)
    input_ = jnp.concatenate([in_A, output_0], axis=-1)
    out_A = jnp.einsum("bnk,mk->bnm", input_, w2, precision=hp) + b2
    return jax.nn.softmax(out_A, axis=-2)


if __name__ == "__main__":
    # in_num_node=N=8, input_dimension=D=16, hidden_dimension=H=32, out_num_node=M=4
    B, N, D, H, M = 2, 8, 16, 32, 4

    key = jax.random.PRNGKey(0)
    kx, ka, k1, k2, k3, k4 = jax.random.split(key, 6)

    X = jax.random.normal(kx, (B, N, D), dtype=jnp.float32)
    in_A = jax.random.uniform(ka, (B, N, N), dtype=jnp.float32)

    w1 = jax.random.normal(k1, (H, D), dtype=jnp.float32) * 0.1
    b1 = jax.random.normal(k2, (H,), dtype=jnp.float32) * 0.1
    w2 = jax.random.normal(k3, (M, N + H), dtype=jnp.float32) * 0.1
    b2 = jax.random.normal(k4, (M,), dtype=jnp.float32) * 0.1

    out = clustering_assignment_matrix(X, in_A, w1, b1, w2, b2)
    out = jax.block_until_ready(out)

    ref = _reference(X, in_A, w1, b1, w2, b2)
    assert out.shape == (B, N, M)
    assert jnp.allclose(out, ref, atol=1e-5, rtol=1e-5), "mismatch vs reference"

    print("KERNEL_OK")
</pallas_src>

<mosaic_0001>
module attributes {stable_mosaic.version = 11 : i64} {
  func.func @kernel(%arg0: i32, %arg1: memref<2x64xf32, #tpu.memory_space<vmem>>, %arg2: memref<2x128xf32, #tpu.memory_space<vmem>>, %arg3: memref<128x256xf32, #tpu.memory_space<vmem>>, %arg4: memref<1x256xf32, #tpu.memory_space<vmem>>, %arg5: memref<64x32xf32, #tpu.memory_space<vmem>>, %arg6: memref<256x32xf32, #tpu.memory_space<vmem>>, %arg7: memref<1x32xf32, #tpu.memory_space<vmem>>, %arg8: memref<2x32xf32, #tpu.memory_space<vmem>>) attributes {dimension_semantics = [#tpu.dimension_semantics<parallel>], iteration_bounds = array<i64: 1>, scalar_prefetch = 0 : i64, scratch_operands = 0 : i64, tpu.core_type = #tpu.core_type<tc>, window_params = [{transform_indices = @transform_0, window_bounds = array<i64: 2, 64>}, {transform_indices = @transform_1, window_bounds = array<i64: 2, 128>}, {pipeline_mode = #tpu.pipeline_mode<synchronous>, transform_indices = @transform_2, window_bounds = array<i64: 128, 256>}, {pipeline_mode = #tpu.pipeline_mode<synchronous>, transform_indices = @transform_3, window_bounds = array<i64: 1, 256>}, {pipeline_mode = #tpu.pipeline_mode<synchronous>, transform_indices = @transform_4, window_bounds = array<i64: 64, 32>}, {pipeline_mode = #tpu.pipeline_mode<synchronous>, transform_indices = @transform_5, window_bounds = array<i64: 256, 32>}, {pipeline_mode = #tpu.pipeline_mode<synchronous>, transform_indices = @transform_6, window_bounds = array<i64: 1, 32>}, {transform_indices = @transform_7, window_bounds = array<i64: 2, 32>}]} {
    %c0 = arith.constant 0 : index
    %c0_0 = arith.constant 0 : index
    %0 = vector.load %arg1[%c0, %c0_0] : memref<2x64xf32, #tpu.memory_space<vmem>>, vector<2x64xf32>
    %c0_1 = arith.constant 0 : index
    %c0_2 = arith.constant 0 : index
    %1 = vector.load %arg2[%c0_1, %c0_2] : memref<2x128xf32, #tpu.memory_space<vmem>>, vector<2x128xf32>
    %2 = vector.extract_strided_slice %1 {offsets = [0, 0], sizes = [2, 16], strides = [1, 1]} : vector<2x128xf32> to vector<2x16xf32>
    %3 = vector.extract_strided_slice %1 {offsets = [0, 16], sizes = [2, 16], strides = [1, 1]} : vector<2x128xf32> to vector<2x16xf32>
    %4 = vector.extract_strided_slice %1 {offsets = [0, 32], sizes = [2, 16], strides = [1, 1]} : vector<2x128xf32> to vector<2x16xf32>
    %5 = vector.extract_strided_slice %1 {offsets = [0, 48], sizes = [2, 16], strides = [1, 1]} : vector<2x128xf32> to vector<2x16xf32>
    %6 = vector.extract_strided_slice %1 {offsets = [0, 64], sizes = [2, 16], strides = [1, 1]} : vector<2x128xf32> to vector<2x16xf32>
    %7 = vector.extract_strided_slice %1 {offsets = [0, 80], sizes = [2, 16], strides = [1, 1]} : vector<2x128xf32> to vector<2x16xf32>
    %8 = vector.extract_strided_slice %1 {offsets = [0, 96], sizes = [2, 16], strides = [1, 1]} : vector<2x128xf32> to vector<2x16xf32>
    %9 = vector.extract_strided_slice %1 {offsets = [0, 112], sizes = [2, 16], strides = [1, 1]} : vector<2x128xf32> to vector<2x16xf32>
    %10 = vector.extract_strided_slice %0 {offsets = [0, 0], sizes = [2, 1], strides = [1, 1]} : vector<2x64xf32> to vector<2x1xf32>
    %11 = vector.broadcast %10 : vector<2x1xf32> to vector<2x16xf32>
    %12 = arith.mulf %11, %2 : vector<2x16xf32>
    %13 = vector.extract_strided_slice %0 {offsets = [0, 1], sizes = [2, 1], strides = [1, 1]} : vector<2x64xf32> to vector<2x1xf32>
    %14 = vector.broadcast %13 : vector<2x1xf32> to vector<2x16xf32>
    %15 = arith.mulf %14, %3 : vector<2x16xf32>
    %16 = arith.addf %12, %15 : vector<2x16xf32>
    %17 = vector.extract_strided_slice %0 {offsets = [0, 2], sizes = [2, 1], strides = [1, 1]} : vector<2x64xf32> to vector<2x1xf32>
    %18 = vector.broadcast %17 : vector<2x1xf32> to vector<2x16xf32>
    %19 = arith.mulf %18, %4 : vector<2x16xf32>
    %20 = arith.addf %16, %19 : vector<2x16xf32>
    %21 = vector.extract_strided_slice %0 {offsets = [0, 3], sizes = [2, 1], strides = [1, 1]} : vector<2x64xf32> to vector<2x1xf32>
    %22 = vector.broadcast %21 : vector<2x1xf32> to vector<2x16xf32>
    %23 = arith.mulf %22, %5 : vector<2x16xf32>
    %24 = arith.addf %20, %23 : vector<2x16xf32>
    %25 = vector.extract_strided_slice %0 {offsets = [0, 4], sizes = [2, 1], strides = [1, 1]} : vector<2x64xf32> to vector<2x1xf32>
    %26 = vector.broadcast %25 : vector<2x1xf32> to vector<2x16xf32>
    %27 = arith.mulf %26, %6 : vector<2x16xf32>
    %28 = arith.addf %24, %27 : vector<2x16xf32>
    %29 = vector.extract_strided_slice %0 {offsets = [0, 5], sizes = [2, 1], strides = [1, 1]} : vector<2x64xf32> to vector<2x1xf32>
    %30 = vector.broadcast %29 : vector<2x1xf32> to vector<2x16xf32>
    %31 = arith.mulf %30, %7 : vector<2x16xf32>
    %32 = arith.addf %28, %31 : vector<2x16xf32>
    %33 = vector.extract_strided_slice %0 {offsets = [0, 6], sizes = [2, 1], strides = [1, 1]} : vector<2x64xf32> to vector<2x1xf32>
    %34 = vector.broadcast %33 : vector<2x1xf32> to vector<2x16xf32>
    %35 = arith.mulf %34, %8 : vector<2x16xf32>
    %36 = arith.addf %32, %35 : vector<2x16xf32>
    %37 = vector.extract_strided_slice %0 {offsets = [0, 7], sizes = [2, 1], strides = [1, 1]} : vector<2x64xf32> to vector<2x1xf32>
    %38 = vector.broadcast %37 : vector<2x1xf32> to vector<2x16xf32>
    %39 = arith.mulf %38, %9 : vector<2x16xf32>
    %40 = arith.addf %36, %39 : vector<2x16xf32>
    %41 = vector.extract_strided_slice %0 {offsets = [0, 8], sizes = [2, 1], strides = [1, 1]} : vector<2x64xf32> to vector<2x1xf32>
    %42 = vector.broadcast %41 : vector<2x1xf32> to vector<2x16xf32>
    %43 = arith.mulf %42, %2 : vector<2x16xf32>
    %44 = vector.extract_strided_slice %0 {offsets = [0, 9], sizes = [2, 1], strides = [1, 1]} : vector<2x64xf32> to vector<2x1xf32>
    %45 = vector.broadcast %44 : vector<2x1xf32> to vector<2x16xf32>
    %46 = arith.mulf %45, %3 : vector<2x16xf32>
    %47 = arith.addf %43, %46 : vector<2x16xf32>
    %48 = vector.extract_strided_slice %0 {offsets = [0, 10], sizes = [2, 1], strides = [1, 1]} : vector<2x64xf32> to vector<2x1xf32>
    %49 = vector.broadcast %48 : vector<2x1xf32> to vector<2x16xf32>
    %50 = arith.mulf %49, %4 : vector<2x16xf32>
    %51 = arith.addf %47, %50 : vector<2x16xf32>
    %52 = vector.extract_strided_slice %0 {offsets = [0, 11], sizes = [2, 1], strides = [1, 1]} : vector<2x64xf32> to vector<2x1xf32>
    %53 = vector.broadcast %52 : vector<2x1xf32> to vector<2x16xf32>
    %54 = arith.mulf %53, %5 : vector<2x16xf32>
    %55 = arith.addf %51, %54 : vector<2x16xf32>
    %56 = vector.extract_strided_slice %0 {offsets = [0, 12], sizes = [2, 1], strides = [1, 1]} : vector<2x64xf32> to vector<2x1xf32>
    %57 = vector.broadcast %56 : vector<2x1xf32> to vector<2x16xf32>
    %58 = arith.mulf %57, %6 : vector<2x16xf32>
    %59 = arith.addf %55, %58 : vector<2x16xf32>
    %60 = vector.extract_strided_slice %0 {offsets = [0, 13], sizes = [2, 1], strides = [1, 1]} : vector<2x64xf32> to vector<2x1xf32>
    %61 = vector.broadcast %60 : vector<2x1xf32> to vector<2x16xf32>
    %62 = arith.mulf %61, %7 : vector<2x16xf32>
    %63 = arith.addf %59, %62 : vector<2x16xf32>
    %64 = vector.extract_strided_slice %0 {offsets = [0, 14], sizes = [2, 1], strides = [1, 1]} : vector<2x64xf32> to vector<2x1xf32>
    %65 = vector.broadcast %64 : vector<2x1xf32> to vector<2x16xf32>
    %66 = arith.mulf %65, %8 : vector<2x16xf32>
    %67 = arith.addf %63, %66 : vector<2x16xf32>
    %68 = vector.extract_strided_slice %0 {offsets = [0, 15], sizes = [2, 1], strides = [1, 1]} : vector<2x64xf32> to vector<2x1xf32>
    %69 = vector.broadcast %68 : vector<2x1xf32> to vector<2x16xf32>
    %70 = arith.mulf %69, %9 : vector<2x16xf32>
    %71 = arith.addf %67, %70 : vector<2x16xf32>
    %72 = vector.extract_strided_slice %0 {offsets = [0, 16], sizes = [2, 1], strides = [1, 1]} : vector<2x64xf32> to vector<2x1xf32>
    %73 = vector.broadcast %72 : vector<2x1xf32> to vector<2x16xf32>
    %74 = arith.mulf %73, %2 : vector<2x16xf32>
    %75 = vector.extract_strided_slice %0 {offsets = [0, 17], sizes = [2, 1], strides = [1, 1]} : vector<2x64xf32> to vector<2x1xf32>
    %76 = vector.broadcast %75 : vector<2x1xf32> to vector<2x16xf32>
    %77 = arith.mulf %76, %3 : vector<2x16xf32>
    %78 = arith.addf %74, %77 : vector<2x16xf32>
    %79 = vector.extract_strided_slice %0 {offsets = [0, 18], sizes = [2, 1], strides = [1, 1]} : vector<2x64xf32> to vector<2x1xf32>
    %80 = vector.broadcast %79 : vector<2x1xf32> to vector<2x16xf32>
    %81 = arith.mulf %80, %4 : vector<2x16xf32>
    %82 = arith.addf %78, %81 : vector<2x16xf32>
    %83 = vector.extract_strided_slice %0 {offsets = [0, 19], sizes = [2, 1], strides = [1, 1]} : vector<2x64xf32> to vector<2x1xf32>
    %84 = vector.broadcast %83 : vector<2x1xf32> to vector<2x16xf32>
    %85 = arith.mulf %84, %5 : vector<2x16xf32>
    %86 = arith.addf %82, %85 : vector<2x16xf32>
    %87 = vector.extract_strided_slice %0 {offsets = [0, 20], sizes = [2, 1], strides = [1, 1]} : vector<2x64xf32> to vector<2x1xf32>
    %88 = vector.broadcast %87 : vector<2x1xf32> to vector<2x16xf32>
    %89 = arith.mulf %88, %6 : vector<2x16xf32>
    %90 = arith.addf %86, %89 : vector<2x16xf32>
    %91 = vector.extract_strided_slice %0 {offsets = [0, 21], sizes = [2, 1], strides = [1, 1]} : vector<2x64xf32> to vector<2x1xf32>
    %92 = vector.broadcast %91 : vector<2x1xf32> to vector<2x16xf32>
    %93 = arith.mulf %92, %7 : vector<2x16xf32>
    %94 = arith.addf %90, %93 : vector<2x16xf32>
    %95 = vector.extract_strided_slice %0 {offsets = [0, 22], sizes = [2, 1], strides = [1, 1]} : vector<2x64xf32> to vector<2x1xf32>
    %96 = vector.broadcast %95 : vector<2x1xf32> to vector<2x16xf32>
    %97 = arith.mulf %96, %8 : vector<2x16xf32>
    %98 = arith.addf %94, %97 : vector<2x16xf32>
    %99 = vector.extract_strided_slice %0 {offsets = [0, 23], sizes = [2, 1], strides = [1, 1]} : vector<2x64xf32> to vector<2x1xf32>
    %100 = vector.broadcast %99 : vector<2x1xf32> to vector<2x16xf32>
    %101 = arith.mulf %100, %9 : vector<2x16xf32>
    %102 = arith.addf %98, %101 : vector<2x16xf32>
    %103 = vector.extract_strided_slice %0 {offsets = [0, 24], sizes = [2, 1], strides = [1, 1]} : vector<2x64xf32> to vector<2x1xf32>
    %104 = vector.broadcast %103 : vector<2x1xf32> to vector<2x16xf32>
    %105 = arith.mulf %104, %2 : vector<2x16xf32>
    %106 = vector.extract_strided_slice %0 {offsets = [0, 25], sizes = [2, 1], strides = [1, 1]} : vector<2x64xf32> to vector<2x1xf32>
    %107 = vector.broadcast %106 : vector<2x1xf32> to vector<2x16xf32>
    %108 = arith.mulf %107, %3 : vector<2x16xf32>
    %109 = arith.addf %105, %108 : vector<2x16xf32>
    %110 = vector.extract_strided_slice %0 {offsets = [0, 26], sizes = [2, 1], strides = [1, 1]} : vector<2x64xf32> to vector<2x1xf32>
    %111 = vector.broadcast %110 : vector<2x1xf32> to vector<2x16xf32>
    %112 = arith.mulf %111, %4 : vector<2x16xf32>
    %113 = arith.addf %109, %112 : vector<2x16xf32>
    %114 = vector.extract_strided_slice %0 {offsets = [0, 27], sizes = [2, 1], strides = [1, 1]} : vector<2x64xf32> to vector<2x1xf32>
    %115 = vector.broadcast %114 : vector<2x1xf32> to vector<2x16xf32>
    %116 = arith.mulf %115, %5 : vector<2x16xf32>
    %117 = arith.addf %113, %116 : vector<2x16xf32>
    %118 = vector.extract_strided_slice %0 {offsets = [0, 28], sizes = [2, 1], strides = [1, 1]} : vector<2x64xf32> to vector<2x1xf32>
    %119 = vector.broadcast %118 : vector<2x1xf32> to vector<2x16xf32>
    %120 = arith.mulf %119, %6 : vector<2x16xf32>
    %121 = arith.addf %117, %120 : vector<2x16xf32>
    %122 = vector.extract_strided_slice %0 {offsets = [0, 29], sizes = [2, 1], strides = [1, 1]} : vector<2x64xf32> to vector<2x1xf32>
    %123 = vector.broadcast %122 : vector<2x1xf32> to vector<2x16xf32>
    %124 = arith.mulf %123, %7 : vector<2x16xf32>
    %125 = arith.addf %121, %124 : vector<2x16xf32>
    %126 = vector.extract_strided_slice %0 {offsets = [0, 30], sizes = [2, 1], strides = [1, 1]} : vector<2x64xf32> to vector<2x1xf32>
    %127 = vector.broadcast %126 : vector<2x1xf32> to vector<2x16xf32>
    %128 = arith.mulf %127, %8 : vector<2x16xf32>
    %129 = arith.addf %125, %128 : vector<2x16xf32>
    %130 = vector.extract_strided_slice %0 {offsets = [0, 31], sizes = [2, 1], strides = [1, 1]} : vector<2x64xf32> to vector<2x1xf32>
    %131 = vector.broadcast %130 : vector<2x1xf32> to vector<2x16xf32>
    %132 = arith.mulf %131, %9 : vector<2x16xf32>
    %133 = arith.addf %129, %132 : vector<2x16xf32>
    %134 = vector.extract_strided_slice %0 {offsets = [0, 32], sizes = [2, 1], strides = [1, 1]} : vector<2x64xf32> to vector<2x1xf32>
    %135 = vector.broadcast %134 : vector<2x1xf32> to vector<2x16xf32>
    %136 = arith.mulf %135, %2 : vector<2x16xf32>
    %137 = vector.extract_strided_slice %0 {offsets = [0, 33], sizes = [2, 1], strides = [1, 1]} : vector<2x64xf32> to vector<2x1xf32>
    %138 = vector.broadcast %137 : vector<2x1xf32> to vector<2x16xf32>
    %139 = arith.mulf %138, %3 : vector<2x16xf32>
    %140 = arith.addf %136, %139 : vector<2x16xf32>
    %141 = vector.extract_strided_slice %0 {offsets = [0, 34], sizes = [2, 1], strides = [1, 1]} : vector<2x64xf32> to vector<2x1xf32>
    %142 = vector.broadcast %141 : vector<2x1xf32> to vector<2x16xf32>
    %143 = arith.mulf %142, %4 : vector<2x16xf32>
    %144 = arith.addf %140, %143 : vector<2x16xf32>
    %145 = vector.extract_strided_slice %0 {offsets = [0, 35], sizes = [2, 1], strides = [1, 1]} : vector<2x64xf32> to vector<2x1xf32>
    %146 = vector.broadcast %145 : vector<2x1xf32> to vector<2x16xf32>
    %147 = arith.mulf %146, %5 : vector<2x16xf32>
    %148 = arith.addf %144, %147 : vector<2x16xf32>
    %149 = vector.extract_strided_slice %0 {offsets = [0, 36], sizes = [2, 1], strides = [1, 1]} : vector<2x64xf32> to vector<2x1xf32>
    %150 = vector.broadcast %149 : vector<2x1xf32> to vector<2x16xf32>
    %151 = arith.mulf %150, %6 : vector<2x16xf32>
    %152 = arith.addf %148, %151 : vector<2x16xf32>
    %153 = vector.extract_strided_slice %0 {offsets = [0, 37], sizes = [2, 1], strides = [1, 1]} : vector<2x64xf32> to vector<2x1xf32>
    %154 = vector.broadcast %153 : vector<2x1xf32> to vector<2x16xf32>
    %155 = arith.mulf %154, %7 : vector<2x16xf32>
    %156 = arith.addf %152, %155 : vector<2x16xf32>
    %157 = vector.extract_strided_slice %0 {offsets = [0, 38], sizes = [2, 1], strides = [1, 1]} : vector<2x64xf32> to vector<2x1xf32>
    %158 = vector.broadcast %157 : vector<2x1xf32> to vector<2x16xf32>
    %159 = arith.mulf %158, %8 : vector<2x16xf32>
    %160 = arith.addf %156, %159 : vector<2x16xf32>
    %161 = vector.extract_strided_slice %0 {offsets = [0, 39], sizes = [2, 1], strides = [1, 1]} : vector<2x64xf32> to vector<2x1xf32>
    %162 = vector.broadcast %161 : vector<2x1xf32> to vector<2x16xf32>
    %163 = arith.mulf %162, %9 : vector<2x16xf32>
    %164 = arith.addf %160, %163 : vector<2x16xf32>
    %165 = vector.extract_strided_slice %0 {offsets = [0, 40], sizes = [2, 1], strides = [1, 1]} : vector<2x64xf32> to vector<2x1xf32>
    %166 = vector.broadcast %165 : vector<2x1xf32> to vector<2x16xf32>
    %167 = arith.mulf %166, %2 : vector<2x16xf32>
    %168 = vector.extract_strided_slice %0 {offsets = [0, 41], sizes = [2, 1], strides = [1, 1]} : vector<2x64xf32> to vector<2x1xf32>
    %169 = vector.broadcast %168 : vector<2x1xf32> to vector<2x16xf32>
    %170 = arith.mulf %169, %3 : vector<2x16xf32>
    %171 = arith.addf %167, %170 : vector<2x16xf32>
    %172 = vector.extract_strided_slice %0 {offsets = [0, 42], sizes = [2, 1], strides = [1, 1]} : vector<2x64xf32> to vector<2x1xf32>
    %173 = vector.broadcast %172 : vector<2x1xf32> to vector<2x16xf32>
    %174 = arith.mulf %173, %4 : vector<2x16xf32>
    %175 = arith.addf %171, %174 : vector<2x16xf32>
    %176 = vector.extract_strided_slice %0 {offsets = [0, 43], sizes = [2, 1], strides = [1, 1]} : vector<2x64xf32> to vector<2x1xf32>
    %177 = vector.broadcast %176 : vector<2x1xf32> to vector<2x16xf32>
    %178 = arith.mulf %177, %5 : vector<2x16xf32>
    %179 = arith.addf %175, %178 : vector<2x16xf32>
    %180 = vector.extract_strided_slice %0 {offsets = [0, 44], sizes = [2, 1], strides = [1, 1]} : vector<2x64xf32> to vector<2x1xf32>
    %181 = vector.broadcast %180 : vector<2x1xf32> to vector<2x16xf32>
    %182 = arith.mulf %181, %6 : vector<2x16xf32>
    %183 = arith.addf %179, %182 : vector<2x16xf32>
    %184 = vector.extract_strided_slice %0 {offsets = [0, 45], sizes = [2, 1], strides = [1, 1]} : vector<2x64xf32> to vector<2x1xf32>
    %185 = vector.broadcast %184 : vector<2x1xf32> to vector<2x16xf32>
    %186 = arith.mulf %185, %7 : vector<2x16xf32>
    %187 = arith.addf %183, %186 : vector<2x16xf32>
    %188 = vector.extract_strided_slice %0 {offsets = [0, 46], sizes = [2, 1], strides = [1, 1]} : vector<2x64xf32> to vector<2x1xf32>
    %189 = vector.broadcast %188 : vector<2x1xf32> to vector<2x16xf32>
    %190 = arith.mulf %189, %8 : vector<2x16xf32>
    %191 = arith.addf %187, %190 : vector<2x16xf32>
    %192 = vector.extract_strided_slice %0 {offsets = [0, 47], sizes = [2, 1], strides = [1, 1]} : vector<2x64xf32> to vector<2x1xf32>
    %193 = vector.broadcast %192 : vector<2x1xf32> to vector<2x16xf32>
    %194 = arith.mulf %193, %9 : vector<2x16xf32>
    %195 = arith.addf %191, %194 : vector<2x16xf32>
    %196 = vector.extract_strided_slice %0 {offsets = [0, 48], sizes = [2, 1], strides = [1, 1]} : vector<2x64xf32> to vector<2x1xf32>
    %197 = vector.broadcast %196 : vector<2x1xf32> to vector<2x16xf32>
    %198 = arith.mulf %197, %2 : vector<2x16xf32>
    %199 = vector.extract_strided_slice %0 {offsets = [0, 49], sizes = [2, 1], strides = [1, 1]} : vector<2x64xf32> to vector<2x1xf32>
    %200 = vector.broadcast %199 : vector<2x1xf32> to vector<2x16xf32>
    %201 = arith.mulf %200, %3 : vector<2x16xf32>
    %202 = arith.addf %198, %201 : vector<2x16xf32>
    %203 = vector.extract_strided_slice %0 {offsets = [0, 50], sizes = [2, 1], strides = [1, 1]} : vector<2x64xf32> to vector<2x1xf32>
    %204 = vector.broadcast %203 : vector<2x1xf32> to vector<2x16xf32>
    %205 = arith.mulf %204, %4 : vector<2x16xf32>
    %206 = arith.addf %202, %205 : vector<2x16xf32>
    %207 = vector.extract_strided_slice %0 {offsets = [0, 51], sizes = [2, 1], strides = [1, 1]} : vector<2x64xf32> to vector<2x1xf32>
    %208 = vector.broadcast %207 : vector<2x1xf32> to vector<2x16xf32>
    %209 = arith.mulf %208, %5 : vector<2x16xf32>
    %210 = arith.addf %206, %209 : vector<2x16xf32>
    %211 = vector.extract_strided_slice %0 {offsets = [0, 52], sizes = [2, 1], strides = [1, 1]} : vector<2x64xf32> to vector<2x1xf32>
    %212 = vector.broadcast %211 : vector<2x1xf32> to vector<2x16xf32>
    %213 = arith.mulf %212, %6 : vector<2x16xf32>
    %214 = arith.addf %210, %213 : vector<2x16xf32>
    %215 = vector.extract_strided_slice %0 {offsets = [0, 53], sizes = [2, 1], strides = [1, 1]} : vector<2x64xf32> to vector<2x1xf32>
    %216 = vector.broadcast %215 : vector<2x1xf32> to vector<2x16xf32>
    %217 = arith.mulf %216, %7 : vector<2x16xf32>
    %218 = arith.addf %214, %217 : vector<2x16xf32>
    %219 = vector.extract_strided_slice %0 {offsets = [0, 54], sizes = [2, 1], strides = [1, 1]} : vector<2x64xf32> to vector<2x1xf32>
    %220 = vector.broadcast %219 : vector<2x1xf32> to vector<2x16xf32>
    %221 = arith.mulf %220, %8 : vector<2x16xf32>
    %222 = arith.addf %218, %221 : vector<2x16xf32>
    %223 = vector.extract_strided_slice %0 {offsets = [0, 55], sizes = [2, 1], strides = [1, 1]} : vector<2x64xf32> to vector<2x1xf32>
    %224 = vector.broadcast %223 : vector<2x1xf32> to vector<2x16xf32>
    %225 = arith.mulf %224, %9 : vector<2x16xf32>
    %226 = arith.addf %222, %225 : vector<2x16xf32>
    %227 = vector.extract_strided_slice %0 {offsets = [0, 56], sizes = [2, 1], strides = [1, 1]} : vector<2x64xf32> to vector<2x1xf32>
    %228 = vector.broadcast %227 : vector<2x1xf32> to vector<2x16xf32>
    %229 = arith.mulf %228, %2 : vector<2x16xf32>
    %230 = vector.extract_strided_slice %0 {offsets = [0, 57], sizes = [2, 1], strides = [1, 1]} : vector<2x64xf32> to vector<2x1xf32>
    %231 = vector.broadcast %230 : vector<2x1xf32> to vector<2x16xf32>
    %232 = arith.mulf %231, %3 : vector<2x16xf32>
    %233 = arith.addf %229, %232 : vector<2x16xf32>
    %234 = vector.extract_strided_slice %0 {offsets = [0, 58], sizes = [2, 1], strides = [1, 1]} : vector<2x64xf32> to vector<2x1xf32>
    %235 = vector.broadcast %234 : vector<2x1xf32> to vector<2x16xf32>
    %236 = arith.mulf %235, %4 : vector<2x16xf32>
    %237 = arith.addf %233, %236 : vector<2x16xf32>
    %238 = vector.extract_strided_slice %0 {offsets = [0, 59], sizes = [2, 1], strides = [1, 1]} : vector<2x64xf32> to vector<2x1xf32>
    %239 = vector.broadcast %238 : vector<2x1xf32> to vector<2x16xf32>
    %240 = arith.mulf %239, %5 : vector<2x16xf32>
    %241 = arith.addf %237, %240 : vector<2x16xf32>
    %242 = vector.extract_strided_slice %0 {offsets = [0, 60], sizes = [2, 1], strides = [1, 1]} : vector<2x64xf32> to vector<2x1xf32>
    %243 = vector.broadcast %242 : vector<2x1xf32> to vector<2x16xf32>
    %244 = arith.mulf %243, %6 : vector<2x16xf32>
    %245 = arith.addf %241, %244 : vector<2x16xf32>
    %246 = vector.extract_strided_slice %0 {offsets = [0, 61], sizes = [2, 1], strides = [1, 1]} : vector<2x64xf32> to vector<2x1xf32>
    %247 = vector.broadcast %246 : vector<2x1xf32> to vector<2x16xf32>
    %248 = arith.mulf %247, %7 : vector<2x16xf32>
    %249 = arith.addf %245, %248 : vector<2x16xf32>
    %250 = vector.extract_strided_slice %0 {offsets = [0, 62], sizes = [2, 1], strides = [1, 1]} : vector<2x64xf32> to vector<2x1xf32>
    %251 = vector.broadcast %250 : vector<2x1xf32> to vector<2x16xf32>
    %252 = arith.mulf %251, %8 : vector<2x16xf32>
    %253 = arith.addf %249, %252 : vector<2x16xf32>
    %254 = vector.extract_strided_slice %0 {offsets = [0, 63], sizes = [2, 1], strides = [1, 1]} : vector<2x64xf32> to vector<2x1xf32>
    %255 = vector.broadcast %254 : vector<2x1xf32> to vector<2x16xf32>
    %256 = arith.mulf %255, %9 : vector<2x16xf32>
    %257 = arith.addf %253, %256 : vector<2x16xf32>
    %258 = tpu.concatenate %40, %71, %102, %133, %164, %195, %226, %257 in 1 : vector<2x16xf32>, vector<2x16xf32>, vector<2x16xf32>, vector<2x16xf32>, vector<2x16xf32>, vector<2x16xf32>, vector<2x16xf32>, vector<2x16xf32> -> vector<2x128xf32>
    %c0_3 = arith.constant 0 : index
    %c0_4 = arith.constant 0 : index
    %259 = vector.load %arg3[%c0_3, %c0_4] : memref<128x256xf32, #tpu.memory_space<vmem>>, vector<128x256xf32>
    %cst = arith.constant dense<0.000000e+00> : vector<2x256xf32>
    %260 = tpu.matmul %258, %259, %cst {dimension_numbers = #tpu.dot_dimension_numbers<[1], [0], [0], [1], [0, 0, 1, 1], [], []>, precision = #tpu.contract_precision<fp32>} : vector<2x128xf32>, vector<128x256xf32>, vector<2x256xf32> -> vector<2x256xf32>
    %c0_5 = arith.constant 0 : index
    %c0_6 = arith.constant 0 : index
    %261 = vector.load %arg4[%c0_5, %c0_6] : memref<1x256xf32, #tpu.memory_space<vmem>>, vector<1x256xf32>
    %262 = vector.broadcast %261 : vector<1x256xf32> to vector<2x256xf32>
    %263 = arith.addf %260, %262 : vector<2x256xf32>
    %cst_7 = arith.constant 0.000000e+00 : f32
    %264 = vector.broadcast %cst_7 : f32 to vector<2x256xf32>
    %265 = arith.subf %264, %263 : vector<2x256xf32>
    %266 = math.exp %265 : vector<2x256xf32>
    %cst_8 = arith.constant 1.000000e+00 : f32
    %267 = vector.broadcast %cst_8 : f32 to vector<2x256xf32>
    %268 = arith.addf %267, %266 : vector<2x256xf32>
    %cst_9 = arith.constant 1.000000e+00 : f32
    %269 = vector.broadcast %cst_9 : f32 to vector<2x256xf32>
    %270 = arith.divf %269, %268 : vector<2x256xf32>
    %c0_10 = arith.constant 0 : index
    %c0_11 = arith.constant 0 : index
    %271 = vector.load %arg5[%c0_10, %c0_11] : memref<64x32xf32, #tpu.memory_space<vmem>>, vector<64x32xf32>
    %cst_12 = arith.constant dense<0.000000e+00> : vector<2x32xf32>
    %272 = tpu.matmul %0, %271, %cst_12 {dimension_numbers = #tpu.dot_dimension_numbers<[1], [0], [0], [1], [0, 0, 1, 1], [], []>, precision = #tpu.contract_precision<fp32>} : vector<2x64xf32>, vector<64x32xf32>, vector<2x32xf32> -> vector<2x32xf32>
    %c0_13 = arith.constant 0 : index
    %c0_14 = arith.constant 0 : index
    %273 = vector.load %arg6[%c0_13, %c0_14] : memref<256x32xf32, #tpu.memory_space<vmem>>, vector<256x32xf32>
    %cst_15 = arith.constant dense<0.000000e+00> : vector<2x32xf32>
    %274 = tpu.matmul %270, %273, %cst_15 {dimension_numbers = #tpu.dot_dimension_numbers<[1], [0], [0], [1], [0, 0, 1, 1], [], []>, precision = #tpu.contract_precision<fp32>} : vector<2x256xf32>, vector<256x32xf32>, vector<2x32xf32> -> vector<2x32xf32>
    %275 = arith.addf %272, %274 : vector<2x32xf32>
    %c0_16 = arith.constant 0 : index
    %c0_17 = arith.constant 0 : index
    %276 = vector.load %arg7[%c0_16, %c0_17] : memref<1x32xf32, #tpu.memory_space<vmem>>, vector<1x32xf32>
    %277 = vector.broadcast %276 : vector<1x32xf32> to vector<2x32xf32>
    %278 = arith.addf %275, %277 : vector<2x32xf32>
    %279 = vector.extract_strided_slice %278 {offsets = [0, 0], sizes = [2, 4], strides = [1, 1]} : vector<2x32xf32> to vector<2x4xf32>
    %280 = vector.extract_strided_slice %278 {offsets = [0, 4], sizes = [2, 4], strides = [1, 1]} : vector<2x32xf32> to vector<2x4xf32>
    %281 = vector.extract_strided_slice %278 {offsets = [0, 8], sizes = [2, 4], strides = [1, 1]} : vector<2x32xf32> to vector<2x4xf32>
    %282 = vector.extract_strided_slice %278 {offsets = [0, 12], sizes = [2, 4], strides = [1, 1]} : vector<2x32xf32> to vector<2x4xf32>
    %283 = vector.extract_strided_slice %278 {offsets = [0, 16], sizes = [2, 4], strides = [1, 1]} : vector<2x32xf32> to vector<2x4xf32>
    %284 = vector.extract_strided_slice %278 {offsets = [0, 20], sizes = [2, 4], strides = [1, 1]} : vector<2x32xf32> to vector<2x4xf32>
    %285 = vector.extract_strided_slice %278 {offsets = [0, 24], sizes = [2, 4], strides = [1, 1]} : vector<2x32xf32> to vector<2x4xf32>
    %286 = vector.extract_strided_slice %278 {offsets = [0, 28], sizes = [2, 4], strides = [1, 1]} : vector<2x32xf32> to vector<2x4xf32>
    %287 = arith.maximumf %279, %280 : vector<2x4xf32>
    %288 = arith.maximumf %287, %281 : vector<2x4xf32>
    %289 = arith.maximumf %288, %282 : vector<2x4xf32>
    %290 = arith.maximumf %289, %283 : vector<2x4xf32>
    %291 = arith.maximumf %290, %284 : vector<2x4xf32>
    %292 = arith.maximumf %291, %285 : vector<2x4xf32>
    %293 = arith.maximumf %292, %286 : vector<2x4xf32>
    %294 = arith.subf %279, %293 : vector<2x4xf32>
    %295 = math.exp %294 : vector<2x4xf32>
    %296 = arith.subf %280, %293 : vector<2x4xf32>
    %297 = math.exp %296 : vector<2x4xf32>
    %298 = arith.subf %281, %293 : vector<2x4xf32>
    %299 = math.exp %298 : vector<2x4xf32>
    %300 = arith.subf %282, %293 : vector<2x4xf32>
    %301 = math.exp %300 : vector<2x4xf32>
    %302 = arith.subf %283, %293 : vector<2x4xf32>
    %303 = math.exp %302 : vector<2x4xf32>
    %304 = arith.subf %284, %293 : vector<2x4xf32>
    %305 = math.exp %304 : vector<2x4xf32>
    %306 = arith.subf %285, %293 : vector<2x4xf32>
    %307 = math.exp %306 : vector<2x4xf32>
    %308 = arith.subf %286, %293 : vector<2x4xf32>
    %309 = math.exp %308 : vector<2x4xf32>
    %310 = arith.addf %295, %297 : vector<2x4xf32>
    %311 = arith.addf %310, %299 : vector<2x4xf32>
    %312 = arith.addf %311, %301 : vector<2x4xf32>
    %313 = arith.addf %312, %303 : vector<2x4xf32>
    %314 = arith.addf %313, %305 : vector<2x4xf32>
    %315 = arith.addf %314, %307 : vector<2x4xf32>
    %316 = arith.addf %315, %309 : vector<2x4xf32>
    %cst_18 = arith.constant 1.000000e+00 : f32
    %317 = vector.broadcast %cst_18 : f32 to vector<2x4xf32>
    %318 = arith.divf %317, %316 : vector<2x4xf32>
    %319 = arith.mulf %295, %318 : vector<2x4xf32>
    %320 = arith.mulf %297, %318 : vector<2x4xf32>
    %321 = arith.mulf %299, %318 : vector<2x4xf32>
    %322 = arith.mulf %301, %318 : vector<2x4xf32>
    %323 = arith.mulf %303, %318 : vector<2x4xf32>
    %324 = arith.mulf %305, %318 : vector<2x4xf32>
    %325 = arith.mulf %307, %318 : vector<2x4xf32>
    %326 = arith.mulf %309, %318 : vector<2x4xf32>
    %327 = tpu.concatenate %319, %320, %321, %322, %323, %324, %325, %326 in 1 : vector<2x4xf32>, vector<2x4xf32>, vector<2x4xf32>, vector<2x4xf32>, vector<2x4xf32>, vector<2x4xf32>, vector<2x4xf32>, vector<2x4xf32> -> vector<2x32xf32>
    %c0_19 = arith.constant 0 : index
    %c0_20 = arith.constant 0 : index
    %328 = vector.load %arg8[%c0_19, %c0_20] : memref<2x32xf32, #tpu.memory_space<vmem>>, vector<2x32xf32>
    tpu.vector_store %arg8[%c0_19, %c0_20], %327 {strides = array<i32>} : memref<2x32xf32, #tpu.memory_space<vmem>>, vector<2x32xf32>,
    return
  }
  func.func @transform_0(%arg0: i32) -> (i32, i32) {
    %c0_i32 = arith.constant 0 : i32
    %c0_i32_0 = arith.constant 0 : i32
    return %arg0, %c0_i32 : i32, i32
  }
  func.func @transform_1(%arg0: i32) -> (i32, i32) {
    %c0_i32 = arith.constant 0 : i32
    %c0_i32_0 = arith.constant 0 : i32
    return %arg0, %c0_i32 : i32, i32
  }
  func.func @transform_2(%arg0: i32) -> (i32, i32) {
    %c0_i32 = arith.constant 0 : i32
    %c0_i32_0 = arith.constant 0 : i32
    %c0_i32_1 = arith.constant 0 : i32
    return %c0_i32, %c0_i32_0 : i32, i32
  }
  func.func @transform_3(%arg0: i32) -> (i32, i32) {
    %c0_i32 = arith.constant 0 : i32
    %c0_i32_0 = arith.constant 0 : i32
    %c0_i32_1 = arith.constant 0 : i32
    return %c0_i32, %c0_i32_0 : i32, i32
  }
  func.func @transform_4(%arg0: i32) -> (i32, i32) {
    %c0_i32 = arith.constant 0 : i32
    %c0_i32_0 = arith.constant 0 : i32
    %c0_i32_1 = arith.constant 0 : i32
    return %c0_i32, %c0_i32_0 : i32, i32
  }
  func.func @transform_5(%arg0: i32) -> (i32, i32) {
    %c0_i32 = arith.constant 0 : i32
    %c0_i32_0 = arith.constant 0 : i32
    %c0_i32_1 = arith.constant 0 : i32
    return %c0_i32, %c0_i32_0 : i32, i32
  }
  func.func @transform_6(%arg0: i32) -> (i32, i32) {
    %c0_i32 = arith.constant 0 : i32
    %c0_i32_0 = arith.constant 0 : i32
    %c0_i32_1 = arith.constant 0 : i32
    return %c0_i32, %c0_i32_0 : i32, i32
  }
  func.func @transform_7(%arg0: i32) -> (i32, i32) {
    %c0_i32 = arith.constant 0 : i32
    %c0_i32_0 = arith.constant 0 : i32
    return %arg0, %c0_i32 : i32, i32
  }
}

</mosaic_0001>

<llo_original>
// kernel: tpu_custom_call.1
$region0: #{tpu_custom_call.1}
  #allocation0 [shape = 'u32[]', space=smem, size = 0x4, offset = 0x4, fixed_abs, tag = 'smem constant byte address 0x4 - core index']
  #allocation1 [shape = 'u32[144,128]{1,0:T(1,128)}', space=vmem, size = 0x12000, scoped, tag = 'internal scratch']
  %s0 = inlined_call_operand.vmem [shape: f32[2,64], index: 0, kind: input, shape index: {}]
  %s1 = inlined_call_operand.vmem [shape: f32[2,128], index: 1, kind: input, shape index: {}]
  %s2 = inlined_call_operand.vmem [shape: f32[128,256], index: 2, kind: input, shape index: {}]
  %s3 = inlined_call_operand.vmem [shape: f32[1,256], index: 3, kind: input, shape index: {}]
  %s4 = inlined_call_operand.vmem [shape: f32[64,32], index: 4, kind: input, shape index: {}]
  %s5 = inlined_call_operand.vmem [shape: f32[256,32], index: 5, kind: input, shape index: {}]
  %s6 = inlined_call_operand.vmem [shape: f32[1,32], index: 6, kind: input, shape index: {}]
  %s7 = inlined_call_operand.hbm [shape: f32[2,32], index: 7, kind: output, shape index: {}]
  %s8 = sld [smem:[#allocation0]]
  $region38: #{tpu_custom_call.1} parent=0
    _
  %s10 = ssub.s32 1, %s8
  %s11 = scalar_select 0, %s10, %s8
  $region1: #{tpu_custom_call.1} parent=0
    #allocation2 [shape = 'u8[1024]{0}', space=vmem, size = 0x400, scoped, tag = 'output window, operand 0, single buffered']
    #allocation3 [shape = 's32[1]{0}', space=sflag, size = 0x4, scoped, tag = 'scoped memory for tpu_custom_call.1']
    %12 = vsyncpa [#allocation3], 0
    // Predicated region
    $region2: #{tpu_custom_call.1} parent=1 // pred_check
      _
    $region3: #{tpu_custom_call.1} parent=1 // pred_check_branch
      %14 = sbr.rel (0) target = $region5
    $region4: #{tpu_custom_call.1} parent=1 // pred_region
      _
    $region5: #{tpu_custom_call.1} parent=1 // pred_fallthru
      _
    // Predicated region
    $region6: #{tpu_custom_call.1} parent=1 // pred_check
      _
    $region7: #{tpu_custom_call.1} parent=1 // pred_check_branch
      %16 = sbr.rel (0) target = $region9
    $region8: #{tpu_custom_call.1} parent=1 // pred_region
      _
    $region9: #{tpu_custom_call.1} parent=1 // pred_fallthru
      _
    // Predicated region
    $region10: #{tpu_custom_call.1} parent=1 // pred_check
      _
    $region11: #{tpu_custom_call.1} parent=1 // pred_check_branch
      %18 = sbr.rel (0) target = $region13
    $region12: #{tpu_custom_call.1} parent=1 // pred_region
      _
    $region13: #{tpu_custom_call.1} parent=1 // pred_fallthru
      _
    // Predicated region
    $region14: #{tpu_custom_call.1} parent=1 // pred_check
      _
    $region15: #{tpu_custom_call.1} parent=1 // pred_check_branch
      %20 = sbr.rel (0) target = $region17
    $region16: #{tpu_custom_call.1} parent=1 // pred_region
      _
    $region17: #{tpu_custom_call.1} parent=1 // pred_fallthru
      _
    // Predicated region
    $region18: #{tpu_custom_call.1} parent=1 // pred_check
      _
    $region19: #{tpu_custom_call.1} parent=1 // pred_check_branch
      %22 = sbr.rel (0) target = $region21
    $region20: #{tpu_custom_call.1} parent=1 // pred_region
      _
    $region21: #{tpu_custom_call.1} parent=1 // pred_fallthru
      _
    // Predicated region
    $region22: #{tpu_custom_call.1} parent=1 // pred_check
      _
    $region23: #{tpu_custom_call.1} parent=1 // pred_check_branch
      %24 = sbr.rel (0) target = $region25
    $region24: #{tpu_custom_call.1} parent=1 // pred_region
      _
    $region25: #{tpu_custom_call.1} parent=1 // pred_fallthru
      _
    // Predicated region
    $region26: #{tpu_custom_call.1} parent=1 // pred_check
      _
    $region27: #{tpu_custom_call.1} parent=1 // pred_check_branch
      %26 = sbr.rel (0) target = $region29
    $region28: #{tpu_custom_call.1} parent=1 // pred_region
      _
    $region29: #{tpu_custom_call.1} parent=1 // pred_fallthru
      _
    %v27 = vld [vmem:[%s0] sm:$0x3]
    %v28 = vld [vmem:[%s1] sm:$0x3]
    %30 = vset.pattern.permute.xlu0 0
    %31 = vperm.xlu0 %30, %v27
    %v32 = vpop.permute.xlu0 %31
    %v34 = vmul.f32 %v32, %v28
    %35 = vset.pattern.permute.xlu0 1
    %36 = vperm.xlu0 %35, %v27
    %v37 = vpop.permute.xlu0 %36
    %v39 = vmul.f32 %v37, %v28
    %41 = vrot.lane.b32.xlu0 %v39, 112
    %v42 = vpop.permute.xlu0 %41
    %v44 = vadd.f32 %v34, %v42
    %45 = vset.pattern.permute.xlu0 2
    %46 = vperm.xlu0 %45, %v27
    %v47 = vpop.permute.xlu0 %46
    %v49 = vmul.f32 %v47, %v28
    %51 = vrot.lane.b32.xlu0 %v49, 96
    %v52 = vpop.permute.xlu0 %51
    %v54 = vadd.f32 %v44, %v52
    %55 = vset.pattern.permute.xlu0 3
    %56 = vperm.xlu0 %55, %v27
    %v57 = vpop.permute.xlu0 %56
    %v59 = vmul.f32 %v57, %v28
    %61 = vrot.lane.b32.xlu0 %v59, 80
    %v62 = vpop.permute.xlu0 %61
    %v64 = vadd.f32 %v54, %v62
    %65 = vset.pattern.permute.xlu0 4
    %66 = vperm.xlu0 %65, %v27
    %v67 = vpop.permute.xlu0 %66
    %v69 = vmul.f32 %v67, %v28
    %71 = vrot.lane.b32.xlu0 %v69, 64
    %v72 = vpop.permute.xlu0 %71
    %v74 = vadd.f32 %v64, %v72
    %75 = vset.pattern.permute.xlu0 5
    %76 = vperm.xlu0 %75, %v27
    %v77 = vpop.permute.xlu0 %76
    %v79 = vmul.f32 %v77, %v28
    %81 = vrot.lane.b32.xlu0 %v79, 48
    %v82 = vpop.permute.xlu0 %81
    %v84 = vadd.f32 %v74, %v82
    %85 = vset.pattern.permute.xlu0 6
    %86 = vperm.xlu0 %85, %v27
    %v87 = vpop.permute.xlu0 %86
    %v89 = vmul.f32 %v87, %v28
    %91 = vrot.lane.b32.xlu0 %v89, 32
    %v92 = vpop.permute.xlu0 %91
    %v94 = vadd.f32 %v84, %v92
    %95 = vset.pattern.permute.xlu0 7
    %96 = vperm.xlu0 %95, %v27
    %v97 = vpop.permute.xlu0 %96
    %v99 = vmul.f32 %v97, %v28
    %101 = vrot.lane.b32.xlu0 %v99, 16
    %v102 = vpop.permute.xlu0 %101
    %v104 = vadd.f32 %v94, %v102
    %105 = vset.pattern.permute.xlu0 8
    %106 = vperm.xlu0 %105, %v27
    %v107 = vpop.permute.xlu0 %106
    %v109 = vmul.f32 %v107, %v28
    %110 = vset.pattern.permute.xlu0 9
    %111 = vperm.xlu0 %110, %v27
    %v112 = vpop.permute.xlu0 %111
    %v114 = vmul.f32 %v112, %v28
    %116 = vrot.lane.b32.xlu0 %v114, 112
    %v117 = vpop.permute.xlu0 %116
    %v119 = vadd.f32 %v109, %v117
    %120 = vset.pattern.permute.xlu0 10
    %121 = vperm.xlu0 %120, %v27
    %v122 = vpop.permute.xlu0 %121
    %v124 = vmul.f32 %v122, %v28
    %126 = vrot.lane.b32.xlu0 %v124, 96
    %v127 = vpop.permute.xlu0 %126
    %v129 = vadd.f32 %v119, %v127
    %130 = vset.pattern.permute.xlu0 11
    %131 = vperm.xlu0 %130, %v27
    %v132 = vpop.permute.xlu0 %131
    %v134 = vmul.f32 %v132, %v28
    %136 = vrot.lane.b32.xlu0 %v134, 80
    %v137 = vpop.permute.xlu0 %136
    %v139 = vadd.f32 %v129, %v137
    %140 = vset.pattern.permute.xlu0 12
    %141 = vperm.xlu0 %140, %v27
    %v142 = vpop.permute.xlu0 %141
    %v144 = vmul.f32 %v142, %v28
    %146 = vrot.lane.b32.xlu0 %v144, 64
    %v147 = vpop.permute.xlu0 %146
    %v149 = vadd.f32 %v139, %v147
    %150 = vset.pattern.permute.xlu0 13
    %151 = vperm.xlu0 %150, %v27
    %v152 = vpop.permute.xlu0 %151
    %v154 = vmul.f32 %v152, %v28
    %156 = vrot.lane.b32.xlu0 %v154, 48
    %v157 = vpop.permute.xlu0 %156
    %v159 = vadd.f32 %v149, %v157
    %160 = vset.pattern.permute.xlu0 14
    %161 = vperm.xlu0 %160, %v27
    %v162 = vpop.permute.xlu0 %161
    %v164 = vmul.f32 %v162, %v28
    %166 = vrot.lane.b32.xlu0 %v164, 32
    %v167 = vpop.permute.xlu0 %166
    %v169 = vadd.f32 %v159, %v167
    %170 = vset.pattern.permute.xlu0 15
    %171 = vperm.xlu0 %170, %v27
    %v172 = vpop.permute.xlu0 %171
    %v174 = vmul.f32 %v172, %v28
    %176 = vrot.lane.b32.xlu0 %v174, 16
    %v177 = vpop.permute.xlu0 %176
    %v179 = vadd.f32 %v169, %v177
    %180 = vset.pattern.permute.xlu0 16
    %181 = vperm.xlu0 %180, %v27
    %v182 = vpop.permute.xlu0 %181
    %v184 = vmul.f32 %v182, %v28
    %185 = vset.pattern.permute.xlu0 17
    %186 = vperm.xlu0 %185, %v27
    %v187 = vpop.permute.xlu0 %186
    %v189 = vmul.f32 %v187, %v28
    %191 = vrot.lane.b32.xlu0 %v189, 112
    %v192 = vpop.permute.xlu0 %191
    %v194 = vadd.f32 %v184, %v192
    %195 = vset.pattern.permute.xlu0 18
    %196 = vperm.xlu0 %195, %v27
    %v197 = vpop.permute.xlu0 %196
    %v199 = vmul.f32 %v197, %v28
    %201 = vrot.lane.b32.xlu0 %v199, 96
    %v202 = vpop.permute.xlu0 %201
    %v204 = vadd.f32 %v194, %v202
    %205 = vset.pattern.permute.xlu0 19
    %206 = vperm.xlu0 %205, %v27
    %v207 = vpop.permute.xlu0 %206
    %v209 = vmul.f32 %v207, %v28
    %211 = vrot.lane.b32.xlu0 %v209, 80
    %v212 = vpop.permute.xlu0 %211
    %v214 = vadd.f32 %v204, %v212
    %215 = vset.pattern.permute.xlu0 20
    %216 = vperm.xlu0 %215, %v27
    %v217 = vpop.permute.xlu0 %216
    %v219 = vmul.f32 %v217, %v28
    %221 = vrot.lane.b32.xlu0 %v219, 64
    %v222 = vpop.permute.xlu0 %221
    %v224 = vadd.f32 %v214, %v222
    %225 = vset.pattern.permute.xlu0 21
    %226 = vperm.xlu0 %225, %v27
    %v227 = vpop.permute.xlu0 %226
    %v229 = vmul.f32 %v227, %v28
    %231 = vrot.lane.b32.xlu0 %v229, 48
    %v232 = vpop.permute.xlu0 %231
    %v234 = vadd.f32 %v224, %v232
    %235 = vset.pattern.permute.xlu0 22
    %236 = vperm.xlu0 %235, %v27
    %v237 = vpop.permute.xlu0 %236
    %v239 = vmul.f32 %v237, %v28
    %241 = vrot.lane.b32.xlu0 %v239, 32
    %v242 = vpop.permute.xlu0 %241
    %v244 = vadd.f32 %v234, %v242
    %245 = vset.pattern.permute.xlu0 23
    %246 = vperm.xlu0 %245, %v27
    %v247 = vpop.permute.xlu0 %246
    %v249 = vmul.f32 %v247, %v28
    %251 = vrot.lane.b32.xlu0 %v249, 16
    %v252 = vpop.permute.xlu0 %251
    %v254 = vadd.f32 %v244, %v252
    %255 = vset.pattern.permute.xlu0 24
    %256 = vperm.xlu0 %255, %v27
    %v257 = vpop.permute.xlu0 %256
    %v259 = vmul.f32 %v257, %v28
    %260 = vset.pattern.permute.xlu0 25
    %261 = vperm.xlu0 %260, %v27
    %v262 = vpop.permute.xlu0 %261
    %v264 = vmul.f32 %v262, %v28
    %266 = vrot.lane.b32.xlu0 %v264, 112
    %v267 = vpop.permute.xlu0 %266
    %v269 = vadd.f32 %v259, %v267
    %270 = vset.pattern.permute.xlu0 26
    %271 = vperm.xlu0 %270, %v27
    %v272 = vpop.permute.xlu0 %271
    %v274 = vmul.f32 %v272, %v28
    %276 = vrot.lane.b32.xlu0 %v274, 96
    %v277 = vpop.permute.xlu0 %276
    %v279 = vadd.f32 %v269, %v277
    %280 = vset.pattern.permute.xlu0 27
    %281 = vperm.xlu0 %280, %v27
    %v282 = vpop.permute.xlu0 %281
    %v284 = vmul.f32 %v282, %v28
    %286 = vrot.lane.b32.xlu0 %v284, 80
    %v287 = vpop.permute.xlu0 %286
    %v289 = vadd.f32 %v279, %v287
    %290 = vset.pattern.permute.xlu0 28
    %291 = vperm.xlu0 %290, %v27
    %v292 = vpop.permute.xlu0 %291
    %v294 = vmul.f32 %v292, %v28
    %296 = vrot.lane.b32.xlu0 %v294, 64
    %v297 = vpop.permute.xlu0 %296
    %v299 = vadd.f32 %v289, %v297
    %300 = vset.pattern.permute.xlu0 29
    %301 = vperm.xlu0 %300, %v27
    %v302 = vpop.permute.xlu0 %301
    %v304 = vmul.f32 %v302, %v28
    %306 = vrot.lane.b32.xlu0 %v304, 48
    %v307 = vpop.permute.xlu0 %306
    %v309 = vadd.f32 %v299, %v307
    %310 = vset.pattern.permute.xlu0 30
    %311 = vperm.xlu0 %310, %v27
    %v312 = vpop.permute.xlu0 %311
    %v314 = vmul.f32 %v312, %v28
    %316 = vrot.lane.b32.xlu0 %v314, 32
    %v317 = vpop.permute.xlu0 %316
    %v319 = vadd.f32 %v309, %v317
    %320 = vset.pattern.permute.xlu0 31
    %321 = vperm.xlu0 %320, %v27
    %v322 = vpop.permute.xlu0 %321
    %v324 = vmul.f32 %v322, %v28
    %326 = vrot.lane.b32.xlu0 %v324, 16
    %v327 = vpop.permute.xlu0 %326
    %v329 = vadd.f32 %v319, %v327
    %330 = vset.pattern.permute.xlu0 32
    %331 = vperm.xlu0 %330, %v27
    %v332 = vpop.permute.xlu0 %331
    %v334 = vmul.f32 %v332, %v28
    %335 = vset.pattern.permute.xlu0 33
    %336 = vperm.xlu0 %335, %v27
    %v337 = vpop.permute.xlu0 %336
    %v339 = vmul.f32 %v337, %v28
    %341 = vrot.lane.b32.xlu0 %v339, 112
    %v342 = vpop.permute.xlu0 %341
    %v344 = vadd.f32 %v334, %v342
    %345 = vset.pattern.permute.xlu0 34
    %346 = vperm.xlu0 %345, %v27
    %v347 = vpop.permute.xlu0 %346
    %v349 = vmul.f32 %v347, %v28
    %351 = vrot.lane.b32.xlu0 %v349, 96
    %v352 = vpop.permute.xlu0 %351
    %v354 = vadd.f32 %v344, %v352
    %355 = vset.pattern.permute.xlu0 35
    %356 = vperm.xlu0 %355, %v27
    %v357 = vpop.permute.xlu0 %356
    %v359 = vmul.f32 %v357, %v28
    %361 = vrot.lane.b32.xlu0 %v359, 80
    %v362 = vpop.permute.xlu0 %361
    %v364 = vadd.f32 %v354, %v362
    %365 = vset.pattern.permute.xlu0 36
    %366 = vperm.xlu0 %365, %v27
    %v367 = vpop.permute.xlu0 %366
    %v369 = vmul.f32 %v367, %v28
    %371 = vrot.lane.b32.xlu0 %v369, 64
    %v372 = vpop.permute.xlu0 %371
    %v374 = vadd.f32 %v364, %v372
    %375 = vset.pattern.permute.xlu0 37
    %376 = vperm.xlu0 %375, %v27
    %v377 = vpop.permute.xlu0 %376
    %v379 = vmul.f32 %v377, %v28
    %381 = vrot.lane.b32.xlu0 %v379, 48
    %v382 = vpop.permute.xlu0 %381
    %v384 = vadd.f32 %v374, %v382
    %385 = vset.pattern.permute.xlu0 38
    %386 = vperm.xlu0 %385, %v27
    %v387 = vpop.permute.xlu0 %386
    %v389 = vmul.f32 %v387, %v28
    %391 = vrot.lane.b32.xlu0 %v389, 32
    %v392 = vpop.permute.xlu0 %391
    %v394 = vadd.f32 %v384, %v392
    %395 = vset.pattern.permute.xlu0 39
    %396 = vperm.xlu0 %395, %v27
    %v397 = vpop.permute.xlu0 %396
    %v399 = vmul.f32 %v397, %v28
    %401 = vrot.lane.b32.xlu0 %v399, 16
    %v402 = vpop.permute.xlu0 %401
    %v404 = vadd.f32 %v394, %v402
    %405 = vset.pattern.permute.xlu0 40
    %406 = vperm.xlu0 %405, %v27
    %v407 = vpop.permute.xlu0 %406
    %v409 = vmul.f32 %v407, %v28
    %410 = vset.pattern.permute.xlu0 41
    %411 = vperm.xlu0 %410, %v27
    %v412 = vpop.permute.xlu0 %411
    %v414 = vmul.f32 %v412, %v28
    %416 = vrot.lane.b32.xlu0 %v414, 112
    %v417 = vpop.permute.xlu0 %416
    %v419 = vadd.f32 %v409, %v417
    %420 = vset.pattern.permute.xlu0 42
    %421 = vperm.xlu0 %420, %v27
    %v422 = vpop.permute.xlu0 %421
    %v424 = vmul.f32 %v422, %v28
    %426 = vrot.lane.b32.xlu0 %v424, 96
    %v427 = vpop.permute.xlu0 %426
    %v429 = vadd.f32 %v419, %v427
    %430 = vset.pattern.permute.xlu0 43
    %431 = vperm.xlu0 %430, %v27
    %v432 = vpop.permute.xlu0 %431
    %v434 = vmul.f32 %v432, %v28
    %436 = vrot.lane.b32.xlu0 %v434, 80
    %v437 = vpop.permute.xlu0 %436
    %v439 = vadd.f32 %v429, %v437
    %440 = vset.pattern.permute.xlu0 44
    %441 = vperm.xlu0 %440, %v27
    %v442 = vpop.permute.xlu0 %441
    %v444 = vmul.f32 %v442, %v28
    %446 = vrot.lane.b32.xlu0 %v444, 64
    %v447 = vpop.permute.xlu0 %446
    %v449 = vadd.f32 %v439, %v447
    %450 = vset.pattern.permute.xlu0 45
    %451 = vperm.xlu0 %450, %v27
    %v452 = vpop.permute.xlu0 %451
    %v454 = vmul.f32 %v452, %v28
    %456 = vrot.lane.b32.xlu0 %v454, 48
    %v457 = vpop.permute.xlu0 %456
    %v459 = vadd.f32 %v449, %v457
    %460 = vset.pattern.permute.xlu0 46
    %461 = vperm.xlu0 %460, %v27
    %v462 = vpop.permute.xlu0 %461
    %v464 = vmul.f32 %v462, %v28
    %466 = vrot.lane.b32.xlu0 %v464, 32
    %v467 = vpop.permute.xlu0 %466
    %v469 = vadd.f32 %v459, %v467
    %470 = vset.pattern.permute.xlu0 47
    %471 = vperm.xlu0 %470, %v27
    %v472 = vpop.permute.xlu0 %471
    %v474 = vmul.f32 %v472, %v28
    %476 = vrot.lane.b32.xlu0 %v474, 16
    %v477 = vpop.permute.xlu0 %476
    %v479 = vadd.f32 %v469, %v477
    %480 = vset.pattern.permute.xlu0 48
    %481 = vperm.xlu0 %480, %v27
    %v482 = vpop.permute.xlu0 %481
    %v484 = vmul.f32 %v482, %v28
    %485 = vset.pattern.permute.xlu0 49
    %486 = vperm.xlu0 %485, %v27
    %v487 = vpop.permute.xlu0 %486
    %v489 = vmul.f32 %v487, %v28
    %491 = vrot.lane.b32.xlu0 %v489, 112
    %v492 = vpop.permute.xlu0 %491
    %v494 = vadd.f32 %v484, %v492
    %495 = vset.pattern.permute.xlu0 50
    %496 = vperm.xlu0 %495, %v27
    %v497 = vpop.permute.xlu0 %496
    %v499 = vmul.f32 %v497, %v28
    %501 = vrot.lane.b32.xlu0 %v499, 96
    %v502 = vpop.permute.xlu0 %501
    %v504 = vadd.f32 %v494, %v502
    %505 = vset.pattern.permute.xlu0 51
    %506 = vperm.xlu0 %505, %v27
    %v507 = vpop.permute.xlu0 %506
    %v509 = vmul.f32 %v507, %v28
    %511 = vrot.lane.b32.xlu0 %v509, 80
    %v512 = vpop.permute.xlu0 %511
    %v514 = vadd.f32 %v504, %v512
    %515 = vset.pattern.permute.xlu0 52
    %516 = vperm.xlu0 %515, %v27
    %v517 = vpop.permute.xlu0 %516
    %v519 = vmul.f32 %v517, %v28
    %521 = vrot.lane.b32.xlu0 %v519, 64
    %v522 = vpop.permute.xlu0 %521
    %v524 = vadd.f32 %v514, %v522
    %525 = vset.pattern.permute.xlu0 53
    %526 = vperm.xlu0 %525, %v27
    %v527 = vpop.permute.xlu0 %526
    %v529 = vmul.f32 %v527, %v28
    %531 = vrot.lane.b32.xlu0 %v529, 48
    %v532 = vpop.permute.xlu0 %531
    %v534 = vadd.f32 %v524, %v532
    %535 = vset.pattern.permute.xlu0 54
    %536 = vperm.xlu0 %535, %v27
    %v537 = vpop.permute.xlu0 %536
    %v539 = vmul.f32 %v537, %v28
    %541 = vrot.lane.b32.xlu0 %v539, 32
    %v542 = vpop.permute.xlu0 %541
    %v544 = vadd.f32 %v534, %v542
    %545 = vset.pattern.permute.xlu0 55
    %546 = vperm.xlu0 %545, %v27
    %v547 = vpop.permute.xlu0 %546
    %v549 = vmul.f32 %v547, %v28
    %551 = vrot.lane.b32.xlu0 %v549, 16
    %v552 = vpop.permute.xlu0 %551
    %v554 = vadd.f32 %v544, %v552
    %555 = vset.pattern.permute.xlu0 56
    %556 = vperm.xlu0 %555, %v27
    %v557 = vpop.permute.xlu0 %556
    %v559 = vmul.f32 %v557, %v28
    %560 = vset.pattern.permute.xlu0 57
    %561 = vperm.xlu0 %560, %v27
    %v562 = vpop.permute.xlu0 %561
    %v564 = vmul.f32 %v562, %v28
    %566 = vrot.lane.b32.xlu0 %v564, 112
    %v567 = vpop.permute.xlu0 %566
    %v569 = vadd.f32 %v559, %v567
    %570 = vset.pattern.permute.xlu0 58
    %571 = vperm.xlu0 %570, %v27
    %v572 = vpop.permute.xlu0 %571
    %v574 = vmul.f32 %v572, %v28
    %576 = vrot.lane.b32.xlu0 %v574, 96
    %v577 = vpop.permute.xlu0 %576
    %v579 = vadd.f32 %v569, %v577
    %580 = vset.pattern.permute.xlu0 59
    %581 = vperm.xlu0 %580, %v27
    %v582 = vpop.permute.xlu0 %581
    %v584 = vmul.f32 %v582, %v28
    %586 = vrot.lane.b32.xlu0 %v584, 80
    %v587 = vpop.permute.xlu0 %586
    %v589 = vadd.f32 %v579, %v587
    %590 = vset.pattern.permute.xlu0 60
    %591 = vperm.xlu0 %590, %v27
    %v592 = vpop.permute.xlu0 %591
    %v594 = vmul.f32 %v592, %v28
    %596 = vrot.lane.b32.xlu0 %v594, 64
    %v597 = vpop.permute.xlu0 %596
    %v599 = vadd.f32 %v589, %v597
    %600 = vset.pattern.permute.xlu0 61
    %601 = vperm.xlu0 %600, %v27
    %v602 = vpop.permute.xlu0 %601
    %v604 = vmul.f32 %v602, %v28
    %606 = vrot.lane.b32.xlu0 %v604, 48
    %v607 = vpop.permute.xlu0 %606
    %v609 = vadd.f32 %v599, %v607
    %610 = vset.pattern.permute.xlu0 62
    %611 = vperm.xlu0 %610, %v27
    %v612 = vpop.permute.xlu0 %611
    %v614 = vmul.f32 %v612, %v28
    %616 = vrot.lane.b32.xlu0 %v614, 32
    %v617 = vpop.permute.xlu0 %616
    %v619 = vadd.f32 %v609, %v617
    %620 = vset.pattern.permute.xlu0 63
    %621 = vperm.xlu0 %620, %v27
    %v622 = vpop.permute.xlu0 %621
    %v624 = vmul.f32 %v622, %v28
    %626 = vrot.lane.b32.xlu0 %v624, 16
    %v627 = vpop.permute.xlu0 %626
    %v629 = vadd.f32 %v619, %v627
    %631 = vrot.lane.b32.xlu0 %v179, 16
    %v632 = vpop.permute.xlu0 %631
    %635 = vrot.lane.b32.xlu0 %v254, 32
    %v636 = vpop.permute.xlu0 %635
    %639 = vrot.lane.b32.xlu0 %v329, 48
    %v640 = vpop.permute.xlu0 %639
    %643 = vrot.lane.b32.xlu0 %v404, 64
    %v644 = vpop.permute.xlu0 %643
    %647 = vrot.lane.b32.xlu0 %v479, 80
    %v648 = vpop.permute.xlu0 %647
    %651 = vrot.lane.b32.xlu0 %v554, 96
    %v652 = vpop.permute.xlu0 %651
    %655 = vrot.lane.b32.xlu0 %v629, 112
    %v656 = vpop.permute.xlu0 %655
    %vm658 = vcmask 130048
    %v659 = vsel %vm658, %v104, %v632
    %vm660 = vcmask 261120
    %v661 = vsel %vm660, %v659, %v636
    %vm662 = vcmask 392192
    %v663 = vsel %vm662, %v661, %v640
    %vm664 = vcmask 523264
    %v665 = vsel %vm664, %v663, %v644
    %vm666 = vcmask 654336
    %v667 = vsel %vm666, %v665, %v648
    %vm668 = vcmask 785408
    %v669 = vsel %vm668, %v667, %v652
    %vm670 = vcmask 916480
    %v671 = vsel %vm670, %v669, %v656
    %v672 = vld [vmem:[%s2] sm:$0xff]
    %v673 = vld [vmem:[%s2 + $0x8] sm:$0xff]
    %v674 = vld [vmem:[%s2 + $0x10] sm:$0xff]
    %v675 = vld [vmem:[%s2 + $0x18] sm:$0xff]
    %v676 = vld [vmem:[%s2 + $0x20] sm:$0xff]
    %v677 = vld [vmem:[%s2 + $0x28] sm:$0xff]
    %v678 = vld [vmem:[%s2 + $0x30] sm:$0xff]
    %v679 = vld [vmem:[%s2 + $0x38] sm:$0xff]
    %v680 = vld [vmem:[%s2 + $0x40] sm:$0xff]
    %v681 = vld [vmem:[%s2 + $0x48] sm:$0xff]
    %v682 = vld [vmem:[%s2 + $0x50] sm:$0xff]
    %v683 = vld [vmem:[%s2 + $0x58] sm:$0xff]
    %v684 = vld [vmem:[%s2 + $0x60] sm:$0xff]
    %v685 = vld [vmem:[%s2 + $0x68] sm:$0xff]
    %v686 = vld [vmem:[%s2 + $0x70] sm:$0xff]
    %v687 = vld [vmem:[%s2 + $0x78] sm:$0xff]
    %v688 = vld [vmem:[%s2 + $0x80] sm:$0xff]
    %v689 = vld [vmem:[%s2 + $0x88] sm:$0xff]
    %v690 = vld [vmem:[%s2 + $0x90] sm:$0xff]
    %v691 = vld [vmem:[%s2 + $0x98] sm:$0xff]
    %v692 = vld [vmem:[%s2 + $0xa0] sm:$0xff]
    %v693 = vld [vmem:[%s2 + $0xa8] sm:$0xff]
    %v694 = vld [vmem:[%s2 + $0xb0] sm:$0xff]
    %v695 = vld [vmem:[%s2 + $0xb8] sm:$0xff]
    %v696 = vld [vmem:[%s2 + $0xc0] sm:$0xff]
    %v697 = vld [vmem:[%s2 + $0xc8] sm:$0xff]
    %v698 = vld [vmem:[%s2 + $0xd0] sm:$0xff]
    %v699 = vld [vmem:[%s2 + $0xd8] sm:$0xff]
    %v700 = vld [vmem:[%s2 + $0xe0] sm:$0xff]
    %v701 = vld [vmem:[%s2 + $0xe8] sm:$0xff]
    %v702 = vld [vmem:[%s2 + $0xf0] sm:$0xff]
    %v703 = vld [vmem:[%s2 + $0xf8] sm:$0xff]
    %v704 = vld [vmem:[%s3] sm:$0x3]
    %v706 = vlaneseq
    %v707 = vshrl.u32 %v706, 7
    %v708 = vsub.s32 0, %v707
    %v709 = vrot.slane %v704, %v708
    %v710 = vlaneseq
    %v711 = vshrl.u32 %v710, 7
    %v712 = vsub.s32 1, %v711
    %v713 = vrot.slane %v704, %v712
    %v716 = vand.u32 %v673, 4294901760
    %717 = vmatprep.subr.mxu0 %v716
    %v718 = vand.u32 %v672, 4294901760
    %719 = vmatpush1.msra.mxu0 %v718
    %v720 = vand.u32 %v675, 4294901760
    %721 = vmatprep.subr.mxu0 %v720
    %v722 = vand.u32 %v674, 4294901760
    %723 = vmatpush1.msra.mxu0 %v722
    %v724 = vand.u32 %v677, 4294901760
    %725 = vmatprep.subr.mxu0 %v724
    %v726 = vand.u32 %v676, 4294901760
    %727 = vmatpush1.msra.mxu0 %v726
    %v728 = vand.u32 %v679, 4294901760
    %729 = vmatprep.subr.mxu0 %v728
    %v730 = vand.u32 %v678, 4294901760
    %731 = vmatpush1.msra.mxu0 %v730
    %v732 = vand.u32 %v681, 4294901760
    %733 = vmatprep.subr.mxu0 %v732
    %v734 = vand.u32 %v680, 4294901760
    %735 = vmatpush1.msra.mxu0 %v734
    %v736 = vand.u32 %v683, 4294901760
    %737 = vmatprep.subr.mxu0 %v736
    %v738 = vand.u32 %v682, 4294901760
    %739 = vmatpush1.msra.mxu0 %v738
    %v740 = vand.u32 %v685, 4294901760
    %741 = vmatprep.subr.mxu0 %v740
    %v742 = vand.u32 %v684, 4294901760
    %743 = vmatpush1.msra.mxu0 %v742
    %v744 = vand.u32 %v687, 4294901760
    %745 = vmatprep.subr.mxu0 %v744
    %v746 = vand.u32 %v686, 4294901760
    %747 = vmatpush1.msra.mxu0 %v746
    %v748 = vand.u32 %v689, 4294901760
    %749 = vmatprep.subr.mxu0 %v748
    %v750 = vand.u32 %v688, 4294901760
    %751 = vmatpush1.msra.mxu0 %v750
    %v752 = vand.u32 %v691, 4294901760
    %753 = vmatprep.subr.mxu0 %v752
    %v754 = vand.u32 %v690, 4294901760
    %755 = vmatpush1.msra.mxu0 %v754
    %v756 = vand.u32 %v693, 4294901760
    %757 = vmatprep.subr.mxu0 %v756
    %v758 = vand.u32 %v692, 4294901760
    %759 = vmatpush1.msra.mxu0 %v758
    %v760 = vand.u32 %v695, 4294901760
    %761 = vmatprep.subr.mxu0 %v760
    %v762 = vand.u32 %v694, 4294901760
    %763 = vmatpush1.msra.mxu0 %v762
    %v764 = vand.u32 %v697, 4294901760
    %765 = vmatprep.subr.mxu0 %v764
    %v766 = vand.u32 %v696, 4294901760
    %767 = vmatpush1.msra.mxu0 %v766
    %v768 = vand.u32 %v699, 4294901760
    %769 = vmatprep.subr.mxu0 %v768
    %v770 = vand.u32 %v698, 4294901760
    %771 = vmatpush1.msra.mxu0 %v770
    %v772 = vand.u32 %v701, 4294901760
    %773 = vmatprep.subr.mxu0 %v772
    %v774 = vand.u32 %v700, 4294901760
    %775 = vmatpush1.msra.mxu0 %v774
    %v776 = vand.u32 %v703, 4294901760
    %777 = vmatprep.subr.mxu0 %v776
    %v778 = vand.u32 %v702, 4294901760
    %779 = vmatpush1.msra.mxu0 %v778
    %780 = vmatprep.subr.mxu0 0.0
    %781 = vmatpush1.msra.mxu0 0.0
    %782 = vmatprep.subr.mxu0 0.0
    %783 = vmatpush1.msra.mxu0 0.0
    %784 = vmatprep.subr.mxu0 0.0
    %785 = vmatpush1.msra.mxu0 0.0
    %786 = vmatprep.subr.mxu0 0.0
    %787 = vmatpush1.msra.mxu0 0.0
    %788 = vmatprep.subr.mxu0 0.0
    %789 = vmatpush1.msra.mxu0 0.0
    %790 = vmatprep.subr.mxu0 0.0
    %791 = vmatpush1.msra.mxu0 0.0
    %792 = vmatprep.subr.mxu0 0.0
    %793 = vmatpush1.msra.mxu0 0.0
    %794 = vmatprep.subr.mxu0 0.0
    %795 = vmatpush1.msra.mxu0 0.0
    %796 = vmatprep.subr.mxu0 0.0
    %797 = vmatpush1.msra.mxu0 0.0
    %798 = vmatprep.subr.mxu0 0.0
    %799 = vmatpush1.msra.mxu0 0.0
    %800 = vmatprep.subr.mxu0 0.0
    %801 = vmatpush1.msra.mxu0 0.0
    %802 = vmatprep.subr.mxu0 0.0
    %803 = vmatpush1.msra.mxu0 0.0
    %804 = vmatprep.subr.mxu0 0.0
    %805 = vmatpush1.msra.mxu0 0.0
    %806 = vmatprep.subr.mxu0 0.0
    %807 = vmatpush1.msra.mxu0 0.0
    %808 = vmatprep.subr.mxu0 0.0
    %809 = vmatpush1.msra.mxu0 0.0
    %810 = vmatprep.subr.mxu0 0.0
    %811 = vmatpush1.msra.mxu0 0.0
    %812 = vmatprep.mubr.f32.mxu0 0.0
    %v813 = vand.u32 %v671, 4294901760
    %v814 = vsub.f32 %v671, %v813
    %v815 = vand.u32 %v814, 4294901760
    %v816 = vsub.f32 %v814, %v815
    %v817 = vand.u32 %v816, 4294901760
    %818 = vmatmul.mubr.f32.gmra.mrb[0].mxu0 %v817
    %v819 = vpop.f32.mrb[0].mxu0
    %v820 = vadd.f32 %v709, %v819
    %v821 = vpop.f32.mrb[0].mxu0
    %v822 = vadd.f32 %v713, %v821
    %823 = vdwg.mxu0
    %v824 = vand.u32 %v673, 4294901760
    %v825 = vsub.f32 %v673, %v824
    %v826 = vand.u32 %v825, 4294901760
    %v827 = vsub.f32 %v825, %v826
    %v828 = vand.u32 %v827, 4294901760
    %829 = vmatprep.subr.mxu0 %v828
    %v830 = vand.u32 %v672, 4294901760
    %v831 = vsub.f32 %v672, %v830
    %v832 = vand.u32 %v831, 4294901760
    %v833 = vsub.f32 %v831, %v832
    %v834 = vand.u32 %v833, 4294901760
    %835 = vmatpush1.msra.mxu0 %v834
    %v836 = vand.u32 %v675, 4294901760
    %v837 = vsub.f32 %v675, %v836
    %v838 = vand.u32 %v837, 4294901760
    %v839 = vsub.f32 %v837, %v838
    %v840 = vand.u32 %v839, 4294901760
    %841 = vmatprep.subr.mxu0 %v840
    %v842 = vand.u32 %v674, 4294901760
    %v843 = vsub.f32 %v674, %v842
    %v844 = vand.u32 %v843, 4294901760
    %v845 = vsub.f32 %v843, %v844
    %v846 = vand.u32 %v845, 4294901760
    %847 = vmatpush1.msra.mxu0 %v846
    %v848 = vand.u32 %v677, 4294901760
    %v849 = vsub.f32 %v677, %v848
    %v850 = vand.u32 %v849, 4294901760
    %v851 = vsub.f32 %v849, %v850
    %v852 = vand.u32 %v851, 4294901760
    %853 = vmatprep.subr.mxu0 %v852
    %v854 = vand.u32 %v676, 4294901760
    %v855 = vsub.f32 %v676, %v854
    %v856 = vand.u32 %v855, 4294901760
    %v857 = vsub.f32 %v855, %v856
    %v858 = vand.u32 %v857, 4294901760
    %859 = vmatpush1.msra.mxu0 %v858
    %v860 = vand.u32 %v679, 4294901760
    %v861 = vsub.f32 %v679, %v860
    %v862 = vand.u32 %v861, 4294901760
    %v863 = vsub.f32 %v861, %v862
    %v864 = vand.u32 %v863, 4294901760
    %865 = vmatprep.subr.mxu0 %v864
    %v866 = vand.u32 %v678, 4294901760
    %v867 = vsub.f32 %v678, %v866
    %v868 = vand.u32 %v867, 4294901760
    %v869 = vsub.f32 %v867, %v868
    %v870 = vand.u32 %v869, 4294901760
    %871 = vmatpush1.msra.mxu0 %v870
    %v872 = vand.u32 %v681, 4294901760
    %v873 = vsub.f32 %v681, %v872
    %v874 = vand.u32 %v873, 4294901760
    %v875 = vsub.f32 %v873, %v874
    %v876 = vand.u32 %v875, 4294901760
    %877 = vmatprep.subr.mxu0 %v876
    %v878 = vand.u32 %v680, 4294901760
    %v879 = vsub.f32 %v680, %v878
    %v880 = vand.u32 %v879, 4294901760
    %v881 = vsub.f32 %v879, %v880
    %v882 = vand.u32 %v881, 4294901760
    %883 = vmatpush1.msra.mxu0 %v882
    %v884 = vand.u32 %v683, 4294901760
    %v885 = vsub.f32 %v683, %v884
    %v886 = vand.u32 %v885, 4294901760
    %v887 = vsub.f32 %v885, %v886
    %v888 = vand.u32 %v887, 4294901760
    %889 = vmatprep.subr.mxu0 %v888
    %v890 = vand.u32 %v682, 4294901760
    %v891 = vsub.f32 %v682, %v890
    %v892 = vand.u32 %v891, 4294901760
    %v893 = vsub.f32 %v891, %v892
    %v894 = vand.u32 %v893, 4294901760
    %895 = vmatpush1.msra.mxu0 %v894
    %v896 = vand.u32 %v685, 4294901760
    %v897 = vsub.f32 %v685, %v896
    %v898 = vand.u32 %v897, 4294901760
    %v899 = vsub.f32 %v897, %v898
    %v900 = vand.u32 %v899, 4294901760
    %901 = vmatprep.subr.mxu0 %v900
    %v902 = vand.u32 %v684, 4294901760
    %v903 = vsub.f32 %v684, %v902
    %v904 = vand.u32 %v903, 4294901760
    %v905 = vsub.f32 %v903, %v904
    %v906 = vand.u32 %v905, 4294901760
    %907 = vmatpush1.msra.mxu0 %v906
    %v908 = vand.u32 %v687, 4294901760
    %v909 = vsub.f32 %v687, %v908
    %v910 = vand.u32 %v909, 4294901760
    %v911 = vsub.f32 %v909, %v910
    %v912 = vand.u32 %v911, 4294901760
    %913 = vmatprep.subr.mxu0 %v912
    %v914 = vand.u32 %v686, 4294901760
    %v915 = vsub.f32 %v686, %v914
    %v916 = vand.u32 %v915, 4294901760
    %v917 = vsub.f32 %v915, %v916
    %v918 = vand.u32 %v917, 4294901760
    %919 = vmatpush1.msra.mxu0 %v918
    %v920 = vand.u32 %v689, 4294901760
    %v921 = vsub.f32 %v689, %v920
    %v922 = vand.u32 %v921, 4294901760
    %v923 = vsub.f32 %v921, %v922
    %v924 = vand.u32 %v923, 4294901760
    %925 = vmatprep.subr.mxu0 %v924
    %v926 = vand.u32 %v688, 4294901760
    %v927 = vsub.f32 %v688, %v926
    %v928 = vand.u32 %v927, 4294901760
    %v929 = vsub.f32 %v927, %v928
    %v930 = vand.u32 %v929, 4294901760
    %931 = vmatpush1.msra.mxu0 %v930
    %v932 = vand.u32 %v691, 4294901760
    %v933 = vsub.f32 %v691, %v932
    %v934 = vand.u32 %v933, 4294901760
    %v935 = vsub.f32 %v933, %v934
    %v936 = vand.u32 %v935, 4294901760
    %937 = vmatprep.subr.mxu0 %v936
    %v938 = vand.u32 %v690, 4294901760
    %v939 = vsub.f32 %v690, %v938
    %v940 = vand.u32 %v939, 4294901760
    %v941 = vsub.f32 %v939, %v940
    %v942 = vand.u32 %v941, 4294901760
    %943 = vmatpush1.msra.mxu0 %v942
    %v944 = vand.u32 %v693, 4294901760
    %v945 = vsub.f32 %v693, %v944
    %v946 = vand.u32 %v945, 4294901760
    %v947 = vsub.f32 %v945, %v946
    %v948 = vand.u32 %v947, 4294901760
    %949 = vmatprep.subr.mxu0 %v948
    %v950 = vand.u32 %v692, 4294901760
    %v951 = vsub.f32 %v692, %v950
    %v952 = vand.u32 %v951, 4294901760
    %v953 = vsub.f32 %v951, %v952
    %v954 = vand.u32 %v953, 4294901760
    %955 = vmatpush1.msra.mxu0 %v954
    %v956 = vand.u32 %v695, 4294901760
    %v957 = vsub.f32 %v695, %v956
    %v958 = vand.u32 %v957, 4294901760
    %v959 = vsub.f32 %v957, %v958
    %v960 = vand.u32 %v959, 4294901760
    %961 = vmatprep.subr.mxu0 %v960
    %v962 = vand.u32 %v694, 4294901760
    %v963 = vsub.f32 %v694, %v962
    %v964 = vand.u32 %v963, 4294901760
    %v965 = vsub.f32 %v963, %v964
    %v966 = vand.u32 %v965, 4294901760
    %967 = vmatpush1.msra.mxu0 %v966
    %v968 = vand.u32 %v697, 4294901760
    %v969 = vsub.f32 %v697, %v968
    %v970 = vand.u32 %v969, 4294901760
    %v971 = vsub.f32 %v969, %v970
    %v972 = vand.u32 %v971, 4294901760
    %973 = vmatprep.subr.mxu0 %v972
    %v974 = vand.u32 %v696, 4294901760
    %v975 = vsub.f32 %v696, %v974
    %v976 = vand.u32 %v975, 4294901760
    %v977 = vsub.f32 %v975, %v976
    %v978 = vand.u32 %v977, 4294901760
    %979 = vmatpush1.msra.mxu0 %v978
    %v980 = vand.u32 %v699, 4294901760
    %v981 = vsub.f32 %v699, %v980
    %v982 = vand.u32 %v981, 4294901760
    %v983 = vsub.f32 %v981, %v982
    %v984 = vand.u32 %v983, 4294901760
    %985 = vmatprep.subr.mxu0 %v984
    %v986 = vand.u32 %v698, 4294901760
    %v987 = vsub.f32 %v698, %v986
    %v988 = vand.u32 %v987, 4294901760
    %v989 = vsub.f32 %v987, %v988
    %v990 = vand.u32 %v989, 4294901760
    %991 = vmatpush1.msra.mxu0 %v990
    %v992 = vand.u32 %v701, 4294901760
    %v993 = vsub.f32 %v701, %v992
    %v994 = vand.u32 %v993, 4294901760
    %v995 = vsub.f32 %v993, %v994
    %v996 = vand.u32 %v995, 4294901760
    %997 = vmatprep.subr.mxu0 %v996
    %v998 = vand.u32 %v700, 4294901760
    %v999 = vsub.f32 %v700, %v998
    %v1000 = vand.u32 %v999, 4294901760
    %v1001 = vsub.f32 %v999, %v1000
    %v1002 = vand.u32 %v1001, 4294901760
    %1003 = vmatpush1.msra.mxu0 %v1002
    %v1004 = vand.u32 %v703, 4294901760
    %v1005 = vsub.f32 %v703, %v1004
    %v1006 = vand.u32 %v1005, 4294901760
    %v1007 = vsub.f32 %v1005, %v1006
    %v1008 = vand.u32 %v1007, 4294901760
    %1009 = vmatprep.subr.mxu0 %v1008
    %v1010 = vand.u32 %v702, 4294901760
    %v1011 = vsub.f32 %v702, %v1010
    %v1012 = vand.u32 %v1011, 4294901760
    %v1013 = vsub.f32 %v1011, %v1012
    %v1014 = vand.u32 %v1013, 4294901760
    %1015 = vmatpush1.msra.mxu0 %v1014
    %1016 = vmatprep.subr.mxu0 0.0
    %1017 = vmatpush1.msra.mxu0 0.0
    %1018 = vmatprep.subr.mxu0 0.0
    %1019 = vmatpush1.msra.mxu0 0.0
    %1020 = vmatprep.subr.mxu0 0.0
    %1021 = vmatpush1.msra.mxu0 0.0
    %1022 = vmatprep.subr.mxu0 0.0
    %1023 = vmatpush1.msra.mxu0 0.0
    %1024 = vmatprep.subr.mxu0 0.0
    %1025 = vmatpush1.msra.mxu0 0.0
    %1026 = vmatprep.subr.mxu0 0.0
    %1027 = vmatpush1.msra.mxu0 0.0
    %1028 = vmatprep.subr.mxu0 0.0
    %1029 = vmatpush1.msra.mxu0 0.0
    %1030 = vmatprep.subr.mxu0 0.0
    %1031 = vmatpush1.msra.mxu0 0.0
    %1032 = vmatprep.subr.mxu0 0.0
    %1033 = vmatpush1.msra.mxu0 0.0
    %1034 = vmatprep.subr.mxu0 0.0
    %1035 = vmatpush1.msra.mxu0 0.0
    %1036 = vmatprep.subr.mxu0 0.0
    %1037 = vmatpush1.msra.mxu0 0.0
    %1038 = vmatprep.subr.mxu0 0.0
    %1039 = vmatpush1.msra.mxu0 0.0
    %1040 = vmatprep.subr.mxu0 0.0
    %1041 = vmatpush1.msra.mxu0 0.0
    %1042 = vmatprep.subr.mxu0 0.0
    %1043 = vmatpush1.msra.mxu0 0.0
    %1044 = vmatprep.subr.mxu0 0.0
    %1045 = vmatpush1.msra.mxu0 0.0
    %1046 = vmatprep.subr.mxu0 0.0
    %1047 = vmatpush1.msra.mxu0 0.0
    %1048 = vmatprep.mubr.f32.mxu0 0.0
    %v1049 = vand.u32 %v671, 4294901760
    %1050 = vmatmul.mubr.f32.gmra.mrb[0].mxu0 %v1049
    %v1051 = vpop.f32.mrb[0].mxu0
    %v1052 = vadd.f32 %v820, %v1051
    %v1053 = vpop.f32.mrb[0].mxu0
    %v1054 = vadd.f32 %v822, %v1053
    %1055 = vdwg.mxu0
    %v1056 = vand.u32 %v673, 4294901760
    %v1057 = vsub.f32 %v673, %v1056
    %1058 = vmatprep.subr.mxu0 %v1057
    %v1059 = vand.u32 %v672, 4294901760
    %v1060 = vsub.f32 %v672, %v1059
    %1061 = vmatpush1.msra.mxu0 %v1060
    %v1062 = vand.u32 %v675, 4294901760
    %v1063 = vsub.f32 %v675, %v1062
    %1064 = vmatprep.subr.mxu0 %v1063
    %v1065 = vand.u32 %v674, 4294901760
    %v1066 = vsub.f32 %v674, %v1065
    %1067 = vmatpush1.msra.mxu0 %v1066
    %v1068 = vand.u32 %v677, 4294901760
    %v1069 = vsub.f32 %v677, %v1068
    %1070 = vmatprep.subr.mxu0 %v1069
    %v1071 = vand.u32 %v676, 4294901760
    %v1072 = vsub.f32 %v676, %v1071
    %1073 = vmatpush1.msra.mxu0 %v1072
    %v1074 = vand.u32 %v679, 4294901760
    %v1075 = vsub.f32 %v679, %v1074
    %1076 = vmatprep.subr.mxu0 %v1075
    %v1077 = vand.u32 %v678, 4294901760
    %v1078 = vsub.f32 %v678, %v1077
    %1079 = vmatpush1.msra.mxu0 %v1078
    %v1080 = vand.u32 %v681, 4294901760
    %v1081 = vsub.f32 %v681, %v1080
    %1082 = vmatprep.subr.mxu0 %v1081
    %v1083 = vand.u32 %v680, 4294901760
    %v1084 = vsub.f32 %v680, %v1083
    %1085 = vmatpush1.msra.mxu0 %v1084
    %v1086 = vand.u32 %v683, 4294901760
    %v1087 = vsub.f32 %v683, %v1086
    %1088 = vmatprep.subr.mxu0 %v1087
    %v1089 = vand.u32 %v682, 4294901760
    %v1090 = vsub.f32 %v682, %v1089
    %1091 = vmatpush1.msra.mxu0 %v1090
    %v1092 = vand.u32 %v685, 4294901760
    %v1093 = vsub.f32 %v685, %v1092
    %1094 = vmatprep.subr.mxu0 %v1093
    %v1095 = vand.u32 %v684, 4294901760
    %v1096 = vsub.f32 %v684, %v1095
    %1097 = vmatpush1.msra.mxu0 %v1096
    %v1098 = vand.u32 %v687, 4294901760
    %v1099 = vsub.f32 %v687, %v1098
    %1100 = vmatprep.subr.mxu0 %v1099
    %v1101 = vand.u32 %v686, 4294901760
    %v1102 = vsub.f32 %v686, %v1101
    %1103 = vmatpush1.msra.mxu0 %v1102
    %v1104 = vand.u32 %v689, 4294901760
    %v1105 = vsub.f32 %v689, %v1104
    %1106 = vmatprep.subr.mxu0 %v1105
    %v1107 = vand.u32 %v688, 4294901760
    %v1108 = vsub.f32 %v688, %v1107
    %1109 = vmatpush1.msra.mxu0 %v1108
    %v1110 = vand.u32 %v691, 4294901760
    %v1111 = vsub.f32 %v691, %v1110
    %1112 = vmatprep.subr.mxu0 %v1111
    %v1113 = vand.u32 %v690, 4294901760
    %v1114 = vsub.f32 %v690, %v1113
    %1115 = vmatpush1.msra.mxu0 %v1114
    %v1116 = vand.u32 %v693, 4294901760
    %v1117 = vsub.f32 %v693, %v1116
    %1118 = vmatprep.subr.mxu0 %v1117
    %v1119 = vand.u32 %v692, 4294901760
    %v1120 = vsub.f32 %v692, %v1119
    %1121 = vmatpush1.msra.mxu0 %v1120
    %v1122 = vand.u32 %v695, 4294901760
    %v1123 = vsub.f32 %v695, %v1122
    %1124 = vmatprep.subr.mxu0 %v1123
    %v1125 = vand.u32 %v694, 4294901760
    %v1126 = vsub.f32 %v694, %v1125
    %1127 = vmatpush1.msra.mxu0 %v1126
    %v1128 = vand.u32 %v697, 4294901760
    %v1129 = vsub.f32 %v697, %v1128
    %1130 = vmatprep.subr.mxu0 %v1129
    %v1131 = vand.u32 %v696, 4294901760
    %v1132 = vsub.f32 %v696, %v1131
    %1133 = vmatpush1.msra.mxu0 %v1132
    %v1134 = vand.u32 %v699, 4294901760
    %v1135 = vsub.f32 %v699, %v1134
    %1136 = vmatprep.subr.mxu0 %v1135
    %v1137 = vand.u32 %v698, 4294901760
    %v1138 = vsub.f32 %v698, %v1137
    %1139 = vmatpush1.msra.mxu0 %v1138
    %v1140 = vand.u32 %v701, 4294901760
    %v1141 = vsub.f32 %v701, %v1140
    %1142 = vmatprep.subr.mxu0 %v1141
    %v1143 = vand.u32 %v700, 4294901760
    %v1144 = vsub.f32 %v700, %v1143
    %1145 = vmatpush1.msra.mxu0 %v1144
    %v1146 = vand.u32 %v703, 4294901760
    %v1147 = vsub.f32 %v703, %v1146
    %1148 = vmatprep.subr.mxu0 %v1147
    %v1149 = vand.u32 %v702, 4294901760
    %v1150 = vsub.f32 %v702, %v1149
    %1151 = vmatpush1.msra.mxu0 %v1150
    %1152 = vmatprep.subr.mxu0 0.0
    %1153 = vmatpush1.msra.mxu0 0.0
    %1154 = vmatprep.subr.mxu0 0.0
    %1155 = vmatpush1.msra.mxu0 0.0
    %1156 = vmatprep.subr.mxu0 0.0
    %1157 = vmatpush1.msra.mxu0 0.0
    %1158 = vmatprep.subr.mxu0 0.0
    %1159 = vmatpush1.msra.mxu0 0.0
    %1160 = vmatprep.subr.mxu0 0.0
    %1161 = vmatpush1.msra.mxu0 0.0
    %1162 = vmatprep.subr.mxu0 0.0
    %1163 = vmatpush1.msra.mxu0 0.0
    %1164 = vmatprep.subr.mxu0 0.0
    %1165 = vmatpush1.msra.mxu0 0.0
    %1166 = vmatprep.subr.mxu0 0.0
    %1167 = vmatpush1.msra.mxu0 0.0
    %1168 = vmatprep.subr.mxu0 0.0
    %1169 = vmatpush1.msra.mxu0 0.0
    %1170 = vmatprep.subr.mxu0 0.0
    %1171 = vmatpush1.msra.mxu0 0.0
    %1172 = vmatprep.subr.mxu0 0.0
    %1173 = vmatpush1.msra.mxu0 0.0
    %1174 = vmatprep.subr.mxu0 0.0
    %1175 = vmatpush1.msra.mxu0 0.0
    %1176 = vmatprep.subr.mxu0 0.0
    %1177 = vmatpush1.msra.mxu0 0.0
    %1178 = vmatprep.subr.mxu0 0.0
    %1179 = vmatpush1.msra.mxu0 0.0
    %1180 = vmatprep.subr.mxu0 0.0
    %1181 = vmatpush1.msra.mxu0 0.0
    %1182 = vmatprep.subr.mxu0 0.0
    %1183 = vmatpush1.msra.mxu0 0.0
    %1184 = vmatprep.mubr.f32.mxu0 0.0
    %v1185 = vand.u32 %v671, 4294901760
    %v1186 = vsub.f32 %v671, %v1185
    %1187 = vmatmul.mubr.f32.gmra.mrb[0].mxu0 %v1186
    %v1188 = vpop.f32.mrb[0].mxu0
    %v1189 = vadd.f32 %v1052, %v1188
    %v1190 = vpop.f32.mrb[0].mxu0
    %v1191 = vadd.f32 %v1054, %v1190
    %1192 = vdwg.mxu0
    %v1193 = vand.u32 %v673, 4294901760
    %1194 = vmatprep.subr.mxu0 %v1193
    %v1195 = vand.u32 %v672, 4294901760
    %1196 = vmatpush1.msra.mxu0 %v1195
    %v1197 = vand.u32 %v675, 4294901760
    %1198 = vmatprep.subr.mxu0 %v1197
    %v1199 = vand.u32 %v674, 4294901760
    %1200 = vmatpush1.msra.mxu0 %v1199
    %v1201 = vand.u32 %v677, 4294901760
    %1202 = vmatprep.subr.mxu0 %v1201
    %v1203 = vand.u32 %v676, 4294901760
    %1204 = vmatpush1.msra.mxu0 %v1203
    %v1205 = vand.u32 %v679, 4294901760
    %1206 = vmatprep.subr.mxu0 %v1205
    %v1207 = vand.u32 %v678, 4294901760
    %1208 = vmatpush1.msra.mxu0 %v1207
    %v1209 = vand.u32 %v681, 4294901760
    %1210 = vmatprep.subr.mxu0 %v1209
    %v1211 = vand.u32 %v680, 4294901760
    %1212 = vmatpush1.msra.mxu0 %v1211
    %v1213 = vand.u32 %v683, 4294901760
    %1214 = vmatprep.subr.mxu0 %v1213
    %v1215 = vand.u32 %v682, 4294901760
    %1216 = vmatpush1.msra.mxu0 %v1215
    %v1217 = vand.u32 %v685, 4294901760
    %1218 = vmatprep.subr.mxu0 %v1217
    %v1219 = vand.u32 %v684, 4294901760
    %1220 = vmatpush1.msra.mxu0 %v1219
    %v1221 = vand.u32 %v687, 4294901760
    %1222 = vmatprep.subr.mxu0 %v1221
    %v1223 = vand.u32 %v686, 4294901760
    %1224 = vmatpush1.msra.mxu0 %v1223
    %v1225 = vand.u32 %v689, 4294901760
    %1226 = vmatprep.subr.mxu0 %v1225
    %v1227 = vand.u32 %v688, 4294901760
    %1228 = vmatpush1.msra.mxu0 %v1227
    %v1229 = vand.u32 %v691, 4294901760
    %1230 = vmatprep.subr.mxu0 %v1229
    %v1231 = vand.u32 %v690, 4294901760
    %1232 = vmatpush1.msra.mxu0 %v1231
    %v1233 = vand.u32 %v693, 4294901760
    %1234 = vmatprep.subr.mxu0 %v1233
    %v1235 = vand.u32 %v692, 4294901760
    %1236 = vmatpush1.msra.mxu0 %v1235
    %v1237 = vand.u32 %v695, 4294901760
    %1238 = vmatprep.subr.mxu0 %v1237
    %v1239 = vand.u32 %v694, 4294901760
    %1240 = vmatpush1.msra.mxu0 %v1239
    %v1241 = vand.u32 %v697, 4294901760
    %1242 = vmatprep.subr.mxu0 %v1241
    %v1243 = vand.u32 %v696, 4294901760
    %1244 = vmatpush1.msra.mxu0 %v1243
    %v1245 = vand.u32 %v699, 4294901760
    %1246 = vmatprep.subr.mxu0 %v1245
    %v1247 = vand.u32 %v698, 4294901760
    %1248 = vmatpush1.msra.mxu0 %v1247
    %v1249 = vand.u32 %v701, 4294901760
    %1250 = vmatprep.subr.mxu0 %v1249
    %v1251 = vand.u32 %v700, 4294901760
    %1252 = vmatpush1.msra.mxu0 %v1251
    %v1253 = vand.u32 %v703, 4294901760
    %1254 = vmatprep.subr.mxu0 %v1253
    %v1255 = vand.u32 %v702, 4294901760
    %1256 = vmatpush1.msra.mxu0 %v1255
    %1257 = vmatprep.subr.mxu0 0.0
    %1258 = vmatpush1.msra.mxu0 0.0
    %1259 = vmatprep.subr.mxu0 0.0
    %1260 = vmatpush1.msra.mxu0 0.0
    %1261 = vmatprep.subr.mxu0 0.0
    %1262 = vmatpush1.msra.mxu0 0.0
    %1263 = vmatprep.subr.mxu0 0.0
    %1264 = vmatpush1.msra.mxu0 0.0
    %1265 = vmatprep.subr.mxu0 0.0
    %1266 = vmatpush1.msra.mxu0 0.0
    %1267 = vmatprep.subr.mxu0 0.0
    %1268 = vmatpush1.msra.mxu0 0.0
    %1269 = vmatprep.subr.mxu0 0.0
    %1270 = vmatpush1.msra.mxu0 0.0
    %1271 = vmatprep.subr.mxu0 0.0
    %1272 = vmatpush1.msra.mxu0 0.0
    %1273 = vmatprep.subr.mxu0 0.0
    %1274 = vmatpush1.msra.mxu0 0.0
    %1275 = vmatprep.subr.mxu0 0.0
    %1276 = vmatpush1.msra.mxu0 0.0
    %1277 = vmatprep.subr.mxu0 0.0
    %1278 = vmatpush1.msra.mxu0 0.0
    %1279 = vmatprep.subr.mxu0 0.0
    %1280 = vmatpush1.msra.mxu0 0.0
    %1281 = vmatprep.subr.mxu0 0.0
    %1282 = vmatpush1.msra.mxu0 0.0
    %1283 = vmatprep.subr.mxu0 0.0
    %1284 = vmatpush1.msra.mxu0 0.0
    %1285 = vmatprep.subr.mxu0 0.0
    %1286 = vmatpush1.msra.mxu0 0.0
    %1287 = vmatprep.subr.mxu0 0.0
    %1288 = vmatpush1.msra.mxu0 0.0
    %1289 = vmatprep.mubr.f32.mxu0 0.0
    %v1290 = vand.u32 %v671, 4294901760
    %v1291 = vsub.f32 %v671, %v1290
    %v1292 = vand.u32 %v1291, 4294901760
    %1293 = vmatmul.mubr.f32.gmra.mrb[0].mxu0 %v1292
    %v1294 = vpop.f32.mrb[0].mxu0
    %v1295 = vadd.f32 %v1189, %v1294
    %v1296 = vpop.f32.mrb[0].mxu0
    %v1297 = vadd.f32 %v1191, %v1296
    %1298 = vdwg.mxu0
    %v1299 = vand.u32 %v673, 4294901760
    %v1300 = vsub.f32 %v673, %v1299
    %v1301 = vand.u32 %v1300, 4294901760
    %1302 = vmatprep.subr.mxu0 %v1301
    %v1303 = vand.u32 %v672, 4294901760
    %v1304 = vsub.f32 %v672, %v1303
    %v1305 = vand.u32 %v1304, 4294901760
    %1306 = vmatpush1.msra.mxu0 %v1305
    %v1307 = vand.u32 %v675, 4294901760
    %v1308 = vsub.f32 %v675, %v1307
    %v1309 = vand.u32 %v1308, 4294901760
    %1310 = vmatprep.subr.mxu0 %v1309
    %v1311 = vand.u32 %v674, 4294901760
    %v1312 = vsub.f32 %v674, %v1311
    %v1313 = vand.u32 %v1312, 4294901760
    %1314 = vmatpush1.msra.mxu0 %v1313
    %v1315 = vand.u32 %v677, 4294901760
    %v1316 = vsub.f32 %v677, %v1315
    %v1317 = vand.u32 %v1316, 4294901760
    %1318 = vmatprep.subr.mxu0 %v1317
    %v1319 = vand.u32 %v676, 4294901760
    %v1320 = vsub.f32 %v676, %v1319
    %v1321 = vand.u32 %v1320, 4294901760
    %1322 = vmatpush1.msra.mxu0 %v1321
    %v1323 = vand.u32 %v679, 4294901760
    %v1324 = vsub.f32 %v679, %v1323
    %v1325 = vand.u32 %v1324, 4294901760
    %1326 = vmatprep.subr.mxu0 %v1325
    %v1327 = vand.u32 %v678, 4294901760
    %v1328 = vsub.f32 %v678, %v1327
    %v1329 = vand.u32 %v1328, 4294901760
    %1330 = vmatpush1.msra.mxu0 %v1329
    %v1331 = vand.u32 %v681, 4294901760
    %v1332 = vsub.f32 %v681, %v1331
    %v1333 = vand.u32 %v1332, 4294901760
    %1334 = vmatprep.subr.mxu0 %v1333
    %v1335 = vand.u32 %v680, 4294901760
    %v1336 = vsub.f32 %v680, %v1335
    %v1337 = vand.u32 %v1336, 4294901760
    %1338 = vmatpush1.msra.mxu0 %v1337
    %v1339 = vand.u32 %v683, 4294901760
    %v1340 = vsub.f32 %v683, %v1339
    %v1341 = vand.u32 %v1340, 4294901760
    %1342 = vmatprep.subr.mxu0 %v1341
    %v1343 = vand.u32 %v682, 4294901760
    %v1344 = vsub.f32 %v682, %v1343
    %v1345 = vand.u32 %v1344, 4294901760
    %1346 = vmatpush1.msra.mxu0 %v1345
    %v1347 = vand.u32 %v685, 4294901760
    %v1348 = vsub.f32 %v685, %v1347
    %v1349 = vand.u32 %v1348, 4294901760
    %1350 = vmatprep.subr.mxu0 %v1349
    %v1351 = vand.u32 %v684, 4294901760
    %v1352 = vsub.f32 %v684, %v1351
    %v1353 = vand.u32 %v1352, 4294901760
    %1354 = vmatpush1.msra.mxu0 %v1353
    %v1355 = vand.u32 %v687, 4294901760
    %v1356 = vsub.f32 %v687, %v1355
    %v1357 = vand.u32 %v1356, 4294901760
    %1358 = vmatprep.subr.mxu0 %v1357
    %v1359 = vand.u32 %v686, 4294901760
    %v1360 = vsub.f32 %v686, %v1359
    %v1361 = vand.u32 %v1360, 4294901760
    %1362 = vmatpush1.msra.mxu0 %v1361
    %v1363 = vand.u32 %v689, 4294901760
    %v1364 = vsub.f32 %v689, %v1363
    %v1365 = vand.u32 %v1364, 4294901760
    %1366 = vmatprep.subr.mxu0 %v1365
    %v1367 = vand.u32 %v688, 4294901760
    %v1368 = vsub.f32 %v688, %v1367
    %v1369 = vand.u32 %v1368, 4294901760
    %1370 = vmatpush1.msra.mxu0 %v1369
    %v1371 = vand.u32 %v691, 4294901760
    %v1372 = vsub.f32 %v691, %v1371
    %v1373 = vand.u32 %v1372, 4294901760
    %1374 = vmatprep.subr.mxu0 %v1373
    %v1375 = vand.u32 %v690, 4294901760
    %v1376 = vsub.f32 %v690, %v1375
    %v1377 = vand.u32 %v1376, 4294901760
    %1378 = vmatpush1.msra.mxu0 %v1377
    %v1379 = vand.u32 %v693, 4294901760
    %v1380 = vsub.f32 %v693, %v1379
    %v1381 = vand.u32 %v1380, 4294901760
    %1382 = vmatprep.subr.mxu0 %v1381
    %v1383 = vand.u32 %v692, 4294901760
    %v1384 = vsub.f32 %v692, %v1383
    %v1385 = vand.u32 %v1384, 4294901760
    %1386 = vmatpush1.msra.mxu0 %v1385
    %v1387 = vand.u32 %v695, 4294901760
    %v1388 = vsub.f32 %v695, %v1387
    %v1389 = vand.u32 %v1388, 4294901760
    %1390 = vmatprep.subr.mxu0 %v1389
    %v1391 = vand.u32 %v694, 4294901760
    %v1392 = vsub.f32 %v694, %v1391
    %v1393 = vand.u32 %v1392, 4294901760
    %1394 = vmatpush1.msra.mxu0 %v1393
    %v1395 = vand.u32 %v697, 4294901760
    %v1396 = vsub.f32 %v697, %v1395
    %v1397 = vand.u32 %v1396, 4294901760
    %1398 = vmatprep.subr.mxu0 %v1397
    %v1399 = vand.u32 %v696, 4294901760
    %v1400 = vsub.f32 %v696, %v1399
    %v1401 = vand.u32 %v1400, 4294901760
    %1402 = vmatpush1.msra.mxu0 %v1401
    %v1403 = vand.u32 %v699, 4294901760
    %v1404 = vsub.f32 %v699, %v1403
    %v1405 = vand.u32 %v1404, 4294901760
    %1406 = vmatprep.subr.mxu0 %v1405
    %v1407 = vand.u32 %v698, 4294901760
    %v1408 = vsub.f32 %v698, %v1407
    %v1409 = vand.u32 %v1408, 4294901760
    %1410 = vmatpush1.msra.mxu0 %v1409
    %v1411 = vand.u32 %v701, 4294901760
    %v1412 = vsub.f32 %v701, %v1411
    %v1413 = vand.u32 %v1412, 4294901760
    %1414 = vmatprep.subr.mxu0 %v1413
    %v1415 = vand.u32 %v700, 4294901760
    %v1416 = vsub.f32 %v700, %v1415
    %v1417 = vand.u32 %v1416, 4294901760
    %1418 = vmatpush1.msra.mxu0 %v1417
    %v1419 = vand.u32 %v703, 4294901760
    %v1420 = vsub.f32 %v703, %v1419
    %v1421 = vand.u32 %v1420, 4294901760
    %1422 = vmatprep.subr.mxu0 %v1421
    %v1423 = vand.u32 %v702, 4294901760
    %v1424 = vsub.f32 %v702, %v1423
    %v1425 = vand.u32 %v1424, 4294901760
    %1426 = vmatpush1.msra.mxu0 %v1425
    %1427 = vmatprep.subr.mxu0 0.0
    %1428 = vmatpush1.msra.mxu0 0.0
    %1429 = vmatprep.subr.mxu0 0.0
    %1430 = vmatpush1.msra.mxu0 0.0
    %1431 = vmatprep.subr.mxu0 0.0
    %1432 = vmatpush1.msra.mxu0 0.0
    %1433 = vmatprep.subr.mxu0 0.0
    %1434 = vmatpush1.msra.mxu0 0.0
    %1435 = vmatprep.subr.mxu0 0.0
    %1436 = vmatpush1.msra.mxu0 0.0
    %1437 = vmatprep.subr.mxu0 0.0
    %1438 = vmatpush1.msra.mxu0 0.0
    %1439 = vmatprep.subr.mxu0 0.0
    %1440 = vmatpush1.msra.mxu0 0.0
    %1441 = vmatprep.subr.mxu0 0.0
    %1442 = vmatpush1.msra.mxu0 0.0
    %1443 = vmatprep.subr.mxu0 0.0
    %1444 = vmatpush1.msra.mxu0 0.0
    %1445 = vmatprep.subr.mxu0 0.0
    %1446 = vmatpush1.msra.mxu0 0.0
    %1447 = vmatprep.subr.mxu0 0.0
    %1448 = vmatpush1.msra.mxu0 0.0
    %1449 = vmatprep.subr.mxu0 0.0
    %1450 = vmatpush1.msra.mxu0 0.0
    %1451 = vmatprep.subr.mxu0 0.0
    %1452 = vmatpush1.msra.mxu0 0.0
    %1453 = vmatprep.subr.mxu0 0.0
    %1454 = vmatpush1.msra.mxu0 0.0
    %1455 = vmatprep.subr.mxu0 0.0
    %1456 = vmatpush1.msra.mxu0 0.0
    %1457 = vmatprep.subr.mxu0 0.0
    %1458 = vmatpush1.msra.mxu0 0.0
    %1459 = vmatprep.mubr.f32.mxu0 0.0
    %v1460 = vand.u32 %v671, 4294901760
    %1461 = vmatmul.mubr.f32.gmra.mrb[0].mxu0 %v1460
    %v1462 = vpop.f32.mrb[0].mxu0
    %v1463 = vadd.f32 %v1295, %v1462
    %v1464 = vpop.f32.mrb[0].mxu0
    %v1465 = vadd.f32 %v1297, %v1464
    %1466 = vdwg.mxu0
    %v1467 = vand.u32 %v673, 4294901760
    %1468 = vmatprep.subr.mxu0 %v1467
    %v1469 = vand.u32 %v672, 4294901760
    %1470 = vmatpush1.msra.mxu0 %v1469
    %v1471 = vand.u32 %v675, 4294901760
    %1472 = vmatprep.subr.mxu0 %v1471
    %v1473 = vand.u32 %v674, 4294901760
    %1474 = vmatpush1.msra.mxu0 %v1473
    %v1475 = vand.u32 %v677, 4294901760
    %1476 = vmatprep.subr.mxu0 %v1475
    %v1477 = vand.u32 %v676, 4294901760
    %1478 = vmatpush1.msra.mxu0 %v1477
    %v1479 = vand.u32 %v679, 4294901760
    %1480 = vmatprep.subr.mxu0 %v1479
    %v1481 = vand.u32 %v678, 4294901760
    %1482 = vmatpush1.msra.mxu0 %v1481
    %v1483 = vand.u32 %v681, 4294901760
    %1484 = vmatprep.subr.mxu0 %v1483
    %v1485 = vand.u32 %v680, 4294901760
    %1486 = vmatpush1.msra.mxu0 %v1485
    %v1487 = vand.u32 %v683, 4294901760
    %1488 = vmatprep.subr.mxu0 %v1487
    %v1489 = vand.u32 %v682, 4294901760
    %1490 = vmatpush1.msra.mxu0 %v1489
    %v1491 = vand.u32 %v685, 4294901760
    %1492 = vmatprep.subr.mxu0 %v1491
    %v1493 = vand.u32 %v684, 4294901760
    %1494 = vmatpush1.msra.mxu0 %v1493
    %v1495 = vand.u32 %v687, 4294901760
    %1496 = vmatprep.subr.mxu0 %v1495
    %v1497 = vand.u32 %v686, 4294901760
    %1498 = vmatpush1.msra.mxu0 %v1497
    %v1499 = vand.u32 %v689, 4294901760
    %1500 = vmatprep.subr.mxu0 %v1499
    %v1501 = vand.u32 %v688, 4294901760
    %1502 = vmatpush1.msra.mxu0 %v1501
    %v1503 = vand.u32 %v691, 4294901760
    %1504 = vmatprep.subr.mxu0 %v1503
    %v1505 = vand.u32 %v690, 4294901760
    %1506 = vmatpush1.msra.mxu0 %v1505
    %v1507 = vand.u32 %v693, 4294901760
    %1508 = vmatprep.subr.mxu0 %v1507
    %v1509 = vand.u32 %v692, 4294901760
    %1510 = vmatpush1.msra.mxu0 %v1509
    %v1511 = vand.u32 %v695, 4294901760
    %1512 = vmatprep.subr.mxu0 %v1511
    %v1513 = vand.u32 %v694, 4294901760
    %1514 = vmatpush1.msra.mxu0 %v1513
    %v1515 = vand.u32 %v697, 4294901760
    %1516 = vmatprep.subr.mxu0 %v1515
    %v1517 = vand.u32 %v696, 4294901760
    %1518 = vmatpush1.msra.mxu0 %v1517
    %v1519 = vand.u32 %v699, 4294901760
    %1520 = vmatprep.subr.mxu0 %v1519
    %v1521 = vand.u32 %v698, 4294901760
    %1522 = vmatpush1.msra.mxu0 %v1521
    %v1523 = vand.u32 %v701, 4294901760
    %1524 = vmatprep.subr.mxu0 %v1523
    %v1525 = vand.u32 %v700, 4294901760
    %1526 = vmatpush1.msra.mxu0 %v1525
    %v1527 = vand.u32 %v703, 4294901760
    %1528 = vmatprep.subr.mxu0 %v1527
    %v1529 = vand.u32 %v702, 4294901760
    %1530 = vmatpush1.msra.mxu0 %v1529
    %1531 = vmatprep.subr.mxu0 0.0
    %1532 = vmatpush1.msra.mxu0 0.0
    %1533 = vmatprep.subr.mxu0 0.0
    %1534 = vmatpush1.msra.mxu0 0.0
    %1535 = vmatprep.subr.mxu0 0.0
    %1536 = vmatpush1.msra.mxu0 0.0
    %1537 = vmatprep.subr.mxu0 0.0
    %1538 = vmatpush1.msra.mxu0 0.0
    %1539 = vmatprep.subr.mxu0 0.0
    %1540 = vmatpush1.msra.mxu0 0.0
    %1541 = vmatprep.subr.mxu0 0.0
    %1542 = vmatpush1.msra.mxu0 0.0
    %1543 = vmatprep.subr.mxu0 0.0
    %1544 = vmatpush1.msra.mxu0 0.0
    %1545 = vmatprep.subr.mxu0 0.0
    %1546 = vmatpush1.msra.mxu0 0.0
    %1547 = vmatprep.subr.mxu0 0.0
    %1548 = vmatpush1.msra.mxu0 0.0
    %1549 = vmatprep.subr.mxu0 0.0
    %1550 = vmatpush1.msra.mxu0 0.0
    %1551 = vmatprep.subr.mxu0 0.0
    %1552 = vmatpush1.msra.mxu0 0.0
    %1553 = vmatprep.subr.mxu0 0.0
    %1554 = vmatpush1.msra.mxu0 0.0
    %1555 = vmatprep.subr.mxu0 0.0
    %1556 = vmatpush1.msra.mxu0 0.0
    %1557 = vmatprep.subr.mxu0 0.0
    %1558 = vmatpush1.msra.mxu0 0.0
    %1559 = vmatprep.subr.mxu0 0.0
    %1560 = vmatpush1.msra.mxu0 0.0
    %1561 = vmatprep.subr.mxu0 0.0
    %1562 = vmatpush1.msra.mxu0 0.0
    %1563 = vmatprep.mubr.f32.mxu0 0.0
    %v1564 = vand.u32 %v671, 4294901760
    %1565 = vmatmul.mubr.f32.gmra.mrb[0].mxu0 %v1564
    %v1566 = vpop.f32.mrb[0].mxu0
    %v1567 = vadd.f32 %v1463, %v1566
    %v1568 = vpop.f32.mrb[0].mxu0
    %v1569 = vadd.f32 %v1465, %v1568
    %1570 = vdwg.mxu0
    %v1571 = vsub.f32 0.0, %v1567
    %v1572 = vsub.f32 0.0, %v1569
    %v1573 = vmul.f32 %v1571, 1.442695
    %v1574 = vpow.pop %v1573
    %v1575 = vmul.f32 %v1572, 1.442695
    %v1576 = vpow.pop %v1575
    %v1577 = vadd.f32 %v1574, 1.0
    %v1578 = vadd.f32 %v1576, 1.0
    %v1579 = vrcp.pop %v1577
    %v1580 = vmul.f32 1.0, %v1579
    %v1581 = vrcp.pop %v1578
    %v1582 = vmul.f32 1.0, %v1581
    %v1583 = vld [vmem:[%s4] sm:$0xff]
    %v1584 = vld [vmem:[%s4 + $0x8] sm:$0xff]
    %v1585 = vld [vmem:[%s4 + $0x10] sm:$0xff]
    %v1586 = vld [vmem:[%s4 + $0x18] sm:$0xff]
    %v1587 = vld [vmem:[%s4 + $0x20] sm:$0xff]
    %v1588 = vld [vmem:[%s4 + $0x28] sm:$0xff]
    %v1589 = vld [vmem:[%s4 + $0x30] sm:$0xff]
    %v1590 = vld [vmem:[%s4 + $0x38] sm:$0xff]
    %v1591 = vld [vmem:[%s5] sm:$0xff]
    %v1592 = vld [vmem:[%s5 + $0x8] sm:$0xff]
    %v1593 = vld [vmem:[%s5 + $0x10] sm:$0xff]
    %v1594 = vld [vmem:[%s5 + $0x18] sm:$0xff]
    %v1595 = vld [vmem:[%s5 + $0x20] sm:$0xff]
    %v1596 = vld [vmem:[%s5 + $0x28] sm:$0xff]
    %v1597 = vld [vmem:[%s5 + $0x30] sm:$0xff]
    %v1598 = vld [vmem:[%s5 + $0x38] sm:$0xff]
    %v1599 = vld [vmem:[%s5 + $0x40] sm:$0xff]
    %v1600 = vld [vmem:[%s5 + $0x48] sm:$0xff]
    %v1601 = vld [vmem:[%s5 + $0x50] sm:$0xff]
    %v1602 = vld [vmem:[%s5 + $0x58] sm:$0xff]
    %v1603 = vld [vmem:[%s5 + $0x60] sm:$0xff]
    %v1604 = vld [vmem:[%s5 + $0x68] sm:$0xff]
    %v1605 = vld [vmem:[%s5 + $0x70] sm:$0xff]
    %v1606 = vld [vmem:[%s5 + $0x78] sm:$0xff]
    %v1607 = vld [vmem:[%s5 + $0x80] sm:$0xff]
    %v1608 = vld [vmem:[%s5 + $0x88] sm:$0xff]
    %v1609 = vld [vmem:[%s5 + $0x90] sm:$0xff]
    %v1610 = vld [vmem:[%s5 + $0x98] sm:$0xff]
    %v1611 = vld [vmem:[%s5 + $0xa0] sm:$0xff]
    %v1612 = vld [vmem:[%s5 + $0xa8] sm:$0xff]
    %v1613 = vld [vmem:[%s5 + $0xb0] sm:$0xff]
    %v1614 = vld [vmem:[%s5 + $0xb8] sm:$0xff]
    %v1615 = vld [vmem:[%s5 + $0xc0] sm:$0xff]
    %v1616 = vld [vmem:[%s5 + $0xc8] sm:$0xff]
    %v1617 = vld [vmem:[%s5 + $0xd0] sm:$0xff]
    %v1618 = vld [vmem:[%s5 + $0xd8] sm:$0xff]
    %v1619 = vld [vmem:[%s5 + $0xe0] sm:$0xff]
    %v1620 = vld [vmem:[%s5 + $0xe8] sm:$0xff]
    %v1621 = vld [vmem:[%s5 + $0xf0] sm:$0xff]
    %v1622 = vld [vmem:[%s5 + $0xf8] sm:$0xff]
    %1623 = vmatprep.subr.mxu0 0.0
    %v1624 = vand.u32 %v1591, 4294901760
    %1625 = vmatpush1.msra.mxu0 %v1624
    %1626 = vmatprep.subr.mxu0 0.0
    %v1627 = vand.u32 %v1592, 4294901760
    %1628 = vmatpush1.msra.mxu0 %v1627
    %1629 = vmatprep.subr.mxu0 0.0
    %v1630 = vand.u32 %v1593, 4294901760
    %1631 = vmatpush1.msra.mxu0 %v1630
    %1632 = vmatprep.subr.mxu0 0.0
    %v1633 = vand.u32 %v1594, 4294901760
    %1634 = vmatpush1.msra.mxu0 %v1633
    %1635 = vmatprep.subr.mxu0 0.0
    %v1636 = vand.u32 %v1595, 4294901760
    %1637 = vmatpush1.msra.mxu0 %v1636
    %1638 = vmatprep.subr.mxu0 0.0
    %v1639 = vand.u32 %v1596, 4294901760
    %1640 = vmatpush1.msra.mxu0 %v1639
    %1641 = vmatprep.subr.mxu0 0.0
    %v1642 = vand.u32 %v1597, 4294901760
    %1643 = vmatpush1.msra.mxu0 %v1642
    %1644 = vmatprep.subr.mxu0 0.0
    %v1645 = vand.u32 %v1598, 4294901760
    %1646 = vmatpush1.msra.mxu0 %v1645
    %1647 = vmatprep.subr.mxu0 0.0
    %v1648 = vand.u32 %v1599, 4294901760
    %1649 = vmatpush1.msra.mxu0 %v1648
    %1650 = vmatprep.subr.mxu0 0.0
    %v1651 = vand.u32 %v1600, 4294901760
    %1652 = vmatpush1.msra.mxu0 %v1651
    %1653 = vmatprep.subr.mxu0 0.0
    %v1654 = vand.u32 %v1601, 4294901760
    %1655 = vmatpush1.msra.mxu0 %v1654
    %1656 = vmatprep.subr.mxu0 0.0
    %v1657 = vand.u32 %v1602, 4294901760
    %1658 = vmatpush1.msra.mxu0 %v1657
    %1659 = vmatprep.subr.mxu0 0.0
    %v1660 = vand.u32 %v1603, 4294901760
    %1661 = vmatpush1.msra.mxu0 %v1660
    %1662 = vmatprep.subr.mxu0 0.0
    %v1663 = vand.u32 %v1604, 4294901760
    %1664 = vmatpush1.msra.mxu0 %v1663
    %1665 = vmatprep.subr.mxu0 0.0
    %v1666 = vand.u32 %v1605, 4294901760
    %1667 = vmatpush1.msra.mxu0 %v1666
    %1668 = vmatprep.subr.mxu0 0.0
    %v1669 = vand.u32 %v1606, 4294901760
    %1670 = vmatpush1.msra.mxu0 %v1669
    %1671 = vmatprep.subr.mxu0 0.0
    %v1672 = vand.u32 %v1607, 4294901760
    %1673 = vmatpush1.msra.mxu0 %v1672
    %1674 = vmatprep.subr.mxu0 0.0
    %v1675 = vand.u32 %v1608, 4294901760
    %1676 = vmatpush1.msra.mxu0 %v1675
    %1677 = vmatprep.subr.mxu0 0.0
    %v1678 = vand.u32 %v1609, 4294901760
    %1679 = vmatpush1.msra.mxu0 %v1678
    %1680 = vmatprep.subr.mxu0 0.0
    %v1681 = vand.u32 %v1610, 4294901760
    %1682 = vmatpush1.msra.mxu0 %v1681
    %1683 = vmatprep.subr.mxu0 0.0
    %v1684 = vand.u32 %v1611, 4294901760
    %1685 = vmatpush1.msra.mxu0 %v1684
    %1686 = vmatprep.subr.mxu0 0.0
    %v1687 = vand.u32 %v1612, 4294901760
    %1688 = vmatpush1.msra.mxu0 %v1687
    %1689 = vmatprep.subr.mxu0 0.0
    %v1690 = vand.u32 %v1613, 4294901760
    %1691 = vmatpush1.msra.mxu0 %v1690
    %1692 = vmatprep.subr.mxu0 0.0
    %v1693 = vand.u32 %v1614, 4294901760
    %1694 = vmatpush1.msra.mxu0 %v1693
    %1695 = vmatprep.subr.mxu0 0.0
    %v1696 = vand.u32 %v1615, 4294901760
    %1697 = vmatpush1.msra.mxu0 %v1696
    %1698 = vmatprep.subr.mxu0 0.0
    %v1699 = vand.u32 %v1616, 4294901760
    %1700 = vmatpush1.msra.mxu0 %v1699
    %1701 = vmatprep.subr.mxu0 0.0
    %v1702 = vand.u32 %v1617, 4294901760
    %1703 = vmatpush1.msra.mxu0 %v1702
    %1704 = vmatprep.subr.mxu0 0.0
    %v1705 = vand.u32 %v1618, 4294901760
    %1706 = vmatpush1.msra.mxu0 %v1705
    %1707 = vmatprep.subr.mxu0 0.0
    %v1708 = vand.u32 %v1619, 4294901760
    %1709 = vmatpush1.msra.mxu0 %v1708
    %1710 = vmatprep.subr.mxu0 0.0
    %v1711 = vand.u32 %v1620, 4294901760
    %1712 = vmatpush1.msra.mxu0 %v1711
    %1713 = vmatprep.subr.mxu0 0.0
    %v1714 = vand.u32 %v1621, 4294901760
    %1715 = vmatpush1.msra.mxu0 %v1714
    %1716 = vmatprep.subr.mxu0 0.0
    %v1717 = vand.u32 %v1622, 4294901760
    %1718 = vmatpush1.msra.mxu0 %v1717
    %v1719 = vand.u32 %v1582, 4294901760
    %v1720 = vsub.f32 %v1582, %v1719
    %v1721 = vand.u32 %v1720, 4294901760
    %v1722 = vsub.f32 %v1720, %v1721
    %v1723 = vand.u32 %v1722, 4294901760
    %1724 = vmatprep.mubr.f32.mxu0 %v1723
    %v1725 = vand.u32 %v1580, 4294901760
    %v1726 = vsub.f32 %v1580, %v1725
    %v1727 = vand.u32 %v1726, 4294901760
    %v1728 = vsub.f32 %v1726, %v1727
    %v1729 = vand.u32 %v1728, 4294901760
    %1730 = vmatmul.mubr.f32.gmra.mrb[0].mxu0 %v1729
    %v1731 = vpop.f32.mrb[0].mxu0
    %v1732 = vadd.f32 0.0, %v1731
    %v1733 = vpop.f32.mrb[0].mxu0
    %1734 = vdwg.mxu0
    %1735 = vmatprep.subr.mxu0 0.0
    %v1736 = vand.u32 %v1591, 4294901760
    %v1737 = vsub.f32 %v1591, %v1736
    %v1738 = vand.u32 %v1737, 4294901760
    %v1739 = vsub.f32 %v1737, %v1738
    %v1740 = vand.u32 %v1739, 4294901760
    %1741 = vmatpush1.msra.mxu0 %v1740
    %1742 = vmatprep.subr.mxu0 0.0
    %v1743 = vand.u32 %v1592, 4294901760
    %v1744 = vsub.f32 %v1592, %v1743
    %v1745 = vand.u32 %v1744, 4294901760
    %v1746 = vsub.f32 %v1744, %v1745
    %v1747 = vand.u32 %v1746, 4294901760
    %1748 = vmatpush1.msra.mxu0 %v1747
    %1749 = vmatprep.subr.mxu0 0.0
    %v1750 = vand.u32 %v1593, 4294901760
    %v1751 = vsub.f32 %v1593, %v1750
    %v1752 = vand.u32 %v1751, 4294901760
    %v1753 = vsub.f32 %v1751, %v1752
    %v1754 = vand.u32 %v1753, 4294901760
    %1755 = vmatpush1.msra.mxu0 %v1754
    %1756 = vmatprep.subr.mxu0 0.0
    %v1757 = vand.u32 %v1594, 4294901760
    %v1758 = vsub.f32 %v1594, %v1757
    %v1759 = vand.u32 %v1758, 4294901760
    %v1760 = vsub.f32 %v1758, %v1759
    %v1761 = vand.u32 %v1760, 4294901760
    %1762 = vmatpush1.msra.mxu0 %v1761
    %1763 = vmatprep.subr.mxu0 0.0
    %v1764 = vand.u32 %v1595, 4294901760
    %v1765 = vsub.f32 %v1595, %v1764
    %v1766 = vand.u32 %v1765, 4294901760
    %v1767 = vsub.f32 %v1765, %v1766
    %v1768 = vand.u32 %v1767, 4294901760
    %1769 = vmatpush1.msra.mxu0 %v1768
    %1770 = vmatprep.subr.mxu0 0.0
    %v1771 = vand.u32 %v1596, 4294901760
    %v1772 = vsub.f32 %v1596, %v1771
    %v1773 = vand.u32 %v1772, 4294901760
    %v1774 = vsub.f32 %v1772, %v1773
    %v1775 = vand.u32 %v1774, 4294901760
    %1776 = vmatpush1.msra.mxu0 %v1775
    %1777 = vmatprep.subr.mxu0 0.0
    %v1778 = vand.u32 %v1597, 4294901760
    %v1779 = vsub.f32 %v1597, %v1778
    %v1780 = vand.u32 %v1779, 4294901760
    %v1781 = vsub.f32 %v1779, %v1780
    %v1782 = vand.u32 %v1781, 4294901760
    %1783 = vmatpush1.msra.mxu0 %v1782
    %1784 = vmatprep.subr.mxu0 0.0
    %v1785 = vand.u32 %v1598, 4294901760
    %v1786 = vsub.f32 %v1598, %v1785
    %v1787 = vand.u32 %v1786, 4294901760
    %v1788 = vsub.f32 %v1786, %v1787
    %v1789 = vand.u32 %v1788, 4294901760
    %1790 = vmatpush1.msra.mxu0 %v1789
    %1791 = vmatprep.subr.mxu0 0.0
    %v1792 = vand.u32 %v1599, 4294901760
    %v1793 = vsub.f32 %v1599, %v1792
    %v1794 = vand.u32 %v1793, 4294901760
    %v1795 = vsub.f32 %v1793, %v1794
    %v1796 = vand.u32 %v1795, 4294901760
    %1797 = vmatpush1.msra.mxu0 %v1796
    %1798 = vmatprep.subr.mxu0 0.0
    %v1799 = vand.u32 %v1600, 4294901760
    %v1800 = vsub.f32 %v1600, %v1799
    %v1801 = vand.u32 %v1800, 4294901760
    %v1802 = vsub.f32 %v1800, %v1801
    %v1803 = vand.u32 %v1802, 4294901760
    %1804 = vmatpush1.msra.mxu0 %v1803
    %1805 = vmatprep.subr.mxu0 0.0
    %v1806 = vand.u32 %v1601, 4294901760
    %v1807 = vsub.f32 %v1601, %v1806
    %v1808 = vand.u32 %v1807, 4294901760
    %v1809 = vsub.f32 %v1807, %v1808
    %v1810 = vand.u32 %v1809, 4294901760
    %1811 = vmatpush1.msra.mxu0 %v1810
    %1812 = vmatprep.subr.mxu0 0.0
    %v1813 = vand.u32 %v1602, 4294901760
    %v1814 = vsub.f32 %v1602, %v1813
    %v1815 = vand.u32 %v1814, 4294901760
    %v1816 = vsub.f32 %v1814, %v1815
    %v1817 = vand.u32 %v1816, 4294901760
    %1818 = vmatpush1.msra.mxu0 %v1817
    %1819 = vmatprep.subr.mxu0 0.0
    %v1820 = vand.u32 %v1603, 4294901760
    %v1821 = vsub.f32 %v1603, %v1820
    %v1822 = vand.u32 %v1821, 4294901760
    %v1823 = vsub.f32 %v1821, %v1822
    %v1824 = vand.u32 %v1823, 4294901760
    %1825 = vmatpush1.msra.mxu0 %v1824
    %1826 = vmatprep.subr.mxu0 0.0
    %v1827 = vand.u32 %v1604, 4294901760
    %v1828 = vsub.f32 %v1604, %v1827
    %v1829 = vand.u32 %v1828, 4294901760
    %v1830 = vsub.f32 %v1828, %v1829
    %v1831 = vand.u32 %v1830, 4294901760
    %1832 = vmatpush1.msra.mxu0 %v1831
    %1833 = vmatprep.subr.mxu0 0.0
    %v1834 = vand.u32 %v1605, 4294901760
    %v1835 = vsub.f32 %v1605, %v1834
    %v1836 = vand.u32 %v1835, 4294901760
    %v1837 = vsub.f32 %v1835, %v1836
    %v1838 = vand.u32 %v1837, 4294901760
    %1839 = vmatpush1.msra.mxu0 %v1838
    %1840 = vmatprep.subr.mxu0 0.0
    %v1841 = vand.u32 %v1606, 4294901760
    %v1842 = vsub.f32 %v1606, %v1841
    %v1843 = vand.u32 %v1842, 4294901760
    %v1844 = vsub.f32 %v1842, %v1843
    %v1845 = vand.u32 %v1844, 4294901760
    %1846 = vmatpush1.msra.mxu0 %v1845
    %1847 = vmatprep.subr.mxu0 0.0
    %v1848 = vand.u32 %v1607, 4294901760
    %v1849 = vsub.f32 %v1607, %v1848
    %v1850 = vand.u32 %v1849, 4294901760
    %v1851 = vsub.f32 %v1849, %v1850
    %v1852 = vand.u32 %v1851, 4294901760
    %1853 = vmatpush1.msra.mxu0 %v1852
    %1854 = vmatprep.subr.mxu0 0.0
    %v1855 = vand.u32 %v1608, 4294901760
    %v1856 = vsub.f32 %v1608, %v1855
    %v1857 = vand.u32 %v1856, 4294901760
    %v1858 = vsub.f32 %v1856, %v1857
    %v1859 = vand.u32 %v1858, 4294901760
    %1860 = vmatpush1.msra.mxu0 %v1859
    %1861 = vmatprep.subr.mxu0 0.0
    %v1862 = vand.u32 %v1609, 4294901760
    %v1863 = vsub.f32 %v1609, %v1862
    %v1864 = vand.u32 %v1863, 4294901760
    %v1865 = vsub.f32 %v1863, %v1864
    %v1866 = vand.u32 %v1865, 4294901760
    %1867 = vmatpush1.msra.mxu0 %v1866
    %1868 = vmatprep.subr.mxu0 0.0
    %v1869 = vand.u32 %v1610, 4294901760
    %v1870 = vsub.f32 %v1610, %v1869
    %v1871 = vand.u32 %v1870, 4294901760
    %v1872 = vsub.f32 %v1870, %v1871
    %v1873 = vand.u32 %v1872, 4294901760
    %1874 = vmatpush1.msra.mxu0 %v1873
    %1875 = vmatprep.subr.mxu0 0.0
    %v1876 = vand.u32 %v1611, 4294901760
    %v1877 = vsub.f32 %v1611, %v1876
    %v1878 = vand.u32 %v1877, 4294901760
    %v1879 = vsub.f32 %v1877, %v1878
    %v1880 = vand.u32 %v1879, 4294901760
    %1881 = vmatpush1.msra.mxu0 %v1880
    %1882 = vmatprep.subr.mxu0 0.0
    %v1883 = vand.u32 %v1612, 4294901760
    %v1884 = vsub.f32 %v1612, %v1883
    %v1885 = vand.u32 %v1884, 4294901760
    %v1886 = vsub.f32 %v1884, %v1885
    %v1887 = vand.u32 %v1886, 4294901760
    %1888 = vmatpush1.msra.mxu0 %v1887
    %1889 = vmatprep.subr.mxu0 0.0
    %v1890 = vand.u32 %v1613, 4294901760
    %v1891 = vsub.f32 %v1613, %v1890
    %v1892 = vand.u32 %v1891, 4294901760
    %v1893 = vsub.f32 %v1891, %v1892
    %v1894 = vand.u32 %v1893, 4294901760
    %1895 = vmatpush1.msra.mxu0 %v1894
    %1896 = vmatprep.subr.mxu0 0.0
    %v1897 = vand.u32 %v1614, 4294901760
    %v1898 = vsub.f32 %v1614, %v1897
    %v1899 = vand.u32 %v1898, 4294901760
    %v1900 = vsub.f32 %v1898, %v1899
    %v1901 = vand.u32 %v1900, 4294901760
    %1902 = vmatpush1.msra.mxu0 %v1901
    %1903 = vmatprep.subr.mxu0 0.0
    %v1904 = vand.u32 %v1615, 4294901760
    %v1905 = vsub.f32 %v1615, %v1904
    %v1906 = vand.u32 %v1905, 4294901760
    %v1907 = vsub.f32 %v1905, %v1906
    %v1908 = vand.u32 %v1907, 4294901760
    %1909 = vmatpush1.msra.mxu0 %v1908
    %1910 = vmatprep.subr.mxu0 0.0
    %v1911 = vand.u32 %v1616, 4294901760
    %v1912 = vsub.f32 %v1616, %v1911
    %v1913 = vand.u32 %v1912, 4294901760
    %v1914 = vsub.f32 %v1912, %v1913
    %v1915 = vand.u32 %v1914, 4294901760
    %1916 = vmatpush1.msra.mxu0 %v1915
    %1917 = vmatprep.subr.mxu0 0.0
    %v1918 = vand.u32 %v1617, 4294901760
    %v1919 = vsub.f32 %v1617, %v1918
    %v1920 = vand.u32 %v1919, 4294901760
    %v1921 = vsub.f32 %v1919, %v1920
    %v1922 = vand.u32 %v1921, 4294901760
    %1923 = vmatpush1.msra.mxu0 %v1922
    %1924 = vmatprep.subr.mxu0 0.0
    %v1925 = vand.u32 %v1618, 4294901760
    %v1926 = vsub.f32 %v1618, %v1925
    %v1927 = vand.u32 %v1926, 4294901760
    %v1928 = vsub.f32 %v1926, %v1927
    %v1929 = vand.u32 %v1928, 4294901760
    %1930 = vmatpush1.msra.mxu0 %v1929
    %1931 = vmatprep.subr.mxu0 0.0
    %v1932 = vand.u32 %v1619, 4294901760
    %v1933 = vsub.f32 %v1619, %v1932
    %v1934 = vand.u32 %v1933, 4294901760
    %v1935 = vsub.f32 %v1933, %v1934
    %v1936 = vand.u32 %v1935, 4294901760
    %1937 = vmatpush1.msra.mxu0 %v1936
    %1938 = vmatprep.subr.mxu0 0.0
    %v1939 = vand.u32 %v1620, 4294901760
    %v1940 = vsub.f32 %v1620, %v1939
    %v1941 = vand.u32 %v1940, 4294901760
    %v1942 = vsub.f32 %v1940, %v1941
    %v1943 = vand.u32 %v1942, 4294901760
    %1944 = vmatpush1.msra.mxu0 %v1943
    %1945 = vmatprep.subr.mxu0 0.0
    %v1946 = vand.u32 %v1621, 4294901760
    %v1947 = vsub.f32 %v1621, %v1946
    %v1948 = vand.u32 %v1947, 4294901760
    %v1949 = vsub.f32 %v1947, %v1948
    %v1950 = vand.u32 %v1949, 4294901760
    %1951 = vmatpush1.msra.mxu0 %v1950
    %1952 = vmatprep.subr.mxu0 0.0
    %v1953 = vand.u32 %v1622, 4294901760
    %v1954 = vsub.f32 %v1622, %v1953
    %v1955 = vand.u32 %v1954, 4294901760
    %v1956 = vsub.f32 %v1954, %v1955
    %v1957 = vand.u32 %v1956, 4294901760
    %1958 = vmatpush1.msra.mxu0 %v1957
    %v1959 = vand.u32 %v1582, 4294901760
    %1960 = vmatprep.mubr.f32.mxu0 %v1959
    %v1961 = vand.u32 %v1580, 4294901760
    %1962 = vmatmul.mubr.f32.gmra.mrb[0].mxu0 %v1961
    %v1963 = vpop.f32.mrb[0].mxu0
    %v1964 = vadd.f32 %v1732, %v1963
    %v1965 = vpop.f32.mrb[0].mxu0
    %1966 = vdwg.mxu0
    %1967 = vmatprep.subr.mxu0 0.0
    %v1968 = vand.u32 %v1591, 4294901760
    %v1969 = vsub.f32 %v1591, %v1968
    %1970 = vmatpush1.msra.mxu0 %v1969
    %1971 = vmatprep.subr.mxu0 0.0
    %v1972 = vand.u32 %v1592, 4294901760
    %v1973 = vsub.f32 %v1592, %v1972
    %1974 = vmatpush1.msra.mxu0 %v1973
    %1975 = vmatprep.subr.mxu0 0.0
    %v1976 = vand.u32 %v1593, 4294901760
    %v1977 = vsub.f32 %v1593, %v1976
    %1978 = vmatpush1.msra.mxu0 %v1977
    %1979 = vmatprep.subr.mxu0 0.0
    %v1980 = vand.u32 %v1594, 4294901760
    %v1981 = vsub.f32 %v1594, %v1980
    %1982 = vmatpush1.msra.mxu0 %v1981
    %1983 = vmatprep.subr.mxu0 0.0
    %v1984 = vand.u32 %v1595, 4294901760
    %v1985 = vsub.f32 %v1595, %v1984
    %1986 = vmatpush1.msra.mxu0 %v1985
    %1987 = vmatprep.subr.mxu0 0.0
    %v1988 = vand.u32 %v1596, 4294901760
    %v1989 = vsub.f32 %v1596, %v1988
    %1990 = vmatpush1.msra.mxu0 %v1989
    %1991 = vmatprep.subr.mxu0 0.0
    %v1992 = vand.u32 %v1597, 4294901760
    %v1993 = vsub.f32 %v1597, %v1992
    %1994 = vmatpush1.msra.mxu0 %v1993
    %1995 = vmatprep.subr.mxu0 0.0
    %v1996 = vand.u32 %v1598, 4294901760
    %v1997 = vsub.f32 %v1598, %v1996
    %1998 = vmatpush1.msra.mxu0 %v1997
    %1999 = vmatprep.subr.mxu0 0.0
    %v2000 = vand.u32 %v1599, 4294901760
    %v2001 = vsub.f32 %v1599, %v2000
    %2002 = vmatpush1.msra.mxu0 %v2001
    %2003 = vmatprep.subr.mxu0 0.0
    %v2004 = vand.u32 %v1600, 4294901760
    %v2005 = vsub.f32 %v1600, %v2004
    %2006 = vmatpush1.msra.mxu0 %v2005
    %2007 = vmatprep.subr.mxu0 0.0
    %v2008 = vand.u32 %v1601, 4294901760
    %v2009 = vsub.f32 %v1601, %v2008
    %2010 = vmatpush1.msra.mxu0 %v2009
    %2011 = vmatprep.subr.mxu0 0.0
    %v2012 = vand.u32 %v1602, 4294901760
    %v2013 = vsub.f32 %v1602, %v2012
    %2014 = vmatpush1.msra.mxu0 %v2013
    %2015 = vmatprep.subr.mxu0 0.0
    %v2016 = vand.u32 %v1603, 4294901760
    %v2017 = vsub.f32 %v1603, %v2016
    %2018 = vmatpush1.msra.mxu0 %v2017
    %2019 = vmatprep.subr.mxu0 0.0
    %v2020 = vand.u32 %v1604, 4294901760
    %v2021 = vsub.f32 %v1604, %v2020
    %2022 = vmatpush1.msra.mxu0 %v2021
    %2023 = vmatprep.subr.mxu0 0.0
    %v2024 = vand.u32 %v1605, 4294901760
    %v2025 = vsub.f32 %v1605, %v2024
    %2026 = vmatpush1.msra.mxu0 %v2025
    %2027 = vmatprep.subr.mxu0 0.0
    %v2028 = vand.u32 %v1606, 4294901760
    %v2029 = vsub.f32 %v1606, %v2028
    %2030 = vmatpush1.msra.mxu0 %v2029
    %2031 = vmatprep.subr.mxu0 0.0
    %v2032 = vand.u32 %v1607, 4294901760
    %v2033 = vsub.f32 %v1607, %v2032
    %2034 = vmatpush1.msra.mxu0 %v2033
    %2035 = vmatprep.subr.mxu0 0.0
    %v2036 = vand.u32 %v1608, 4294901760
    %v2037 = vsub.f32 %v1608, %v2036
    %2038 = vmatpush1.msra.mxu0 %v2037
    %2039 = vmatprep.subr.mxu0 0.0
    %v2040 = vand.u32 %v1609, 4294901760
    %v2041 = vsub.f32 %v1609, %v2040
    %2042 = vmatpush1.msra.mxu0 %v2041
    %2043 = vmatprep.subr.mxu0 0.0
    %v2044 = vand.u32 %v1610, 4294901760
    %v2045 = vsub.f32 %v1610, %v2044
    %2046 = vmatpush1.msra.mxu0 %v2045
    %2047 = vmatprep.subr.mxu0 0.0
    %v2048 = vand.u32 %v1611, 4294901760
    %v2049 = vsub.f32 %v1611, %v2048
    %2050 = vmatpush1.msra.mxu0 %v2049
    %2051 = vmatprep.subr.mxu0 0.0
    %v2052 = vand.u32 %v1612, 4294901760
    %v2053 = vsub.f32 %v1612, %v2052
    %2054 = vmatpush1.msra.mxu0 %v2053
    %2055 = vmatprep.subr.mxu0 0.0
    %v2056 = vand.u32 %v1613, 4294901760
    %v2057 = vsub.f32 %v1613, %v2056
    %2058 = vmatpush1.msra.mxu0 %v2057
    %2059 = vmatprep.subr.mxu0 0.0
    %v2060 = vand.u32 %v1614, 4294901760
    %v2061 = vsub.f32 %v1614, %v2060
    %2062 = vmatpush1.msra.mxu0 %v2061
    %2063 = vmatprep.subr.mxu0 0.0
    %v2064 = vand.u32 %v1615, 4294901760
    %v2065 = vsub.f32 %v1615, %v2064
    %2066 = vmatpush1.msra.mxu0 %v2065
    %2067 = vmatprep.subr.mxu0 0.0
    %v2068 = vand.u32 %v1616, 4294901760
    %v2069 = vsub.f32 %v1616, %v2068
    %2070 = vmatpush1.msra.mxu0 %v2069
    %2071 = vmatprep.subr.mxu0 0.0
    %v2072 = vand.u32 %v1617, 4294901760
    %v2073 = vsub.f32 %v1617, %v2072
    %2074 = vmatpush1.msra.mxu0 %v2073
    %2075 = vmatprep.subr.mxu0 0.0
    %v2076 = vand.u32 %v1618, 4294901760
    %v2077 = vsub.f32 %v1618, %v2076
    %2078 = vmatpush1.msra.mxu0 %v2077
    %2079 = vmatprep.subr.mxu0 0.0
    %v2080 = vand.u32 %v1619, 4294901760
    %v2081 = vsub.f32 %v1619, %v2080
    %2082 = vmatpush1.msra.mxu0 %v2081
    %2083 = vmatprep.subr.mxu0 0.0
    %v2084 = vand.u32 %v1620, 4294901760
    %v2085 = vsub.f32 %v1620, %v2084
    %2086 = vmatpush1.msra.mxu0 %v2085
    %2087 = vmatprep.subr.mxu0 0.0
    %v2088 = vand.u32 %v1621, 4294901760
    %v2089 = vsub.f32 %v1621, %v2088
    %2090 = vmatpush1.msra.mxu0 %v2089
    %2091 = vmatprep.subr.mxu0 0.0
    %v2092 = vand.u32 %v1622, 4294901760
    %v2093 = vsub.f32 %v1622, %v2092
    %2094 = vmatpush1.msra.mxu0 %v2093
    %v2095 = vand.u32 %v1582, 4294901760
    %v2096 = vsub.f32 %v1582, %v2095
    %2097 = vmatprep.mubr.f32.mxu0 %v2096
    %v2098 = vand.u32 %v1580, 4294901760
    %v2099 = vsub.f32 %v1580, %v2098
    %2100 = vmatmul.mubr.f32.gmra.mrb[0].mxu0 %v2099
    %v2101 = vpop.f32.mrb[0].mxu0
    %v2102 = vadd.f32 %v1964, %v2101
    %v2103 = vpop.f32.mrb[0].mxu0
    %2104 = vdwg.mxu0
    %2105 = vmatprep.subr.mxu0 0.0
    %v2106 = vand.u32 %v1591, 4294901760
    %2107 = vmatpush1.msra.mxu0 %v2106
    %2108 = vmatprep.subr.mxu0 0.0
    %v2109 = vand.u32 %v1592, 4294901760
    %2110 = vmatpush1.msra.mxu0 %v2109
    %2111 = vmatprep.subr.mxu0 0.0
    %v2112 = vand.u32 %v1593, 4294901760
    %2113 = vmatpush1.msra.mxu0 %v2112
    %2114 = vmatprep.subr.mxu0 0.0
    %v2115 = vand.u32 %v1594, 4294901760
    %2116 = vmatpush1.msra.mxu0 %v2115
    %2117 = vmatprep.subr.mxu0 0.0
    %v2118 = vand.u32 %v1595, 4294901760
    %2119 = vmatpush1.msra.mxu0 %v2118
    %2120 = vmatprep.subr.mxu0 0.0
    %v2121 = vand.u32 %v1596, 4294901760
    %2122 = vmatpush1.msra.mxu0 %v2121
    %2123 = vmatprep.subr.mxu0 0.0
    %v2124 = vand.u32 %v1597, 4294901760
    %2125 = vmatpush1.msra.mxu0 %v2124
    %2126 = vmatprep.subr.mxu0 0.0
    %v2127 = vand.u32 %v1598, 4294901760
    %2128 = vmatpush1.msra.mxu0 %v2127
    %2129 = vmatprep.subr.mxu0 0.0
    %v2130 = vand.u32 %v1599, 4294901760
    %2131 = vmatpush1.msra.mxu0 %v2130
    %2132 = vmatprep.subr.mxu0 0.0
    %v2133 = vand.u32 %v1600, 4294901760
    %2134 = vmatpush1.msra.mxu0 %v2133
    %2135 = vmatprep.subr.mxu0 0.0
    %v2136 = vand.u32 %v1601, 4294901760
    %2137 = vmatpush1.msra.mxu0 %v2136
    %2138 = vmatprep.subr.mxu0 0.0
    %v2139 = vand.u32 %v1602, 4294901760
    %2140 = vmatpush1.msra.mxu0 %v2139
    %2141 = vmatprep.subr.mxu0 0.0
    %v2142 = vand.u32 %v1603, 4294901760
    %2143 = vmatpush1.msra.mxu0 %v2142
    %2144 = vmatprep.subr.mxu0 0.0
    %v2145 = vand.u32 %v1604, 4294901760
    %2146 = vmatpush1.msra.mxu0 %v2145
    %2147 = vmatprep.subr.mxu0 0.0
    %v2148 = vand.u32 %v1605, 4294901760
    %2149 = vmatpush1.msra.mxu0 %v2148
    %2150 = vmatprep.subr.mxu0 0.0
    %v2151 = vand.u32 %v1606, 4294901760
    %2152 = vmatpush1.msra.mxu0 %v2151
    %2153 = vmatprep.subr.mxu0 0.0
    %v2154 = vand.u32 %v1607, 4294901760
    %2155 = vmatpush1.msra.mxu0 %v2154
    %2156 = vmatprep.subr.mxu0 0.0
    %v2157 = vand.u32 %v1608, 4294901760
    %2158 = vmatpush1.msra.mxu0 %v2157
    %2159 = vmatprep.subr.mxu0 0.0
    %v2160 = vand.u32 %v1609, 4294901760
    %2161 = vmatpush1.msra.mxu0 %v2160
    %2162 = vmatprep.subr.mxu0 0.0
    %v2163 = vand.u32 %v1610, 4294901760
    %2164 = vmatpush1.msra.mxu0 %v2163
    %2165 = vmatprep.subr.mxu0 0.0
    %v2166 = vand.u32 %v1611, 4294901760
    %2167 = vmatpush1.msra.mxu0 %v2166
    %2168 = vmatprep.subr.mxu0 0.0
    %v2169 = vand.u32 %v1612, 4294901760
    %2170 = vmatpush1.msra.mxu0 %v2169
    %2171 = vmatprep.subr.mxu0 0.0
    %v2172 = vand.u32 %v1613, 4294901760
    %2173 = vmatpush1.msra.mxu0 %v2172
    %2174 = vmatprep.subr.mxu0 0.0
    %v2175 = vand.u32 %v1614, 4294901760
    %2176 = vmatpush1.msra.mxu0 %v2175
    %2177 = vmatprep.subr.mxu0 0.0
    %v2178 = vand.u32 %v1615, 4294901760
    %2179 = vmatpush1.msra.mxu0 %v2178
    %2180 = vmatprep.subr.mxu0 0.0
    %v2181 = vand.u32 %v1616, 4294901760
    %2182 = vmatpush1.msra.mxu0 %v2181
    %2183 = vmatprep.subr.mxu0 0.0
    %v2184 = vand.u32 %v1617, 4294901760
    %2185 = vmatpush1.msra.mxu0 %v2184
    %2186 = vmatprep.subr.mxu0 0.0
    %v2187 = vand.u32 %v1618, 4294901760
    %2188 = vmatpush1.msra.mxu0 %v2187
    %2189 = vmatprep.subr.mxu0 0.0
    %v2190 = vand.u32 %v1619, 4294901760
    %2191 = vmatpush1.msra.mxu0 %v2190
    %2192 = vmatprep.subr.mxu0 0.0
    %v2193 = vand.u32 %v1620, 4294901760
    %2194 = vmatpush1.msra.mxu0 %v2193
    %2195 = vmatprep.subr.mxu0 0.0
    %v2196 = vand.u32 %v1621, 4294901760
    %2197 = vmatpush1.msra.mxu0 %v2196
    %2198 = vmatprep.subr.mxu0 0.0
    %v2199 = vand.u32 %v1622, 4294901760
    %2200 = vmatpush1.msra.mxu0 %v2199
    %v2201 = vand.u32 %v1582, 4294901760
    %v2202 = vsub.f32 %v1582, %v2201
    %v2203 = vand.u32 %v2202, 4294901760
    %2204 = vmatprep.mubr.f32.mxu0 %v2203
    %v2205 = vand.u32 %v1580, 4294901760
    %v2206 = vsub.f32 %v1580, %v2205
    %v2207 = vand.u32 %v2206, 4294901760
    %2208 = vmatmul.mubr.f32.gmra.mrb[0].mxu0 %v2207
    %v2209 = vpop.f32.mrb[0].mxu0
    %v2210 = vadd.f32 %v2102, %v2209
    %v2211 = vpop.f32.mrb[0].mxu0
    %2212 = vdwg.mxu0
    %2213 = vmatprep.subr.mxu0 0.0
    %v2214 = vand.u32 %v1591, 4294901760
    %v2215 = vsub.f32 %v1591, %v2214
    %v2216 = vand.u32 %v2215, 4294901760
    %2217 = vmatpush1.msra.mxu0 %v2216
    %2218 = vmatprep.subr.mxu0 0.0
    %v2219 = vand.u32 %v1592, 4294901760
    %v2220 = vsub.f32 %v1592, %v2219
    %v2221 = vand.u32 %v2220, 4294901760
    %2222 = vmatpush1.msra.mxu0 %v2221
    %2223 = vmatprep.subr.mxu0 0.0
    %v2224 = vand.u32 %v1593, 4294901760
    %v2225 = vsub.f32 %v1593, %v2224
    %v2226 = vand.u32 %v2225, 4294901760
    %2227 = vmatpush1.msra.mxu0 %v2226
    %2228 = vmatprep.subr.mxu0 0.0
    %v2229 = vand.u32 %v1594, 4294901760
    %v2230 = vsub.f32 %v1594, %v2229
    %v2231 = vand.u32 %v2230, 4294901760
    %2232 = vmatpush1.msra.mxu0 %v2231
    %2233 = vmatprep.subr.mxu0 0.0
    %v2234 = vand.u32 %v1595, 4294901760
    %v2235 = vsub.f32 %v1595, %v2234
    %v2236 = vand.u32 %v2235, 4294901760
    %2237 = vmatpush1.msra.mxu0 %v2236
    %2238 = vmatprep.subr.mxu0 0.0
    %v2239 = vand.u32 %v1596, 4294901760
    %v2240 = vsub.f32 %v1596, %v2239
    %v2241 = vand.u32 %v2240, 4294901760
    %2242 = vmatpush1.msra.mxu0 %v2241
    %2243 = vmatprep.subr.mxu0 0.0
    %v2244 = vand.u32 %v1597, 4294901760
    %v2245 = vsub.f32 %v1597, %v2244
    %v2246 = vand.u32 %v2245, 4294901760
    %2247 = vmatpush1.msra.mxu0 %v2246
    %2248 = vmatprep.subr.mxu0 0.0
    %v2249 = vand.u32 %v1598, 4294901760
    %v2250 = vsub.f32 %v1598, %v2249
    %v2251 = vand.u32 %v2250, 4294901760
    %2252 = vmatpush1.msra.mxu0 %v2251
    %2253 = vmatprep.subr.mxu0 0.0
    %v2254 = vand.u32 %v1599, 4294901760
    %v2255 = vsub.f32 %v1599, %v2254
    %v2256 = vand.u32 %v2255, 4294901760
    %2257 = vmatpush1.msra.mxu0 %v2256
    %2258 = vmatprep.subr.mxu0 0.0
    %v2259 = vand.u32 %v1600, 4294901760
    %v2260 = vsub.f32 %v1600, %v2259
    %v2261 = vand.u32 %v2260, 4294901760
    %2262 = vmatpush1.msra.mxu0 %v2261
    %2263 = vmatprep.subr.mxu0 0.0
    %v2264 = vand.u32 %v1601, 4294901760
    %v2265 = vsub.f32 %v1601, %v2264
    %v2266 = vand.u32 %v2265, 4294901760
    %2267 = vmatpush1.msra.mxu0 %v2266
    %2268 = vmatprep.subr.mxu0 0.0
    %v2269 = vand.u32 %v1602, 4294901760
    %v2270 = vsub.f32 %v1602, %v2269
    %v2271 = vand.u32 %v2270, 4294901760
    %2272 = vmatpush1.msra.mxu0 %v2271
    %2273 = vmatprep.subr.mxu0 0.0
    %v2274 = vand.u32 %v1603, 4294901760
    %v2275 = vsub.f32 %v1603, %v2274
    %v2276 = vand.u32 %v2275, 4294901760
    %2277 = vmatpush1.msra.mxu0 %v2276
    %2278 = vmatprep.subr.mxu0 0.0
    %v2279 = vand.u32 %v1604, 4294901760
    %v2280 = vsub.f32 %v1604, %v2279
    %v2281 = vand.u32 %v2280, 4294901760
    %2282 = vmatpush1.msra.mxu0 %v2281
    %2283 = vmatprep.subr.mxu0 0.0
    %v2284 = vand.u32 %v1605, 4294901760
    %v2285 = vsub.f32 %v1605, %v2284
    %v2286 = vand.u32 %v2285, 4294901760
    %2287 = vmatpush1.msra.mxu0 %v2286
    %2288 = vmatprep.subr.mxu0 0.0
    %v2289 = vand.u32 %v1606, 4294901760
    %v2290 = vsub.f32 %v1606, %v2289
    %v2291 = vand.u32 %v2290, 4294901760
    %2292 = vmatpush1.msra.mxu0 %v2291
    %2293 = vmatprep.subr.mxu0 0.0
    %v2294 = vand.u32 %v1607, 4294901760
    %v2295 = vsub.f32 %v1607, %v2294
    %v2296 = vand.u32 %v2295, 4294901760
    %2297 = vmatpush1.msra.mxu0 %v2296
    %2298 = vmatprep.subr.mxu0 0.0
    %v2299 = vand.u32 %v1608, 4294901760
    %v2300 = vsub.f32 %v1608, %v2299
    %v2301 = vand.u32 %v2300, 4294901760
    %2302 = vmatpush1.msra.mxu0 %v2301
    %2303 = vmatprep.subr.mxu0 0.0
    %v2304 = vand.u32 %v1609, 4294901760
    %v2305 = vsub.f32 %v1609, %v2304
    %v2306 = vand.u32 %v2305, 4294901760
    %2307 = vmatpush1.msra.mxu0 %v2306
    %2308 = vmatprep.subr.mxu0 0.0
    %v2309 = vand.u32 %v1610, 4294901760
    %v2310 = vsub.f32 %v1610, %v2309
    %v2311 = vand.u32 %v2310, 4294901760
    %2312 = vmatpush1.msra.mxu0 %v2311
    %2313 = vmatprep.subr.mxu0 0.0
    %v2314 = vand.u32 %v1611, 4294901760
    %v2315 = vsub.f32 %v1611, %v2314
    %v2316 = vand.u32 %v2315, 4294901760
    %2317 = vmatpush1.msra.mxu0 %v2316
    %2318 = vmatprep.subr.mxu0 0.0
    %v2319 = vand.u32 %v1612, 4294901760
    %v2320 = vsub.f32 %v1612, %v2319
    %v2321 = vand.u32 %v2320, 4294901760
    %2322 = vmatpush1.msra.mxu0 %v2321
    %2323 = vmatprep.subr.mxu0 0.0
    %v2324 = vand.u32 %v1613, 4294901760
    %v2325 = vsub.f32 %v1613, %v2324
    %v2326 = vand.u32 %v2325, 4294901760
    %2327 = vmatpush1.msra.mxu0 %v2326
    %2328 = vmatprep.subr.mxu0 0.0
    %v2329 = vand.u32 %v1614, 4294901760
    %v2330 = vsub.f32 %v1614, %v2329
    %v2331 = vand.u32 %v2330, 4294901760
    %2332 = vmatpush1.msra.mxu0 %v2331
    %2333 = vmatprep.subr.mxu0 0.0
    %v2334 = vand.u32 %v1615, 4294901760
    %v2335 = vsub.f32 %v1615, %v2334
    %v2336 = vand.u32 %v2335, 4294901760
    %2337 = vmatpush1.msra.mxu0 %v2336
    %2338 = vmatprep.subr.mxu0 0.0
    %v2339 = vand.u32 %v1616, 4294901760
    %v2340 = vsub.f32 %v1616, %v2339
    %v2341 = vand.u32 %v2340, 4294901760
    %2342 = vmatpush1.msra.mxu0 %v2341
    %2343 = vmatprep.subr.mxu0 0.0
    %v2344 = vand.u32 %v1617, 4294901760
    %v2345 = vsub.f32 %v1617, %v2344
    %v2346 = vand.u32 %v2345, 4294901760
    %2347 = vmatpush1.msra.mxu0 %v2346
    %2348 = vmatprep.subr.mxu0 0.0
    %v2349 = vand.u32 %v1618, 4294901760
    %v2350 = vsub.f32 %v1618, %v2349
    %v2351 = vand.u32 %v2350, 4294901760
    %2352 = vmatpush1.msra.mxu0 %v2351
    %2353 = vmatprep.subr.mxu0 0.0
    %v2354 = vand.u32 %v1619, 4294901760
    %v2355 = vsub.f32 %v1619, %v2354
    %v2356 = vand.u32 %v2355, 4294901760
    %2357 = vmatpush1.msra.mxu0 %v2356
    %2358 = vmatprep.subr.mxu0 0.0
    %v2359 = vand.u32 %v1620, 4294901760
    %v2360 = vsub.f32 %v1620, %v2359
    %v2361 = vand.u32 %v2360, 4294901760
    %2362 = vmatpush1.msra.mxu0 %v2361
    %2363 = vmatprep.subr.mxu0 0.0
    %v2364 = vand.u32 %v1621, 4294901760
    %v2365 = vsub.f32 %v1621, %v2364
    %v2366 = vand.u32 %v2365, 4294901760
    %2367 = vmatpush1.msra.mxu0 %v2366
    %2368 = vmatprep.subr.mxu0 0.0
    %v2369 = vand.u32 %v1622, 4294901760
    %v2370 = vsub.f32 %v1622, %v2369
    %v2371 = vand.u32 %v2370, 4294901760
    %2372 = vmatpush1.msra.mxu0 %v2371
    %v2373 = vand.u32 %v1582, 4294901760
    %2374 = vmatprep.mubr.f32.mxu0 %v2373
    %v2375 = vand.u32 %v1580, 4294901760
    %2376 = vmatmul.mubr.f32.gmra.mrb[0].mxu0 %v2375
    %v2377 = vpop.f32.mrb[0].mxu0
    %v2378 = vadd.f32 %v2210, %v2377
    %v2379 = vpop.f32.mrb[0].mxu0
    %2380 = vdwg.mxu0
    %2381 = vmatprep.subr.mxu0 0.0
    %v2382 = vand.u32 %v1591, 4294901760
    %2383 = vmatpush1.msra.mxu0 %v2382
    %2384 = vmatprep.subr.mxu0 0.0
    %v2385 = vand.u32 %v1592, 4294901760
    %2386 = vmatpush1.msra.mxu0 %v2385
    %2387 = vmatprep.subr.mxu0 0.0
    %v2388 = vand.u32 %v1593, 4294901760
    %2389 = vmatpush1.msra.mxu0 %v2388
    %2390 = vmatprep.subr.mxu0 0.0
    %v2391 = vand.u32 %v1594, 4294901760
    %2392 = vmatpush1.msra.mxu0 %v2391
    %2393 = vmatprep.subr.mxu0 0.0
    %v2394 = vand.u32 %v1595, 4294901760
    %2395 = vmatpush1.msra.mxu0 %v2394
    %2396 = vmatprep.subr.mxu0 0.0
    %v2397 = vand.u32 %v1596, 4294901760
    %2398 = vmatpush1.msra.mxu0 %v2397
    %2399 = vmatprep.subr.mxu0 0.0
    %v2400 = vand.u32 %v1597, 4294901760
    %2401 = vmatpush1.msra.mxu0 %v2400
    %2402 = vmatprep.subr.mxu0 0.0
    %v2403 = vand.u32 %v1598, 4294901760
    %2404 = vmatpush1.msra.mxu0 %v2403
    %2405 = vmatprep.subr.mxu0 0.0
    %v2406 = vand.u32 %v1599, 4294901760
    %2407 = vmatpush1.msra.mxu0 %v2406
    %2408 = vmatprep.subr.mxu0 0.0
    %v2409 = vand.u32 %v1600, 4294901760
    %2410 = vmatpush1.msra.mxu0 %v2409
    %2411 = vmatprep.subr.mxu0 0.0
    %v2412 = vand.u32 %v1601, 4294901760
    %2413 = vmatpush1.msra.mxu0 %v2412
    %2414 = vmatprep.subr.mxu0 0.0
    %v2415 = vand.u32 %v1602, 4294901760
    %2416 = vmatpush1.msra.mxu0 %v2415
    %2417 = vmatprep.subr.mxu0 0.0
    %v2418 = vand.u32 %v1603, 4294901760
    %2419 = vmatpush1.msra.mxu0 %v2418
    %2420 = vmatprep.subr.mxu0 0.0
    %v2421 = vand.u32 %v1604, 4294901760
    %2422 = vmatpush1.msra.mxu0 %v2421
    %2423 = vmatprep.subr.mxu0 0.0
    %v2424 = vand.u32 %v1605, 4294901760
    %2425 = vmatpush1.msra.mxu0 %v2424
    %2426 = vmatprep.subr.mxu0 0.0
    %v2427 = vand.u32 %v1606, 4294901760
    %2428 = vmatpush1.msra.mxu0 %v2427
    %2429 = vmatprep.subr.mxu0 0.0
    %v2430 = vand.u32 %v1607, 4294901760
    %2431 = vmatpush1.msra.mxu0 %v2430
    %2432 = vmatprep.subr.mxu0 0.0
    %v2433 = vand.u32 %v1608, 4294901760
    %2434 = vmatpush1.msra.mxu0 %v2433
    %2435 = vmatprep.subr.mxu0 0.0
    %v2436 = vand.u32 %v1609, 4294901760
    %2437 = vmatpush1.msra.mxu0 %v2436
    %2438 = vmatprep.subr.mxu0 0.0
    %v2439 = vand.u32 %v1610, 4294901760
    %2440 = vmatpush1.msra.mxu0 %v2439
    %2441 = vmatprep.subr.mxu0 0.0
    %v2442 = vand.u32 %v1611, 4294901760
    %2443 = vmatpush1.msra.mxu0 %v2442
    %2444 = vmatprep.subr.mxu0 0.0
    %v2445 = vand.u32 %v1612, 4294901760
    %2446 = vmatpush1.msra.mxu0 %v2445
    %2447 = vmatprep.subr.mxu0 0.0
    %v2448 = vand.u32 %v1613, 4294901760
    %2449 = vmatpush1.msra.mxu0 %v2448
    %2450 = vmatprep.subr.mxu0 0.0
    %v2451 = vand.u32 %v1614, 4294901760
    %2452 = vmatpush1.msra.mxu0 %v2451
    %2453 = vmatprep.subr.mxu0 0.0
    %v2454 = vand.u32 %v1615, 4294901760
    %2455 = vmatpush1.msra.mxu0 %v2454
    %2456 = vmatprep.subr.mxu0 0.0
    %v2457 = vand.u32 %v1616, 4294901760
    %2458 = vmatpush1.msra.mxu0 %v2457
    %2459 = vmatprep.subr.mxu0 0.0
    %v2460 = vand.u32 %v1617, 4294901760
    %2461 = vmatpush1.msra.mxu0 %v2460
    %2462 = vmatprep.subr.mxu0 0.0
    %v2463 = vand.u32 %v1618, 4294901760
    %2464 = vmatpush1.msra.mxu0 %v2463
    %2465 = vmatprep.subr.mxu0 0.0
    %v2466 = vand.u32 %v1619, 4294901760
    %2467 = vmatpush1.msra.mxu0 %v2466
    %2468 = vmatprep.subr.mxu0 0.0
    %v2469 = vand.u32 %v1620, 4294901760
    %2470 = vmatpush1.msra.mxu0 %v2469
    %2471 = vmatprep.subr.mxu0 0.0
    %v2472 = vand.u32 %v1621, 4294901760
    %2473 = vmatpush1.msra.mxu0 %v2472
    %2474 = vmatprep.subr.mxu0 0.0
    %v2475 = vand.u32 %v1622, 4294901760
    %2476 = vmatpush1.msra.mxu0 %v2475
    %v2477 = vand.u32 %v1582, 4294901760
    %2478 = vmatprep.mubr.f32.mxu0 %v2477
    %v2479 = vand.u32 %v1580, 4294901760
    %2480 = vmatmul.mubr.f32.gmra.mrb[0].mxu0 %v2479
    %v2481 = vpop.f32.mrb[0].mxu0
    %v2482 = vadd.f32 %v2378, %v2481
    %v2483 = vpop.f32.mrb[0].mxu0
    %2484 = vdwg.mxu0
    %v2485 = vsel %vm664, %v27, 0
    %2487 = vmatprep.subr.mxu0 0.0
    %v2488 = vand.u32 %v1583, 4294901760
    %2489 = vmatpush1.msra.mxu0 %v2488
    %2490 = vmatprep.subr.mxu0 0.0
    %v2491 = vand.u32 %v1584, 4294901760
    %2492 = vmatpush1.msra.mxu0 %v2491
    %2493 = vmatprep.subr.mxu0 0.0
    %v2494 = vand.u32 %v1585, 4294901760
    %2495 = vmatpush1.msra.mxu0 %v2494
    %2496 = vmatprep.subr.mxu0 0.0
    %v2497 = vand.u32 %v1586, 4294901760
    %2498 = vmatpush1.msra.mxu0 %v2497
    %2499 = vmatprep.subr.mxu0 0.0
    %v2500 = vand.u32 %v1587, 4294901760
    %2501 = vmatpush1.msra.mxu0 %v2500
    %2502 = vmatprep.subr.mxu0 0.0
    %v2503 = vand.u32 %v1588, 4294901760
    %2504 = vmatpush1.msra.mxu0 %v2503
    %2505 = vmatprep.subr.mxu0 0.0
    %v2506 = vand.u32 %v1589, 4294901760
    %2507 = vmatpush1.msra.mxu0 %v2506
    %2508 = vmatprep.subr.mxu0 0.0
    %v2509 = vand.u32 %v1590, 4294901760
    %2510 = vmatpush1.msra.mxu0 %v2509
    %2511 = vmatprep.subr.mxu0 0.0
    %2512 = vmatpush1.msra.mxu0 0.0
    %2513 = vmatprep.subr.mxu0 0.0
    %2514 = vmatpush1.msra.mxu0 0.0
    %2515 = vmatprep.subr.mxu0 0.0
    %2516 = vmatpush1.msra.mxu0 0.0
    %2517 = vmatprep.subr.mxu0 0.0
    %2518 = vmatpush1.msra.mxu0 0.0
    %2519 = vmatprep.subr.mxu0 0.0
    %2520 = vmatpush1.msra.mxu0 0.0
    %2521 = vmatprep.subr.mxu0 0.0
    %2522 = vmatpush1.msra.mxu0 0.0
    %2523 = vmatprep.subr.mxu0 0.0
    %2524 = vmatpush1.msra.mxu0 0.0
    %2525 = vmatprep.subr.mxu0 0.0
    %2526 = vmatpush1.msra.mxu0 0.0
    %2527 = vmatprep.subr.mxu0 0.0
    %2528 = vmatpush1.msra.mxu0 0.0
    %2529 = vmatprep.subr.mxu0 0.0
    %2530 = vmatpush1.msra.mxu0 0.0
    %2531 = vmatprep.subr.mxu0 0.0
    %2532 = vmatpush1.msra.mxu0 0.0
    %2533 = vmatprep.subr.mxu0 0.0
    %2534 = vmatpush1.msra.mxu0 0.0
    %2535 = vmatprep.subr.mxu0 0.0
    %2536 = vmatpush1.msra.mxu0 0.0
    %2537 = vmatprep.subr.mxu0 0.0
    %2538 = vmatpush1.msra.mxu0 0.0
    %2539 = vmatprep.subr.mxu0 0.0
    %2540 = vmatpush1.msra.mxu0 0.0
    %2541 = vmatprep.subr.mxu0 0.0
    %2542 = vmatpush1.msra.mxu0 0.0
    %2543 = vmatprep.subr.mxu0 0.0
    %2544 = vmatpush1.msra.mxu0 0.0
    %2545 = vmatprep.subr.mxu0 0.0
    %2546 = vmatpush1.msra.mxu0 0.0
    %2547 = vmatprep.subr.mxu0 0.0
    %2548 = vmatpush1.msra.mxu0 0.0
    %2549 = vmatprep.subr.mxu0 0.0
    %2550 = vmatpush1.msra.mxu0 0.0
    %2551 = vmatprep.subr.mxu0 0.0
    %2552 = vmatpush1.msra.mxu0 0.0
    %2553 = vmatprep.subr.mxu0 0.0
    %2554 = vmatpush1.msra.mxu0 0.0
    %2555 = vmatprep.subr.mxu0 0.0
    %2556 = vmatpush1.msra.mxu0 0.0
    %2557 = vmatprep.subr.mxu0 0.0
    %2558 = vmatpush1.msra.mxu0 0.0
    %2559 = vmatprep.mubr.f32.mxu0 0.0
    %v2560 = vand.u32 %v2485, 4294901760
    %v2561 = vsub.f32 %v2485, %v2560
    %v2562 = vand.u32 %v2561, 4294901760
    %v2563 = vsub.f32 %v2561, %v2562
    %v2564 = vand.u32 %v2563, 4294901760
    %2565 = vmatmul.mubr.f32.gmra.mrb[0].mxu0 %v2564
    %v2566 = vpop.f32.mrb[0].mxu0
    %v2567 = vadd.f32 %v2482, %v2566
    %v2568 = vpop.f32.mrb[0].mxu0
    %2569 = vdwg.mxu0
    %2570 = vmatprep.subr.mxu0 0.0
    %v2571 = vand.u32 %v1583, 4294901760
    %v2572 = vsub.f32 %v1583, %v2571
    %v2573 = vand.u32 %v2572, 4294901760
    %v2574 = vsub.f32 %v2572, %v2573
    %v2575 = vand.u32 %v2574, 4294901760
    %2576 = vmatpush1.msra.mxu0 %v2575
    %2577 = vmatprep.subr.mxu0 0.0
    %v2578 = vand.u32 %v1584, 4294901760
    %v2579 = vsub.f32 %v1584, %v2578
    %v2580 = vand.u32 %v2579, 4294901760
    %v2581 = vsub.f32 %v2579, %v2580
    %v2582 = vand.u32 %v2581, 4294901760
    %2583 = vmatpush1.msra.mxu0 %v2582
    %2584 = vmatprep.subr.mxu0 0.0
    %v2585 = vand.u32 %v1585, 4294901760
    %v2586 = vsub.f32 %v1585, %v2585
    %v2587 = vand.u32 %v2586, 4294901760
    %v2588 = vsub.f32 %v2586, %v2587
    %v2589 = vand.u32 %v2588, 4294901760
    %2590 = vmatpush1.msra.mxu0 %v2589
    %2591 = vmatprep.subr.mxu0 0.0
    %v2592 = vand.u32 %v1586, 4294901760
    %v2593 = vsub.f32 %v1586, %v2592
    %v2594 = vand.u32 %v2593, 4294901760
    %v2595 = vsub.f32 %v2593, %v2594
    %v2596 = vand.u32 %v2595, 4294901760
    %2597 = vmatpush1.msra.mxu0 %v2596
    %2598 = vmatprep.subr.mxu0 0.0
    %v2599 = vand.u32 %v1587, 4294901760
    %v2600 = vsub.f32 %v1587, %v2599
    %v2601 = vand.u32 %v2600, 4294901760
    %v2602 = vsub.f32 %v2600, %v2601
    %v2603 = vand.u32 %v2602, 4294901760
    %2604 = vmatpush1.msra.mxu0 %v2603
    %2605 = vmatprep.subr.mxu0 0.0
    %v2606 = vand.u32 %v1588, 4294901760
    %v2607 = vsub.f32 %v1588, %v2606
    %v2608 = vand.u32 %v2607, 4294901760
    %v2609 = vsub.f32 %v2607, %v2608
    %v2610 = vand.u32 %v2609, 4294901760
    %2611 = vmatpush1.msra.mxu0 %v2610
    %2612 = vmatprep.subr.mxu0 0.0
    %v2613 = vand.u32 %v1589, 4294901760
    %v2614 = vsub.f32 %v1589, %v2613
    %v2615 = vand.u32 %v2614, 4294901760
    %v2616 = vsub.f32 %v2614, %v2615
    %v2617 = vand.u32 %v2616, 4294901760
    %2618 = vmatpush1.msra.mxu0 %v2617
    %2619 = vmatprep.subr.mxu0 0.0
    %v2620 = vand.u32 %v1590, 4294901760
    %v2621 = vsub.f32 %v1590, %v2620
    %v2622 = vand.u32 %v2621, 4294901760
    %v2623 = vsub.f32 %v2621, %v2622
    %v2624 = vand.u32 %v2623, 4294901760
    %2625 = vmatpush1.msra.mxu0 %v2624
    %2626 = vmatprep.subr.mxu0 0.0
    %2627 = vmatpush1.msra.mxu0 0.0
    %2628 = vmatprep.subr.mxu0 0.0
    %2629 = vmatpush1.msra.mxu0 0.0
    %2630 = vmatprep.subr.mxu0 0.0
    %2631 = vmatpush1.msra.mxu0 0.0
    %2632 = vmatprep.subr.mxu0 0.0
    %2633 = vmatpush1.msra.mxu0 0.0
    %2634 = vmatprep.subr.mxu0 0.0
    %2635 = vmatpush1.msra.mxu0 0.0
    %2636 = vmatprep.subr.mxu0 0.0
    %2637 = vmatpush1.msra.mxu0 0.0
    %2638 = vmatprep.subr.mxu0 0.0
    %2639 = vmatpush1.msra.mxu0 0.0
    %2640 = vmatprep.subr.mxu0 0.0
    %2641 = vmatpush1.msra.mxu0 0.0
    %2642 = vmatprep.subr.mxu0 0.0
    %2643 = vmatpush1.msra.mxu0 0.0
    %2644 = vmatprep.subr.mxu0 0.0
    %2645 = vmatpush1.msra.mxu0 0.0
    %2646 = vmatprep.subr.mxu0 0.0
    %2647 = vmatpush1.msra.mxu0 0.0
    %2648 = vmatprep.subr.mxu0 0.0
    %2649 = vmatpush1.msra.mxu0 0.0
    %2650 = vmatprep.subr.mxu0 0.0
    %2651 = vmatpush1.msra.mxu0 0.0
    %2652 = vmatprep.subr.mxu0 0.0
    %2653 = vmatpush1.msra.mxu0 0.0
    %2654 = vmatprep.subr.mxu0 0.0
    %2655 = vmatpush1.msra.mxu0 0.0
    %2656 = vmatprep.subr.mxu0 0.0
    %2657 = vmatpush1.msra.mxu0 0.0
    %2658 = vmatprep.subr.mxu0 0.0
    %2659 = vmatpush1.msra.mxu0 0.0
    %2660 = vmatprep.subr.mxu0 0.0
    %2661 = vmatpush1.msra.mxu0 0.0
    %2662 = vmatprep.subr.mxu0 0.0
    %2663 = vmatpush1.msra.mxu0 0.0
    %2664 = vmatprep.subr.mxu0 0.0
    %2665 = vmatpush1.msra.mxu0 0.0
    %2666 = vmatprep.subr.mxu0 0.0
    %2667 = vmatpush1.msra.mxu0 0.0
    %2668 = vmatprep.subr.mxu0 0.0
    %2669 = vmatpush1.msra.mxu0 0.0
    %2670 = vmatprep.subr.mxu0 0.0
    %2671 = vmatpush1.msra.mxu0 0.0
    %2672 = vmatprep.subr.mxu0 0.0
    %2673 = vmatpush1.msra.mxu0 0.0
    %2674 = vmatprep.mubr.f32.mxu0 0.0
    %v2675 = vand.u32 %v2485, 4294901760
    %2676 = vmatmul.mubr.f32.gmra.mrb[0].mxu0 %v2675
    %v2677 = vpop.f32.mrb[0].mxu0
    %v2678 = vadd.f32 %v2567, %v2677
    %v2679 = vpop.f32.mrb[0].mxu0
    %2680 = vdwg.mxu0
    %2681 = vmatprep.subr.mxu0 0.0
    %v2682 = vand.u32 %v1583, 4294901760
    %v2683 = vsub.f32 %v1583, %v2682
    %2684 = vmatpush1.msra.mxu0 %v2683
    %2685 = vmatprep.subr.mxu0 0.0
    %v2686 = vand.u32 %v1584, 4294901760
    %v2687 = vsub.f32 %v1584, %v2686
    %2688 = vmatpush1.msra.mxu0 %v2687
    %2689 = vmatprep.subr.mxu0 0.0
    %v2690 = vand.u32 %v1585, 4294901760
    %v2691 = vsub.f32 %v1585, %v2690
    %2692 = vmatpush1.msra.mxu0 %v2691
    %2693 = vmatprep.subr.mxu0 0.0
    %v2694 = vand.u32 %v1586, 4294901760
    %v2695 = vsub.f32 %v1586, %v2694
    %2696 = vmatpush1.msra.mxu0 %v2695
    %2697 = vmatprep.subr.mxu0 0.0
    %v2698 = vand.u32 %v1587, 4294901760
    %v2699 = vsub.f32 %v1587, %v2698
    %2700 = vmatpush1.msra.mxu0 %v2699
    %2701 = vmatprep.subr.mxu0 0.0
    %v2702 = vand.u32 %v1588, 4294901760
    %v2703 = vsub.f32 %v1588, %v2702
    %2704 = vmatpush1.msra.mxu0 %v2703
    %2705 = vmatprep.subr.mxu0 0.0
    %v2706 = vand.u32 %v1589, 4294901760
    %v2707 = vsub.f32 %v1589, %v2706
    %2708 = vmatpush1.msra.mxu0 %v2707
    %2709 = vmatprep.subr.mxu0 0.0
    %v2710 = vand.u32 %v1590, 4294901760
    %v2711 = vsub.f32 %v1590, %v2710
    %2712 = vmatpush1.msra.mxu0 %v2711
    %2713 = vmatprep.subr.mxu0 0.0
    %2714 = vmatpush1.msra.mxu0 0.0
    %2715 = vmatprep.subr.mxu0 0.0
    %2716 = vmatpush1.msra.mxu0 0.0
    %2717 = vmatprep.subr.mxu0 0.0
    %2718 = vmatpush1.msra.mxu0 0.0
    %2719 = vmatprep.subr.mxu0 0.0
    %2720 = vmatpush1.msra.mxu0 0.0
    %2721 = vmatprep.subr.mxu0 0.0
    %2722 = vmatpush1.msra.mxu0 0.0
    %2723 = vmatprep.subr.mxu0 0.0
    %2724 = vmatpush1.msra.mxu0 0.0
    %2725 = vmatprep.subr.mxu0 0.0
    %2726 = vmatpush1.msra.mxu0 0.0
    %2727 = vmatprep.subr.mxu0 0.0
    %2728 = vmatpush1.msra.mxu0 0.0
    %2729 = vmatprep.subr.mxu0 0.0
    %2730 = vmatpush1.msra.mxu0 0.0
    %2731 = vmatprep.subr.mxu0 0.0
    %2732 = vmatpush1.msra.mxu0 0.0
    %2733 = vmatprep.subr.mxu0 0.0
    %2734 = vmatpush1.msra.mxu0 0.0
    %2735 = vmatprep.subr.mxu0 0.0
    %2736 = vmatpush1.msra.mxu0 0.0
    %2737 = vmatprep.subr.mxu0 0.0
    %2738 = vmatpush1.msra.mxu0 0.0
    %2739 = vmatprep.subr.mxu0 0.0
    %2740 = vmatpush1.msra.mxu0 0.0
    %2741 = vmatprep.subr.mxu0 0.0
    %2742 = vmatpush1.msra.mxu0 0.0
    %2743 = vmatprep.subr.mxu0 0.0
    %2744 = vmatpush1.msra.mxu0 0.0
    %2745 = vmatprep.subr.mxu0 0.0
    %2746 = vmatpush1.msra.mxu0 0.0
    %2747 = vmatprep.subr.mxu0 0.0
    %2748 = vmatpush1.msra.mxu0 0.0
    %2749 = vmatprep.subr.mxu0 0.0
    %2750 = vmatpush1.msra.mxu0 0.0
    %2751 = vmatprep.subr.mxu0 0.0
    %2752 = vmatpush1.msra.mxu0 0.0
    %2753 = vmatprep.subr.mxu0 0.0
    %2754 = vmatpush1.msra.mxu0 0.0
    %2755 = vmatprep.subr.mxu0 0.0
    %2756 = vmatpush1.msra.mxu0 0.0
    %2757 = vmatprep.subr.mxu0 0.0
    %2758 = vmatpush1.msra.mxu0 0.0
    %2759 = vmatprep.subr.mxu0 0.0
    %2760 = vmatpush1.msra.mxu0 0.0
    %2761 = vmatprep.mubr.f32.mxu0 0.0
    %v2762 = vand.u32 %v2485, 4294901760
    %v2763 = vsub.f32 %v2485, %v2762
    %2764 = vmatmul.mubr.f32.gmra.mrb[0].mxu0 %v2763
    %v2765 = vpop.f32.mrb[0].mxu0
    %v2766 = vadd.f32 %v2678, %v2765
    %v2767 = vpop.f32.mrb[0].mxu0
    %2768 = vdwg.mxu0
    %2769 = vmatprep.subr.mxu0 0.0
    %v2770 = vand.u32 %v1583, 4294901760
    %2771 = vmatpush1.msra.mxu0 %v2770
    %2772 = vmatprep.subr.mxu0 0.0
    %v2773 = vand.u32 %v1584, 4294901760
    %2774 = vmatpush1.msra.mxu0 %v2773
    %2775 = vmatprep.subr.mxu0 0.0
    %v2776 = vand.u32 %v1585, 4294901760
    %2777 = vmatpush1.msra.mxu0 %v2776
    %2778 = vmatprep.subr.mxu0 0.0
    %v2779 = vand.u32 %v1586, 4294901760
    %2780 = vmatpush1.msra.mxu0 %v2779
    %2781 = vmatprep.subr.mxu0 0.0
    %v2782 = vand.u32 %v1587, 4294901760
    %2783 = vmatpush1.msra.mxu0 %v2782
    %2784 = vmatprep.subr.mxu0 0.0
    %v2785 = vand.u32 %v1588, 4294901760
    %2786 = vmatpush1.msra.mxu0 %v2785
    %2787 = vmatprep.subr.mxu0 0.0
    %v2788 = vand.u32 %v1589, 4294901760
    %2789 = vmatpush1.msra.mxu0 %v2788
    %2790 = vmatprep.subr.mxu0 0.0
    %v2791 = vand.u32 %v1590, 4294901760
    %2792 = vmatpush1.msra.mxu0 %v2791
    %2793 = vmatprep.subr.mxu0 0.0
    %2794 = vmatpush1.msra.mxu0 0.0
    %2795 = vmatprep.subr.mxu0 0.0
    %2796 = vmatpush1.msra.mxu0 0.0
    %2797 = vmatprep.subr.mxu0 0.0
    %2798 = vmatpush1.msra.mxu0 0.0
    %2799 = vmatprep.subr.mxu0 0.0
    %2800 = vmatpush1.msra.mxu0 0.0
    %2801 = vmatprep.subr.mxu0 0.0
    %2802 = vmatpush1.msra.mxu0 0.0
    %2803 = vmatprep.subr.mxu0 0.0
    %2804 = vmatpush1.msra.mxu0 0.0
    %2805 = vmatprep.subr.mxu0 0.0
    %2806 = vmatpush1.msra.mxu0 0.0
    %2807 = vmatprep.subr.mxu0 0.0
    %2808 = vmatpush1.msra.mxu0 0.0
    %2809 = vmatprep.subr.mxu0 0.0
    %2810 = vmatpush1.msra.mxu0 0.0
    %2811 = vmatprep.subr.mxu0 0.0
    %2812 = vmatpush1.msra.mxu0 0.0
    %2813 = vmatprep.subr.mxu0 0.0
    %2814 = vmatpush1.msra.mxu0 0.0
    %2815 = vmatprep.subr.mxu0 0.0
    %2816 = vmatpush1.msra.mxu0 0.0
    %2817 = vmatprep.subr.mxu0 0.0
    %2818 = vmatpush1.msra.mxu0 0.0
    %2819 = vmatprep.subr.mxu0 0.0
    %2820 = vmatpush1.msra.mxu0 0.0
    %2821 = vmatprep.subr.mxu0 0.0
    %2822 = vmatpush1.msra.mxu0 0.0
    %2823 = vmatprep.subr.mxu0 0.0
    %2824 = vmatpush1.msra.mxu0 0.0
    %2825 = vmatprep.subr.mxu0 0.0
    %2826 = vmatpush1.msra.mxu0 0.0
    %2827 = vmatprep.subr.mxu0 0.0
    %2828 = vmatpush1.msra.mxu0 0.0
    %2829 = vmatprep.subr.mxu0 0.0
    %2830 = vmatpush1.msra.mxu0 0.0
    %2831 = vmatprep.subr.mxu0 0.0
    %2832 = vmatpush1.msra.mxu0 0.0
    %2833 = vmatprep.subr.mxu0 0.0
    %2834 = vmatpush1.msra.mxu0 0.0
    %2835 = vmatprep.subr.mxu0 0.0
    %2836 = vmatpush1.msra.mxu0 0.0
    %2837 = vmatprep.subr.mxu0 0.0
    %2838 = vmatpush1.msra.mxu0 0.0
    %2839 = vmatprep.subr.mxu0 0.0
    %2840 = vmatpush1.msra.mxu0 0.0
    %2841 = vmatprep.mubr.f32.mxu0 0.0
    %v2842 = vand.u32 %v2485, 4294901760
    %v2843 = vsub.f32 %v2485, %v2842
    %v2844 = vand.u32 %v2843, 4294901760
    %2845 = vmatmul.mubr.f32.gmra.mrb[0].mxu0 %v2844
    %v2846 = vpop.f32.mrb[0].mxu0
    %v2847 = vadd.f32 %v2766, %v2846
    %v2848 = vpop.f32.mrb[0].mxu0
    %2849 = vdwg.mxu0
    %2850 = vmatprep.subr.mxu0 0.0
    %v2851 = vand.u32 %v1583, 4294901760
    %v2852 = vsub.f32 %v1583, %v2851
    %v2853 = vand.u32 %v2852, 4294901760
    %2854 = vmatpush1.msra.mxu0 %v2853
    %2855 = vmatprep.subr.mxu0 0.0
    %v2856 = vand.u32 %v1584, 4294901760
    %v2857 = vsub.f32 %v1584, %v2856
    %v2858 = vand.u32 %v2857, 4294901760
    %2859 = vmatpush1.msra.mxu0 %v2858
    %2860 = vmatprep.subr.mxu0 0.0
    %v2861 = vand.u32 %v1585, 4294901760
    %v2862 = vsub.f32 %v1585, %v2861
    %v2863 = vand.u32 %v2862, 4294901760
    %2864 = vmatpush1.msra.mxu0 %v2863
    %2865 = vmatprep.subr.mxu0 0.0
    %v2866 = vand.u32 %v1586, 4294901760
    %v2867 = vsub.f32 %v1586, %v2866
    %v2868 = vand.u32 %v2867, 4294901760
    %2869 = vmatpush1.msra.mxu0 %v2868
    %2870 = vmatprep.subr.mxu0 0.0
    %v2871 = vand.u32 %v1587, 4294901760
    %v2872 = vsub.f32 %v1587, %v2871
    %v2873 = vand.u32 %v2872, 4294901760
    %2874 = vmatpush1.msra.mxu0 %v2873
    %2875 = vmatprep.subr.mxu0 0.0
    %v2876 = vand.u32 %v1588, 4294901760
    %v2877 = vsub.f32 %v1588, %v2876
    %v2878 = vand.u32 %v2877, 4294901760
    %2879 = vmatpush1.msra.mxu0 %v2878
    %2880 = vmatprep.subr.mxu0 0.0
    %v2881 = vand.u32 %v1589, 4294901760
    %v2882 = vsub.f32 %v1589, %v2881
    %v2883 = vand.u32 %v2882, 4294901760
    %2884 = vmatpush1.msra.mxu0 %v2883
    %2885 = vmatprep.subr.mxu0 0.0
    %v2886 = vand.u32 %v1590, 4294901760
    %v2887 = vsub.f32 %v1590, %v2886
    %v2888 = vand.u32 %v2887, 4294901760
    %2889 = vmatpush1.msra.mxu0 %v2888
    %2890 = vmatprep.subr.mxu0 0.0
    %2891 = vmatpush1.msra.mxu0 0.0
    %2892 = vmatprep.subr.mxu0 0.0
    %2893 = vmatpush1.msra.mxu0 0.0
    %2894 = vmatprep.subr.mxu0 0.0
    %2895 = vmatpush1.msra.mxu0 0.0
    %2896 = vmatprep.subr.mxu0 0.0
    %2897 = vmatpush1.msra.mxu0 0.0
    %2898 = vmatprep.subr.mxu0 0.0
    %2899 = vmatpush1.msra.mxu0 0.0
    %2900 = vmatprep.subr.mxu0 0.0
    %2901 = vmatpush1.msra.mxu0 0.0
    %2902 = vmatprep.subr.mxu0 0.0
    %2903 = vmatpush1.msra.mxu0 0.0
    %2904 = vmatprep.subr.mxu0 0.0
    %2905 = vmatpush1.msra.mxu0 0.0
    %2906 = vmatprep.subr.mxu0 0.0
    %2907 = vmatpush1.msra.mxu0 0.0
    %2908 = vmatprep.subr.mxu0 0.0
    %2909 = vmatpush1.msra.mxu0 0.0
    %2910 = vmatprep.subr.mxu0 0.0
    %2911 = vmatpush1.msra.mxu0 0.0
    %2912 = vmatprep.subr.mxu0 0.0
    %2913 = vmatpush1.msra.mxu0 0.0
    %2914 = vmatprep.subr.mxu0 0.0
    %2915 = vmatpush1.msra.mxu0 0.0
    %2916 = vmatprep.subr.mxu0 0.0
    %2917 = vmatpush1.msra.mxu0 0.0
    %2918 = vmatprep.subr.mxu0 0.0
    %2919 = vmatpush1.msra.mxu0 0.0
    %2920 = vmatprep.subr.mxu0 0.0
    %2921 = vmatpush1.msra.mxu0 0.0
    %2922 = vmatprep.subr.mxu0 0.0
    %2923 = vmatpush1.msra.mxu0 0.0
    %2924 = vmatprep.subr.mxu0 0.0
    %2925 = vmatpush1.msra.mxu0 0.0
    %2926 = vmatprep.subr.mxu0 0.0
    %2927 = vmatpush1.msra.mxu0 0.0
    %2928 = vmatprep.subr.mxu0 0.0
    %2929 = vmatpush1.msra.mxu0 0.0
    %2930 = vmatprep.subr.mxu0 0.0
    %2931 = vmatpush1.msra.mxu0 0.0
    %2932 = vmatprep.subr.mxu0 0.0
    %2933 = vmatpush1.msra.mxu0 0.0
    %2934 = vmatprep.subr.mxu0 0.0
    %2935 = vmatpush1.msra.mxu0 0.0
    %2936 = vmatprep.subr.mxu0 0.0
    %2937 = vmatpush1.msra.mxu0 0.0
    %2938 = vmatprep.mubr.f32.mxu0 0.0
    %v2939 = vand.u32 %v2485, 4294901760
    %2940 = vmatmul.mubr.f32.gmra.mrb[0].mxu0 %v2939
    %v2941 = vpop.f32.mrb[0].mxu0
    %v2942 = vadd.f32 %v2847, %v2941
    %v2943 = vpop.f32.mrb[0].mxu0
    %2944 = vdwg.mxu0
    %2945 = vmatprep.subr.mxu0 0.0
    %v2946 = vand.u32 %v1583, 4294901760
    %2947 = vmatpush1.msra.mxu0 %v2946
    %2948 = vmatprep.subr.mxu0 0.0
    %v2949 = vand.u32 %v1584, 4294901760
    %2950 = vmatpush1.msra.mxu0 %v2949
    %2951 = vmatprep.subr.mxu0 0.0
    %v2952 = vand.u32 %v1585, 4294901760
    %2953 = vmatpush1.msra.mxu0 %v2952
    %2954 = vmatprep.subr.mxu0 0.0
    %v2955 = vand.u32 %v1586, 4294901760
    %2956 = vmatpush1.msra.mxu0 %v2955
    %2957 = vmatprep.subr.mxu0 0.0
    %v2958 = vand.u32 %v1587, 4294901760
    %2959 = vmatpush1.msra.mxu0 %v2958
    %2960 = vmatprep.subr.mxu0 0.0
    %v2961 = vand.u32 %v1588, 4294901760
    %2962 = vmatpush1.msra.mxu0 %v2961
    %2963 = vmatprep.subr.mxu0 0.0
    %v2964 = vand.u32 %v1589, 4294901760
    %2965 = vmatpush1.msra.mxu0 %v2964
    %2966 = vmatprep.subr.mxu0 0.0
    %v2967 = vand.u32 %v1590, 4294901760
    %2968 = vmatpush1.msra.mxu0 %v2967
    %2969 = vmatprep.subr.mxu0 0.0
    %2970 = vmatpush1.msra.mxu0 0.0
    %2971 = vmatprep.subr.mxu0 0.0
    %2972 = vmatpush1.msra.mxu0 0.0
    %2973 = vmatprep.subr.mxu0 0.0
    %2974 = vmatpush1.msra.mxu0 0.0
    %2975 = vmatprep.subr.mxu0 0.0
    %2976 = vmatpush1.msra.mxu0 0.0
    %2977 = vmatprep.subr.mxu0 0.0
    %2978 = vmatpush1.msra.mxu0 0.0
    %2979 = vmatprep.subr.mxu0 0.0
    %2980 = vmatpush1.msra.mxu0 0.0
    %2981 = vmatprep.subr.mxu0 0.0
    %2982 = vmatpush1.msra.mxu0 0.0
    %2983 = vmatprep.subr.mxu0 0.0
    %2984 = vmatpush1.msra.mxu0 0.0
    %2985 = vmatprep.subr.mxu0 0.0
    %2986 = vmatpush1.msra.mxu0 0.0
    %2987 = vmatprep.subr.mxu0 0.0
    %2988 = vmatpush1.msra.mxu0 0.0
    %2989 = vmatprep.subr.mxu0 0.0
    %2990 = vmatpush1.msra.mxu0 0.0
    %2991 = vmatprep.subr.mxu0 0.0
    %2992 = vmatpush1.msra.mxu0 0.0
    %2993 = vmatprep.subr.mxu0 0.0
    %2994 = vmatpush1.msra.mxu0 0.0
    %2995 = vmatprep.subr.mxu0 0.0
    %2996 = vmatpush1.msra.mxu0 0.0
    %2997 = vmatprep.subr.mxu0 0.0
    %2998 = vmatpush1.msra.mxu0 0.0
    %2999 = vmatprep.subr.mxu0 0.0
    %3000 = vmatpush1.msra.mxu0 0.0
    %3001 = vmatprep.subr.mxu0 0.0
    %3002 = vmatpush1.msra.mxu0 0.0
    %3003 = vmatprep.subr.mxu0 0.0
    %3004 = vmatpush1.msra.mxu0 0.0
    %3005 = vmatprep.subr.mxu0 0.0
    %3006 = vmatpush1.msra.mxu0 0.0
    %3007 = vmatprep.subr.mxu0 0.0
    %3008 = vmatpush1.msra.mxu0 0.0
    %3009 = vmatprep.subr.mxu0 0.0
    %3010 = vmatpush1.msra.mxu0 0.0
    %3011 = vmatprep.subr.mxu0 0.0
    %3012 = vmatpush1.msra.mxu0 0.0
    %3013 = vmatprep.subr.mxu0 0.0
    %3014 = vmatpush1.msra.mxu0 0.0
    %3015 = vmatprep.subr.mxu0 0.0
    %3016 = vmatpush1.msra.mxu0 0.0
    %3017 = vmatprep.mubr.f32.mxu0 0.0
    %v3018 = vand.u32 %v2485, 4294901760
    %3019 = vmatmul.mubr.f32.gmra.mrb[0].mxu0 %v3018
    %v3020 = vpop.f32.mrb[0].mxu0
    %v3021 = vadd.f32 %v2942, %v3020
    %v3022 = vpop.f32.mrb[0].mxu0
    %3023 = vdwg.mxu0
    %v3024 = vld [vmem:[%s6] sm:$0x1]
    %v3026 = vlaneseq
    %v3027 = vshrl.u32 %v3026, 7
    %v3028 = vsub.s32 0, %v3027
    %v3029 = vrot.slane %v3024, %v3028
    %v3031 = vadd.f32 %v3021, %v3029
    %3033 = vrot.lane.b32.xlu0 %v3031, 124
    %v3034 = vpop.permute.xlu0 %3033
    %v3036 = vmax.f32 %v3031, %v3034
    %3037 = vrot.lane.b32.xlu0 %v3031, 120
    %v3038 = vpop.permute.xlu0 %3037
    %v3040 = vmax.f32 %v3036, %v3038
    %3041 = vrot.lane.b32.xlu0 %v3031, 116
    %v3042 = vpop.permute.xlu0 %3041
    %v3044 = vmax.f32 %v3040, %v3042
    %3045 = vrot.lane.b32.xlu0 %v3031, 112
    %v3046 = vpop.permute.xlu0 %3045
    %v3048 = vmax.f32 %v3044, %v3046
    %3049 = vrot.lane.b32.xlu0 %v3031, 108
    %v3050 = vpop.permute.xlu0 %3049
    %v3052 = vmax.f32 %v3048, %v3050
    %3053 = vrot.lane.b32.xlu0 %v3031, 104
    %v3054 = vpop.permute.xlu0 %3053
    %v3056 = vmax.f32 %v3052, %v3054
    %3057 = vrot.lane.b32.xlu0 %v3031, 100
    %v3058 = vpop.permute.xlu0 %3057
    %v3060 = vmax.f32 %v3056, %v3058
    %v3061 = vsub.f32 %v3031, %v3060
    %v3062 = vmul.f32 %v3061, 1.442695
    %v3063 = vpow.pop %v3062
    %3065 = vrot.lane.b32.xlu0 %v3060, 4
    %v3066 = vpop.permute.xlu0 %3065
    %v3068 = vsub.f32 %v3031, %v3066
    %v3069 = vmul.f32 %v3068, 1.442695
    %v3070 = vpow.pop %v3069
    %3071 = vrot.lane.b32.xlu0 %v3060, 8
    %v3072 = vpop.permute.xlu0 %3071
    %v3074 = vsub.f32 %v3031, %v3072
    %v3075 = vmul.f32 %v3074, 1.442695
    %v3076 = vpow.pop %v3075
    %3077 = vrot.lane.b32.xlu0 %v3060, 12
    %v3078 = vpop.permute.xlu0 %3077
    %v3080 = vsub.f32 %v3031, %v3078
    %v3081 = vmul.f32 %v3080, 1.442695
    %v3082 = vpow.pop %v3081
    %3083 = vrot.lane.b32.xlu0 %v3060, 16
    %v3084 = vpop.permute.xlu0 %3083
    %v3086 = vsub.f32 %v3031, %v3084
    %v3087 = vmul.f32 %v3086, 1.442695
    %v3088 = vpow.pop %v3087
    %3089 = vrot.lane.b32.xlu0 %v3060, 20
    %v3090 = vpop.permute.xlu0 %3089
    %v3092 = vsub.f32 %v3031, %v3090
    %v3093 = vmul.f32 %v3092, 1.442695
    %v3094 = vpow.pop %v3093
    %3095 = vrot.lane.b32.xlu0 %v3060, 24
    %v3096 = vpop.permute.xlu0 %3095
    %v3098 = vsub.f32 %v3031, %v3096
    %v3099 = vmul.f32 %v3098, 1.442695
    %v3100 = vpow.pop %v3099
    %3101 = vrot.lane.b32.xlu0 %v3060, 28
    %v3102 = vpop.permute.xlu0 %3101
    %v3104 = vsub.f32 %v3031, %v3102
    %v3105 = vmul.f32 %v3104, 1.442695
    %v3106 = vpow.pop %v3105
    %3108 = vrot.lane.b32.xlu0 %v3070, 124
    %v3109 = vpop.permute.xlu0 %3108
    %v3111 = vadd.f32 %v3063, %v3109
    %3113 = vrot.lane.b32.xlu0 %v3076, 120
    %v3114 = vpop.permute.xlu0 %3113
    %v3116 = vadd.f32 %v3111, %v3114
    %3118 = vrot.lane.b32.xlu0 %v3082, 116
    %v3119 = vpop.permute.xlu0 %3118
    %v3121 = vadd.f32 %v3116, %v3119
    %3123 = vrot.lane.b32.xlu0 %v3088, 112
    %v3124 = vpop.permute.xlu0 %3123
    %v3126 = vadd.f32 %v3121, %v3124
    %3128 = vrot.lane.b32.xlu0 %v3094, 108
    %v3129 = vpop.permute.xlu0 %3128
    %v3131 = vadd.f32 %v3126, %v3129
    %3133 = vrot.lane.b32.xlu0 %v3100, 104
    %v3134 = vpop.permute.xlu0 %3133
    %v3136 = vadd.f32 %v3131, %v3134
    %3138 = vrot.lane.b32.xlu0 %v3106, 100
    %v3139 = vpop.permute.xlu0 %3138
    %v3141 = vadd.f32 %v3136, %v3139
    %v3142 = vrcp.pop %v3141
    %v3143 = vmul.f32 1.0, %v3142
    %v3144 = vmul.f32 %v3063, %v3143
    %3146 = vrot.lane.b32.xlu0 %v3143, 4
    %v3147 = vpop.permute.xlu0 %3146
    %v3149 = vmul.f32 %v3070, %v3147
    %3150 = vrot.lane.b32.xlu0 %v3143, 8
    %v3151 = vpop.permute.xlu0 %3150
    %v3153 = vmul.f32 %v3076, %v3151
    %3154 = vrot.lane.b32.xlu0 %v3143, 12
    %v3155 = vpop.permute.xlu0 %3154
    %v3157 = vmul.f32 %v3082, %v3155
    %3158 = vrot.lane.b32.xlu0 %v3143, 16
    %v3159 = vpop.permute.xlu0 %3158
    %v3161 = vmul.f32 %v3088, %v3159
    %3162 = vrot.lane.b32.xlu0 %v3143, 20
    %v3163 = vpop.permute.xlu0 %3162
    %v3165 = vmul.f32 %v3094, %v3163
    %3166 = vrot.lane.b32.xlu0 %v3143, 24
    %v3167 = vpop.permute.xlu0 %3166
    %v3169 = vmul.f32 %v3100, %v3167
    %3170 = vrot.lane.b32.xlu0 %v3143, 28
    %v3171 = vpop.permute.xlu0 %3170
    %v3173 = vmul.f32 %v3106, %v3171
    %vm3174 = vcmask 31744
    %v3175 = vsel %vm3174, %v3144, %v3149
    %vm3176 = vcmask 64512
    %v3177 = vsel %vm3176, %v3175, %v3153
    %vm3178 = vcmask 97280
    %v3179 = vsel %vm3178, %v3177, %v3157
    %v3180 = vsel %vm658, %v3179, %v3161
    %vm3181 = vcmask 162816
    %v3182 = vsel %vm3181, %v3180, %v3165
    %vm3183 = vcmask 195584
    %v3184 = vsel %vm3183, %v3182, %v3169
    %vm3185 = vcmask 228352
    %v3186 = vsel %vm3185, %v3184, %v3173
    %vm3187 = vcmask 254976
    %3188 = vst.msk [vmem:[#allocation2] sm:$0x3] %vm3187, %v3186
    // Predicated region
    $region30: #{tpu_custom_call.1} parent=1 // pred_check
      _
    $region31: #{tpu_custom_call.1} parent=1 // pred_check_branch
      %3190 = sbr.rel (0) target = $region33
    $region32: #{tpu_custom_call.1} parent=1 // pred_region
      %s3192 = ssub.s32 32, 32
      %3193 = vsyncadd [#allocation3], %s3192
      %s3195 = sshll.u32 [#allocation2], 4
      %s3196 = int_to_ptr.vmem [resolvable:$true] %s3195
      %3198 = dma.vmem_to_hbm [thread:$0]  %s3196, 32, %s7, [#allocation3]
    $region33: #{tpu_custom_call.1} parent=1 // pred_fallthru
      _
    // Predicated region
    $region34: #{tpu_custom_call.1} parent=1 // pred_check
      _
    $region35: #{tpu_custom_call.1} parent=1 // pred_check_branch
      %3200 = sbr.rel (0) target = $region37
    $region36: #{tpu_custom_call.1} parent=1 // pred_region
      %3201 = dma.done [#allocation3], 32
    $region37: #{tpu_custom_call.1} parent=1 // pred_fallthru
      _
    %3202 = vsyncpa [#allocation3], 1

</llo_original>
